<compile_context>
chip_gen: v6e
topology: v6e:2x2x1
jax: 0.10.0
libtpu: 0.0.40
codegen_flags: <defaults>
</compile_context>

<pallas_src>
import functools

import jax
import jax.numpy as jnp
import numpy as np
from jax.experimental import pallas as pl
from jax.experimental.pallas import tpu as pltpu

LN_EPS = 1e-5


def _layernorm(x, w, b):
    # x: (M, C) f32, w/b: (1, C) f32.  Variance via E[x^2] - mu^2 so the two
    # cross-lane reductions are independent; clamp against cancellation.
    mu = jnp.mean(x, axis=-1, keepdims=True)
    ex2 = jnp.mean(x * x, axis=-1, keepdims=True)
    var = jnp.maximum(ex2 - mu * mu, 0.0)
    return (x - mu) * jax.lax.rsqrt(var + LN_EPS) * w + b


def block_kernel(x_ref,
                 n1w_ref, n1b_ref,
                 wqkv_ref,
                 wproj_ref, bproj_ref,
                 n2w_ref, n2b_ref,
                 w1_ref, b1_ref,
                 w2_ref, b2_ref,
                 o_ref,
                 *, num_heads):
    TB, N, C = x_ref.shape
    D = C // num_heads
    M = TB * N

    x = x_ref[...].reshape(M, C)                    # (TB*N, C) f32

    # ---- Attention branch -------------------------------------------------
    xn = _layernorm(x, n1w_ref[...], n1b_ref[...])

    # bf16 operands, f32 accumulation.  1/sqrt(D) already folded into the Q
    # columns of wqkv host-side, so no per-score multiply.
    qkv = jnp.dot(xn.astype(jnp.bfloat16), wqkv_ref[...],
                  preferred_element_type=jnp.float32)          # (M, 3C) f32
    qkv = qkv.astype(jnp.bfloat16)                  # single cast of the slab
    q = qkv[:, 0 * C:1 * C]
    k = qkv[:, 1 * C:2 * C]
    v = qkv[:, 2 * C:3 * C]

    attn_out = jnp.zeros((M, C), jnp.float32)
    for h in range(num_heads):
        qh = q[:, h * D:(h + 1) * D].reshape(TB, N, D)   # (TB, N, D) bf16
        kh = k[:, h * D:(h + 1) * D].reshape(TB, N, D)
        vh = v[:, h * D:(h + 1) * D].reshape(TB, N, D)
        # scores = qh @ kh^T per batch, contraction over D, no transpose.
        s = jnp.einsum("bnd,bmd->bnm", qh, kh,
                       preferred_element_type=jnp.float32)     # (TB, N, N)
        s = s - jnp.max(s, axis=-1, keepdims=True)
        p = jnp.exp(s)
        denom = jnp.sum(p, axis=-1, keepdims=True)
        p = p * pl.reciprocal(denom, approx=True)
        oh = jnp.einsum("bnm,bmd->bnd", p.astype(jnp.bfloat16), vh,
                        preferred_element_type=jnp.float32)    # (TB, N, D)
        # Fold this head's output straight into the projection (no scratch
        # slab, no masked D-lane stores, no VMEM round trip).
        attn_out = attn_out + jnp.dot(
            oh.reshape(M, D).astype(jnp.bfloat16),
            wproj_ref[pl.ds(h * D, D), :],
            preferred_element_type=jnp.float32)

    x1 = x + attn_out + bproj_ref[...]              # residual (f32)

    # ---- MLP branch --------------------------------------------------------
    xn2 = _layernorm(x1, n2w_ref[...], n2b_ref[...])
    h1 = jnp.dot(xn2.astype(jnp.bfloat16), w1_ref[...],
                 preferred_element_type=jnp.float32) + b1_ref[...]
    h1 = jax.nn.gelu(h1, approximate=True)          # tanh approx -> EUP
    y2 = jnp.dot(h1.astype(jnp.bfloat16), w2_ref[...],
                 preferred_element_type=jnp.float32) + b2_ref[...]

    o_ref[...] = (x1 + y2).reshape(TB, N, C).astype(o_ref.dtype)


def _prep_params(params, *, num_heads):
    """Fold the qk scale into the Q weight columns; cast matmul weights to bf16."""
    C = params["wproj"].shape[0]
    D = C // num_heads
    scale = float(D) ** -0.5
    wqkv = params["wqkv"].at[:, :C].multiply(scale)
    return {
        "n1w": params["n1w"], "n1b": params["n1b"],
        "wqkv": wqkv.astype(jnp.bfloat16),
        "wproj": params["wproj"].astype(jnp.bfloat16),
        "bproj": params["bproj"],
        "n2w": params["n2w"], "n2b": params["n2b"],
        "w1": params["w1"].astype(jnp.bfloat16),
        "b1": params["b1"],
        "w2": params["w2"].astype(jnp.bfloat16),
        "b2": params["b2"],
    }


def vit_block(x, params, *, num_heads, batch_block=None):
    B, N, C = x.shape
    H = params["w1"].shape[1]                      # mlp hidden dim
    p = _prep_params(params, num_heads=num_heads)

    if batch_block is None:
        # Largest divisor of B that still leaves >=2 grid steps (keeps both
        # v7x TensorCores busy); fall back to the whole batch otherwise.
        cands = [d for d in range(1, B + 1) if B % d == 0 and B // d >= 2]
        batch_block = max(cands) if cands else B
    tb = batch_block
    if B % tb != 0:
        raise ValueError(f"batch_block={tb} must divide B={B}")

    rep = lambda shape: pl.BlockSpec(shape, lambda b: (0, 0))

    in_specs = [
        pl.BlockSpec((tb, N, C), lambda b: (b, 0, 0)),  # x (block of batches)
        rep((1, C)), rep((1, C)),                       # norm1 w, b
        rep((C, 3 * C)),                                # qkv weight (pre-T, scale folded)
        rep((C, C)), rep((1, C)),                       # proj w, b
        rep((1, C)), rep((1, C)),                       # norm2 w, b
        rep((C, H)), rep((1, H)),                       # fc1 w, b
        rep((H, C)), rep((1, C)),                       # fc2 w, b
    ]

    return pl.pallas_call(
        functools.partial(block_kernel, num_heads=num_heads),
        out_shape=jax.ShapeDtypeStruct((B, N, C), x.dtype),
        grid_spec=pltpu.PrefetchScalarGridSpec(
            num_scalar_prefetch=0,
            grid=(B // tb,),
            in_specs=in_specs,
            out_specs=pl.BlockSpec((tb, N, C), lambda b: (b, 0, 0)),
        ),
        compiler_params=pltpu.CompilerParams(
            dimension_semantics=("parallel",),
            vmem_limit_bytes=48 * 1024 * 1024),
    )(x,
      p["n1w"], p["n1b"],
      p["wqkv"],
      p["wproj"], p["bproj"],
      p["n2w"], p["n2b"],
      p["w1"], p["b1"],
      p["w2"], p["b2"])


def reference_block(x, params, *, num_heads):
    """Pure-JAX f32 reference mirroring the PyTorch Block forward."""
    B, N, C = x.shape
    D = C // num_heads
    scale = float(D) ** -0.5

    def ln(t, w, b):
        mu = jnp.mean(t, axis=-1, keepdims=True)
        var = jnp.mean((t - mu) ** 2, axis=-1, keepdims=True)
        return (t - mu) / jnp.sqrt(var + LN_EPS) * w + b

    xn = ln(x, params["n1w"], params["n1b"])
    qkv = xn @ params["wqkv"]                                   # (B, N, 3C)
    qkv = qkv.reshape(B, N, 3, num_heads, D).transpose(2, 0, 3, 1, 4)
    q, k, v = qkv[0], qkv[1], qkv[2]                            # (B, H, N, D)
    attn = jnp.einsum("bhnd,bhmd->bhnm", q, k) * scale
    attn = jax.nn.softmax(attn, axis=-1)
    ao = jnp.einsum("bhnm,bhmd->bhnd", attn, v).transpose(0, 2, 1, 3).reshape(B, N, C)
    ao = ao @ params["wproj"] + params["bproj"]
    x1 = x + ao

    xn2 = ln(x1, params["n2w"], params["n2b"])
    h1 = jax.nn.gelu(xn2 @ params["w1"] + params["b1"], approximate=False)
    y2 = h1 @ params["w2"] + params["b2"]
    return x1 + y2


def make_params(key, dim, mlp_hidden):
    ks = jax.random.split(key, 6)
    s = 0.02
    return {
        "n1w": jnp.ones((1, dim), jnp.float32),
        "n1b": jnp.zeros((1, dim), jnp.float32),
        # qkv_bias=False (module default) -> no qkv bias.
        "wqkv": s * jax.random.normal(ks[0], (dim, 3 * dim), jnp.float32),
        "wproj": s * jax.random.normal(ks[1], (dim, dim), jnp.float32),
        "bproj": s * jax.random.normal(ks[2], (1, dim), jnp.float32),
        "n2w": jnp.ones((1, dim), jnp.float32),
        "n2b": jnp.zeros((1, dim), jnp.float32),
        "w1": s * jax.random.normal(ks[3], (dim, mlp_hidden), jnp.float32),
        "b1": jnp.zeros((1, mlp_hidden), jnp.float32),
        "w2": s * jax.random.normal(ks[4], (mlp_hidden, dim), jnp.float32),
        "b2": jnp.zeros((1, dim), jnp.float32),
    }


if __name__ == "__main__":
    # Small but lane-dense shapes: C and mlp hidden are multiples of 128.
    # B=4 with batch_block=2 -> grid of 2 parallel steps (v7x megacore) while
    # flattening 2*16 = 32 rows per matmul.
    B, N, C = 4, 16, 128
    num_heads = 4
    mlp_hidden = int(C * 4.0)

    key = jax.random.PRNGKey(0)
    kx, kp = jax.random.split(key)
    x = jax.random.normal(kx, (B, N, C), jnp.float32)
    params = make_params(kp, C, mlp_hidden)

    out = vit_block(x, params, num_heads=num_heads)
    out = jax.block_until_ready(out)

    ref = reference_block(x, params, num_heads=num_heads)
    # bf16 matmul operands (f32 accumulation) + approx reciprocal + tanh GELU
    # -> widened tolerance vs the exact f32 reference.
    np.testing.assert_allclose(np.asarray(out), np.asarray(ref), rtol=2e-2, atol=2e-2)

    print("KERNEL_OK")
</pallas_src>

<mosaic_0001>
module attributes {stable_mosaic.version = 11 : i64} {
  func.func @block_kernel(%arg0: i32, %arg1: memref<2x16x128xf32, #tpu.memory_space<vmem>>, %arg2: memref<1x128xf32, #tpu.memory_space<vmem>>, %arg3: memref<1x128xf32, #tpu.memory_space<vmem>>, %arg4: memref<128x384xbf16, #tpu.memory_space<vmem>>, %arg5: memref<128x128xbf16, #tpu.memory_space<vmem>>, %arg6: memref<1x128xf32, #tpu.memory_space<vmem>>, %arg7: memref<1x128xf32, #tpu.memory_space<vmem>>, %arg8: memref<1x128xf32, #tpu.memory_space<vmem>>, %arg9: memref<128x512xbf16, #tpu.memory_space<vmem>>, %arg10: memref<1x512xf32, #tpu.memory_space<vmem>>, %arg11: memref<512x128xbf16, #tpu.memory_space<vmem>>, %arg12: memref<1x128xf32, #tpu.memory_space<vmem>>, %arg13: memref<2x16x128xf32, #tpu.memory_space<vmem>>) attributes {dimension_semantics = [#tpu.dimension_semantics<parallel>], iteration_bounds = array<i64: 2>, scalar_prefetch = 0 : i64, scratch_operands = 0 : i64, tpu.core_type = #tpu.core_type<tc>, window_params = [{transform_indices = @transform_0, window_bounds = array<i64: 2, 16, 128>}, {pipeline_mode = #tpu.pipeline_mode<synchronous>, transform_indices = @transform_1, window_bounds = array<i64: 1, 128>}, {pipeline_mode = #tpu.pipeline_mode<synchronous>, transform_indices = @transform_2, window_bounds = array<i64: 1, 128>}, {pipeline_mode = #tpu.pipeline_mode<synchronous>, transform_indices = @transform_3, window_bounds = array<i64: 128, 384>}, {pipeline_mode = #tpu.pipeline_mode<synchronous>, transform_indices = @transform_4, window_bounds = array<i64: 128, 128>}, {pipeline_mode = #tpu.pipeline_mode<synchronous>, transform_indices = @transform_5, window_bounds = array<i64: 1, 128>}, {pipeline_mode = #tpu.pipeline_mode<synchronous>, transform_indices = @transform_6, window_bounds = array<i64: 1, 128>}, {pipeline_mode = #tpu.pipeline_mode<synchronous>, transform_indices = @transform_7, window_bounds = array<i64: 1, 128>}, {pipeline_mode = #tpu.pipeline_mode<synchronous>, transform_indices = @transform_8, window_bounds = array<i64: 128, 512>}, {pipeline_mode = #tpu.pipeline_mode<synchronous>, transform_indices = @transform_9, window_bounds = array<i64: 1, 512>}, {pipeline_mode = #tpu.pipeline_mode<synchronous>, transform_indices = @transform_10, window_bounds = array<i64: 512, 128>}, {pipeline_mode = #tpu.pipeline_mode<synchronous>, transform_indices = @transform_11, window_bounds = array<i64: 1, 128>}, {transform_indices = @transform_12, window_bounds = array<i64: 2, 16, 128>}]} {
    %c0 = arith.constant 0 : index
    %c0_0 = arith.constant 0 : index
    %c0_1 = arith.constant 0 : index
    %0 = vector.load %arg1[%c0, %c0_0, %c0_1] : memref<2x16x128xf32, #tpu.memory_space<vmem>>, vector<2x16x128xf32>
    %1 = vector.shape_cast %0 : vector<2x16x128xf32> to vector<32x128xf32>
    %c0_2 = arith.constant 0 : index
    %c0_3 = arith.constant 0 : index
    %2 = vector.load %arg2[%c0_2, %c0_3] : memref<1x128xf32, #tpu.memory_space<vmem>>, vector<1x128xf32>
    %c0_4 = arith.constant 0 : index
    %c0_5 = arith.constant 0 : index
    %3 = vector.load %arg3[%c0_4, %c0_5] : memref<1x128xf32, #tpu.memory_space<vmem>>, vector<1x128xf32>
    %cst = arith.constant dense<0.000000e+00> : vector<32xf32>
    %4 = vector.multi_reduction <add>, %1, %cst [1] : vector<32x128xf32> to vector<32xf32>
    %5 = vector.shape_cast %4 : vector<32xf32> to vector<32x1xf32>
    %cst_6 = arith.constant 1.280000e+02 : f32
    %6 = vector.broadcast %cst_6 : f32 to vector<32x1xf32>
    %7 = arith.divf %5, %6 : vector<32x1xf32>
    %8 = arith.mulf %1, %1 : vector<32x128xf32>
    %cst_7 = arith.constant dense<0.000000e+00> : vector<32xf32>
    %9 = vector.multi_reduction <add>, %8, %cst_7 [1] : vector<32x128xf32> to vector<32xf32>
    %10 = vector.shape_cast %9 : vector<32xf32> to vector<32x1xf32>
    %cst_8 = arith.constant 1.280000e+02 : f32
    %11 = vector.broadcast %cst_8 : f32 to vector<32x1xf32>
    %12 = arith.divf %10, %11 : vector<32x1xf32>
    %13 = arith.mulf %7, %7 : vector<32x1xf32>
    %14 = arith.subf %12, %13 : vector<32x1xf32>
    %cst_9 = arith.constant 0.000000e+00 : f32
    %15 = vector.broadcast %cst_9 : f32 to vector<32x1xf32>
    %16 = arith.maximumf %14, %15 : vector<32x1xf32>
    %17 = vector.broadcast %7 : vector<32x1xf32> to vector<32x128xf32>
    %18 = arith.subf %1, %17 : vector<32x128xf32>
    %cst_10 = arith.constant 9.99999974E-6 : f32
    %19 = vector.broadcast %cst_10 : f32 to vector<32x1xf32>
    %20 = arith.addf %16, %19 : vector<32x1xf32>
    %21 = math.rsqrt %20 : vector<32x1xf32>
    %22 = vector.broadcast %21 : vector<32x1xf32> to vector<32x128xf32>
    %23 = arith.mulf %18, %22 : vector<32x128xf32>
    %24 = vector.broadcast %2 : vector<1x128xf32> to vector<32x128xf32>
    %25 = arith.mulf %23, %24 : vector<32x128xf32>
    %26 = vector.broadcast %3 : vector<1x128xf32> to vector<32x128xf32>
    %27 = arith.addf %25, %26 : vector<32x128xf32>
    %28 = arith.truncf %27 : vector<32x128xf32> to vector<32x128xbf16>
    %c0_11 = arith.constant 0 : index
    %c0_12 = arith.constant 0 : index
    %29 = vector.load %arg4[%c0_11, %c0_12] : memref<128x384xbf16, #tpu.memory_space<vmem>>, vector<128x384xbf16>
    %cst_13 = arith.constant dense<0.000000e+00> : vector<32x384xf32>
    %30 = tpu.matmul %28, %29, %cst_13 {dimension_numbers = #tpu.dot_dimension_numbers<[1], [0], [0], [1], [0, 0, 1, 1], [], []>} : vector<32x128xbf16>, vector<128x384xbf16>, vector<32x384xf32> -> vector<32x384xf32>
    %31 = arith.truncf %30 : vector<32x384xf32> to vector<32x384xbf16>
    %32 = vector.extract_strided_slice %31 {offsets = [0, 0], sizes = [32, 128], strides = [1, 1]} : vector<32x384xbf16> to vector<32x128xbf16>
    %33 = vector.extract_strided_slice %31 {offsets = [0, 128], sizes = [32, 128], strides = [1, 1]} : vector<32x384xbf16> to vector<32x128xbf16>
    %34 = vector.extract_strided_slice %31 {offsets = [0, 256], sizes = [32, 128], strides = [1, 1]} : vector<32x384xbf16> to vector<32x128xbf16>
    %cst_14 = arith.constant 0.000000e+00 : f32
    %35 = vector.broadcast %cst_14 : f32 to vector<32x128xf32>
    %36 = vector.extract_strided_slice %32 {offsets = [0, 0], sizes = [32, 32], strides = [1, 1]} : vector<32x128xbf16> to vector<32x32xbf16>
    %37 = vector.shape_cast %36 : vector<32x32xbf16> to vector<2x16x32xbf16>
    %38 = vector.extract_strided_slice %33 {offsets = [0, 0], sizes = [32, 32], strides = [1, 1]} : vector<32x128xbf16> to vector<32x32xbf16>
    %39 = vector.shape_cast %38 : vector<32x32xbf16> to vector<2x16x32xbf16>
    %40 = vector.extract_strided_slice %34 {offsets = [0, 0], sizes = [32, 32], strides = [1, 1]} : vector<32x128xbf16> to vector<32x32xbf16>
    %41 = vector.shape_cast %40 : vector<32x32xbf16> to vector<2x16x32xbf16>
    "tpu.trace_start"() <{level = 10 : i32, message = "bnd,bmd->bnm"}> : () -> ()
    %cst_15 = arith.constant dense<0.000000e+00> : vector<2x16x16xf32>
    %42 = tpu.matmul %37, %39, %cst_15 {dimension_numbers = #tpu.dot_dimension_numbers<[2], [2], [1], [1], [0, 0, 0, 1, 1, 1], [0], [0]>} : vector<2x16x32xbf16>, vector<2x16x32xbf16>, vector<2x16x16xf32> -> vector<2x16x16xf32>
    "tpu.trace_stop"() : () -> ()
    %cst_16 = arith.constant dense<0xFF800000> : vector<2x16xf32>
    %43 = vector.multi_reduction <maximumf>, %42, %cst_16 [2] : vector<2x16x16xf32> to vector<2x16xf32>
    %44 = vector.shape_cast %43 : vector<2x16xf32> to vector<2x16x1xf32>
    %45 = vector.broadcast %44 : vector<2x16x1xf32> to vector<2x16x16xf32>
    %46 = arith.subf %42, %45 : vector<2x16x16xf32>
    %47 = math.exp %46 : vector<2x16x16xf32>
    %cst_17 = arith.constant dense<0.000000e+00> : vector<2x16xf32>
    %48 = vector.multi_reduction <add>, %47, %cst_17 [2] : vector<2x16x16xf32> to vector<2x16xf32>
    %49 = vector.shape_cast %48 : vector<2x16xf32> to vector<2x16x1xf32>
    %50 = tpu.reciprocal %49 {approx = true} : vector<2x16x1xf32> -> vector<2x16x1xf32>
    %51 = vector.broadcast %50 : vector<2x16x1xf32> to vector<2x16x16xf32>
    %52 = arith.mulf %47, %51 : vector<2x16x16xf32>
    %53 = arith.truncf %52 : vector<2x16x16xf32> to vector<2x16x16xbf16>
    "tpu.trace_start"() <{level = 10 : i32, message = "bnm,bmd->bnd"}> : () -> ()
    %cst_18 = arith.constant dense<0.000000e+00> : vector<2x16x32xf32>
    %54 = tpu.matmul %53, %41, %cst_18 {dimension_numbers = #tpu.dot_dimension_numbers<[2], [1], [1], [2], [0, 0, 0, 1, 1, 2], [0], [0]>} : vector<2x16x16xbf16>, vector<2x16x32xbf16>, vector<2x16x32xf32> -> vector<2x16x32xf32>
    "tpu.trace_stop"() : () -> ()
    %55 = vector.shape_cast %54 : vector<2x16x32xf32> to vector<32x32xf32>
    %56 = arith.truncf %55 : vector<32x32xf32> to vector<32x32xbf16>
    %c0_19 = arith.constant 0 : index
    %c0_20 = arith.constant 0 : index
    %57 = vector.load %arg5[%c0_19, %c0_20] : memref<128x128xbf16, #tpu.memory_space<vmem>>, vector<32x128xbf16>
    %cst_21 = arith.constant dense<0.000000e+00> : vector<32x128xf32>
    %58 = tpu.matmul %56, %57, %cst_21 {dimension_numbers = #tpu.dot_dimension_numbers<[1], [0], [0], [1], [0, 0, 1, 1], [], []>} : vector<32x32xbf16>, vector<32x128xbf16>, vector<32x128xf32> -> vector<32x128xf32>
    %59 = arith.addf %35, %58 : vector<32x128xf32>
    %60 = vector.extract_strided_slice %32 {offsets = [0, 32], sizes = [32, 32], strides = [1, 1]} : vector<32x128xbf16> to vector<32x32xbf16>
    %61 = vector.shape_cast %60 : vector<32x32xbf16> to vector<2x16x32xbf16>
    %62 = vector.extract_strided_slice %33 {offsets = [0, 32], sizes = [32, 32], strides = [1, 1]} : vector<32x128xbf16> to vector<32x32xbf16>
    %63 = vector.shape_cast %62 : vector<32x32xbf16> to vector<2x16x32xbf16>
    %64 = vector.extract_strided_slice %34 {offsets = [0, 32], sizes = [32, 32], strides = [1, 1]} : vector<32x128xbf16> to vector<32x32xbf16>
    %65 = vector.shape_cast %64 : vector<32x32xbf16> to vector<2x16x32xbf16>
    "tpu.trace_start"() <{level = 10 : i32, message = "bnd,bmd->bnm"}> : () -> ()
    %cst_22 = arith.constant dense<0.000000e+00> : vector<2x16x16xf32>
    %66 = tpu.matmul %61, %63, %cst_22 {dimension_numbers = #tpu.dot_dimension_numbers<[2], [2], [1], [1], [0, 0, 0, 1, 1, 1], [0], [0]>} : vector<2x16x32xbf16>, vector<2x16x32xbf16>, vector<2x16x16xf32> -> vector<2x16x16xf32>
    "tpu.trace_stop"() : () -> ()
    %cst_23 = arith.constant dense<0xFF800000> : vector<2x16xf32>
    %67 = vector.multi_reduction <maximumf>, %66, %cst_23 [2] : vector<2x16x16xf32> to vector<2x16xf32>
    %68 = vector.shape_cast %67 : vector<2x16xf32> to vector<2x16x1xf32>
    %69 = vector.broadcast %68 : vector<2x16x1xf32> to vector<2x16x16xf32>
    %70 = arith.subf %66, %69 : vector<2x16x16xf32>
    %71 = math.exp %70 : vector<2x16x16xf32>
    %cst_24 = arith.constant dense<0.000000e+00> : vector<2x16xf32>
    %72 = vector.multi_reduction <add>, %71, %cst_24 [2] : vector<2x16x16xf32> to vector<2x16xf32>
    %73 = vector.shape_cast %72 : vector<2x16xf32> to vector<2x16x1xf32>
    %74 = tpu.reciprocal %73 {approx = true} : vector<2x16x1xf32> -> vector<2x16x1xf32>
    %75 = vector.broadcast %74 : vector<2x16x1xf32> to vector<2x16x16xf32>
    %76 = arith.mulf %71, %75 : vector<2x16x16xf32>
    %77 = arith.truncf %76 : vector<2x16x16xf32> to vector<2x16x16xbf16>
    "tpu.trace_start"() <{level = 10 : i32, message = "bnm,bmd->bnd"}> : () -> ()
    %cst_25 = arith.constant dense<0.000000e+00> : vector<2x16x32xf32>
    %78 = tpu.matmul %77, %65, %cst_25 {dimension_numbers = #tpu.dot_dimension_numbers<[2], [1], [1], [2], [0, 0, 0, 1, 1, 2], [0], [0]>} : vector<2x16x16xbf16>, vector<2x16x32xbf16>, vector<2x16x32xf32> -> vector<2x16x32xf32>
    "tpu.trace_stop"() : () -> ()
    %79 = vector.shape_cast %78 : vector<2x16x32xf32> to vector<32x32xf32>
    %80 = arith.truncf %79 : vector<32x32xf32> to vector<32x32xbf16>
    %c32 = arith.constant 32 : index
    %c0_26 = arith.constant 0 : index
    %81 = vector.load %arg5[%c32, %c0_26] : memref<128x128xbf16, #tpu.memory_space<vmem>>, vector<32x128xbf16>
    %cst_27 = arith.constant dense<0.000000e+00> : vector<32x128xf32>
    %82 = tpu.matmul %80, %81, %cst_27 {dimension_numbers = #tpu.dot_dimension_numbers<[1], [0], [0], [1], [0, 0, 1, 1], [], []>} : vector<32x32xbf16>, vector<32x128xbf16>, vector<32x128xf32> -> vector<32x128xf32>
    %83 = arith.addf %59, %82 : vector<32x128xf32>
    %84 = vector.extract_strided_slice %32 {offsets = [0, 64], sizes = [32, 32], strides = [1, 1]} : vector<32x128xbf16> to vector<32x32xbf16>
    %85 = vector.shape_cast %84 : vector<32x32xbf16> to vector<2x16x32xbf16>
    %86 = vector.extract_strided_slice %33 {offsets = [0, 64], sizes = [32, 32], strides = [1, 1]} : vector<32x128xbf16> to vector<32x32xbf16>
    %87 = vector.shape_cast %86 : vector<32x32xbf16> to vector<2x16x32xbf16>
    %88 = vector.extract_strided_slice %34 {offsets = [0, 64], sizes = [32, 32], strides = [1, 1]} : vector<32x128xbf16> to vector<32x32xbf16>
    %89 = vector.shape_cast %88 : vector<32x32xbf16> to vector<2x16x32xbf16>
    "tpu.trace_start"() <{level = 10 : i32, message = "bnd,bmd->bnm"}> : () -> ()
    %cst_28 = arith.constant dense<0.000000e+00> : vector<2x16x16xf32>
    %90 = tpu.matmul %85, %87, %cst_28 {dimension_numbers = #tpu.dot_dimension_numbers<[2], [2], [1], [1], [0, 0, 0, 1, 1, 1], [0], [0]>} : vector<2x16x32xbf16>, vector<2x16x32xbf16>, vector<2x16x16xf32> -> vector<2x16x16xf32>
    "tpu.trace_stop"() : () -> ()
    %cst_29 = arith.constant dense<0xFF800000> : vector<2x16xf32>
    %91 = vector.multi_reduction <maximumf>, %90, %cst_29 [2] : vector<2x16x16xf32> to vector<2x16xf32>
    %92 = vector.shape_cast %91 : vector<2x16xf32> to vector<2x16x1xf32>
    %93 = vector.broadcast %92 : vector<2x16x1xf32> to vector<2x16x16xf32>
    %94 = arith.subf %90, %93 : vector<2x16x16xf32>
    %95 = math.exp %94 : vector<2x16x16xf32>
    %cst_30 = arith.constant dense<0.000000e+00> : vector<2x16xf32>
    %96 = vector.multi_reduction <add>, %95, %cst_30 [2] : vector<2x16x16xf32> to vector<2x16xf32>
    %97 = vector.shape_cast %96 : vector<2x16xf32> to vector<2x16x1xf32>
    %98 = tpu.reciprocal %97 {approx = true} : vector<2x16x1xf32> -> vector<2x16x1xf32>
    %99 = vector.broadcast %98 : vector<2x16x1xf32> to vector<2x16x16xf32>
    %100 = arith.mulf %95, %99 : vector<2x16x16xf32>
    %101 = arith.truncf %100 : vector<2x16x16xf32> to vector<2x16x16xbf16>
    "tpu.trace_start"() <{level = 10 : i32, message = "bnm,bmd->bnd"}> : () -> ()
    %cst_31 = arith.constant dense<0.000000e+00> : vector<2x16x32xf32>
    %102 = tpu.matmul %101, %89, %cst_31 {dimension_numbers = #tpu.dot_dimension_numbers<[2], [1], [1], [2], [0, 0, 0, 1, 1, 2], [0], [0]>} : vector<2x16x16xbf16>, vector<2x16x32xbf16>, vector<2x16x32xf32> -> vector<2x16x32xf32>
    "tpu.trace_stop"() : () -> ()
    %103 = vector.shape_cast %102 : vector<2x16x32xf32> to vector<32x32xf32>
    %104 = arith.truncf %103 : vector<32x32xf32> to vector<32x32xbf16>
    %c64 = arith.constant 64 : index
    %c0_32 = arith.constant 0 : index
    %105 = vector.load %arg5[%c64, %c0_32] : memref<128x128xbf16, #tpu.memory_space<vmem>>, vector<32x128xbf16>
    %cst_33 = arith.constant dense<0.000000e+00> : vector<32x128xf32>
    %106 = tpu.matmul %104, %105, %cst_33 {dimension_numbers = #tpu.dot_dimension_numbers<[1], [0], [0], [1], [0, 0, 1, 1], [], []>} : vector<32x32xbf16>, vector<32x128xbf16>, vector<32x128xf32> -> vector<32x128xf32>
    %107 = arith.addf %83, %106 : vector<32x128xf32>
    %108 = vector.extract_strided_slice %32 {offsets = [0, 96], sizes = [32, 32], strides = [1, 1]} : vector<32x128xbf16> to vector<32x32xbf16>
    %109 = vector.shape_cast %108 : vector<32x32xbf16> to vector<2x16x32xbf16>
    %110 = vector.extract_strided_slice %33 {offsets = [0, 96], sizes = [32, 32], strides = [1, 1]} : vector<32x128xbf16> to vector<32x32xbf16>
    %111 = vector.shape_cast %110 : vector<32x32xbf16> to vector<2x16x32xbf16>
    %112 = vector.extract_strided_slice %34 {offsets = [0, 96], sizes = [32, 32], strides = [1, 1]} : vector<32x128xbf16> to vector<32x32xbf16>
    %113 = vector.shape_cast %112 : vector<32x32xbf16> to vector<2x16x32xbf16>
    "tpu.trace_start"() <{level = 10 : i32, message = "bnd,bmd->bnm"}> : () -> ()
    %cst_34 = arith.constant dense<0.000000e+00> : vector<2x16x16xf32>
    %114 = tpu.matmul %109, %111, %cst_34 {dimension_numbers = #tpu.dot_dimension_numbers<[2], [2], [1], [1], [0, 0, 0, 1, 1, 1], [0], [0]>} : vector<2x16x32xbf16>, vector<2x16x32xbf16>, vector<2x16x16xf32> -> vector<2x16x16xf32>
    "tpu.trace_stop"() : () -> ()
    %cst_35 = arith.constant dense<0xFF800000> : vector<2x16xf32>
    %115 = vector.multi_reduction <maximumf>, %114, %cst_35 [2] : vector<2x16x16xf32> to vector<2x16xf32>
    %116 = vector.shape_cast %115 : vector<2x16xf32> to vector<2x16x1xf32>
    %117 = vector.broadcast %116 : vector<2x16x1xf32> to vector<2x16x16xf32>
    %118 = arith.subf %114, %117 : vector<2x16x16xf32>
    %119 = math.exp %118 : vector<2x16x16xf32>
    %cst_36 = arith.constant dense<0.000000e+00> : vector<2x16xf32>
    %120 = vector.multi_reduction <add>, %119, %cst_36 [2] : vector<2x16x16xf32> to vector<2x16xf32>
    %121 = vector.shape_cast %120 : vector<2x16xf32> to vector<2x16x1xf32>
    %122 = tpu.reciprocal %121 {approx = true} : vector<2x16x1xf32> -> vector<2x16x1xf32>
    %123 = vector.broadcast %122 : vector<2x16x1xf32> to vector<2x16x16xf32>
    %124 = arith.mulf %119, %123 : vector<2x16x16xf32>
    %125 = arith.truncf %124 : vector<2x16x16xf32> to vector<2x16x16xbf16>
    "tpu.trace_start"() <{level = 10 : i32, message = "bnm,bmd->bnd"}> : () -> ()
    %cst_37 = arith.constant dense<0.000000e+00> : vector<2x16x32xf32>
    %126 = tpu.matmul %125, %113, %cst_37 {dimension_numbers = #tpu.dot_dimension_numbers<[2], [1], [1], [2], [0, 0, 0, 1, 1, 2], [0], [0]>} : vector<2x16x16xbf16>, vector<2x16x32xbf16>, vector<2x16x32xf32> -> vector<2x16x32xf32>
    "tpu.trace_stop"() : () -> ()
    %127 = vector.shape_cast %126 : vector<2x16x32xf32> to vector<32x32xf32>
    %128 = arith.truncf %127 : vector<32x32xf32> to vector<32x32xbf16>
    %c96 = arith.constant 96 : index
    %c0_38 = arith.constant 0 : index
    %129 = vector.load %arg5[%c96, %c0_38] : memref<128x128xbf16, #tpu.memory_space<vmem>>, vector<32x128xbf16>
    %cst_39 = arith.constant dense<0.000000e+00> : vector<32x128xf32>
    %130 = tpu.matmul %128, %129, %cst_39 {dimension_numbers = #tpu.dot_dimension_numbers<[1], [0], [0], [1], [0, 0, 1, 1], [], []>} : vector<32x32xbf16>, vector<32x128xbf16>, vector<32x128xf32> -> vector<32x128xf32>
    %131 = arith.addf %107, %130 : vector<32x128xf32>
    %132 = arith.addf %1, %131 : vector<32x128xf32>
    %c0_40 = arith.constant 0 : index
    %c0_41 = arith.constant 0 : index
    %133 = vector.load %arg6[%c0_40, %c0_41] : memref<1x128xf32, #tpu.memory_space<vmem>>, vector<1x128xf32>
    %134 = vector.broadcast %133 : vector<1x128xf32> to vector<32x128xf32>
    %135 = arith.addf %132, %134 : vector<32x128xf32>
    %c0_42 = arith.constant 0 : index
    %c0_43 = arith.constant 0 : index
    %136 = vector.load %arg7[%c0_42, %c0_43] : memref<1x128xf32, #tpu.memory_space<vmem>>, vector<1x128xf32>
    %c0_44 = arith.constant 0 : index
    %c0_45 = arith.constant 0 : index
    %137 = vector.load %arg8[%c0_44, %c0_45] : memref<1x128xf32, #tpu.memory_space<vmem>>, vector<1x128xf32>
    %cst_46 = arith.constant dense<0.000000e+00> : vector<32xf32>
    %138 = vector.multi_reduction <add>, %135, %cst_46 [1] : vector<32x128xf32> to vector<32xf32>
    %139 = vector.shape_cast %138 : vector<32xf32> to vector<32x1xf32>
    %cst_47 = arith.constant 1.280000e+02 : f32
    %140 = vector.broadcast %cst_47 : f32 to vector<32x1xf32>
    %141 = arith.divf %139, %140 : vector<32x1xf32>
    %142 = arith.mulf %135, %135 : vector<32x128xf32>
    %cst_48 = arith.constant dense<0.000000e+00> : vector<32xf32>
    %143 = vector.multi_reduction <add>, %142, %cst_48 [1] : vector<32x128xf32> to vector<32xf32>
    %144 = vector.shape_cast %143 : vector<32xf32> to vector<32x1xf32>
    %cst_49 = arith.constant 1.280000e+02 : f32
    %145 = vector.broadcast %cst_49 : f32 to vector<32x1xf32>
    %146 = arith.divf %144, %145 : vector<32x1xf32>
    %147 = arith.mulf %141, %141 : vector<32x1xf32>
    %148 = arith.subf %146, %147 : vector<32x1xf32>
    %cst_50 = arith.constant 0.000000e+00 : f32
    %149 = vector.broadcast %cst_50 : f32 to vector<32x1xf32>
    %150 = arith.maximumf %148, %149 : vector<32x1xf32>
    %151 = vector.broadcast %141 : vector<32x1xf32> to vector<32x128xf32>
    %152 = arith.subf %135, %151 : vector<32x128xf32>
    %cst_51 = arith.constant 9.99999974E-6 : f32
    %153 = vector.broadcast %cst_51 : f32 to vector<32x1xf32>
    %154 = arith.addf %150, %153 : vector<32x1xf32>
    %155 = math.rsqrt %154 : vector<32x1xf32>
    %156 = vector.broadcast %155 : vector<32x1xf32> to vector<32x128xf32>
    %157 = arith.mulf %152, %156 : vector<32x128xf32>
    %158 = vector.broadcast %136 : vector<1x128xf32> to vector<32x128xf32>
    %159 = arith.mulf %157, %158 : vector<32x128xf32>
    %160 = vector.broadcast %137 : vector<1x128xf32> to vector<32x128xf32>
    %161 = arith.addf %159, %160 : vector<32x128xf32>
    %162 = arith.truncf %161 : vector<32x128xf32> to vector<32x128xbf16>
    %c0_52 = arith.constant 0 : index
    %c0_53 = arith.constant 0 : index
    %163 = vector.load %arg9[%c0_52, %c0_53] : memref<128x512xbf16, #tpu.memory_space<vmem>>, vector<128x512xbf16>
    %cst_54 = arith.constant dense<0.000000e+00> : vector<32x512xf32>
    %164 = tpu.matmul %162, %163, %cst_54 {dimension_numbers = #tpu.dot_dimension_numbers<[1], [0], [0], [1], [0, 0, 1, 1], [], []>} : vector<32x128xbf16>, vector<128x512xbf16>, vector<32x512xf32> -> vector<32x512xf32>
    %c0_55 = arith.constant 0 : index
    %c0_56 = arith.constant 0 : index
    %165 = vector.load %arg10[%c0_55, %c0_56] : memref<1x512xf32, #tpu.memory_space<vmem>>, vector<1x512xf32>
    %166 = vector.broadcast %165 : vector<1x512xf32> to vector<32x512xf32>
    %167 = arith.addf %164, %166 : vector<32x512xf32>
    %168 = arith.mulf %167, %167 : vector<32x512xf32>
    %169 = arith.mulf %167, %168 : vector<32x512xf32>
    %cst_57 = arith.constant 4.471500e-02 : f32
    %170 = vector.broadcast %cst_57 : f32 to vector<32x512xf32>
    %171 = arith.mulf %170, %169 : vector<32x512xf32>
    %172 = arith.addf %167, %171 : vector<32x512xf32>
    %cst_58 = arith.constant 0.797884583 : f32
    %173 = vector.broadcast %cst_58 : f32 to vector<32x512xf32>
    %174 = arith.mulf %173, %172 : vector<32x512xf32>
    %175 = math.tanh %174 : vector<32x512xf32>
    %cst_59 = arith.constant 1.000000e+00 : f32
    %176 = vector.broadcast %cst_59 : f32 to vector<32x512xf32>
    %177 = arith.addf %176, %175 : vector<32x512xf32>
    %cst_60 = arith.constant 5.000000e-01 : f32
    %178 = vector.broadcast %cst_60 : f32 to vector<32x512xf32>
    %179 = arith.mulf %178, %177 : vector<32x512xf32>
    %180 = arith.mulf %167, %179 : vector<32x512xf32>
    %181 = arith.truncf %180 : vector<32x512xf32> to vector<32x512xbf16>
    %c0_61 = arith.constant 0 : index
    %c0_62 = arith.constant 0 : index
    %182 = vector.load %arg11[%c0_61, %c0_62] : memref<512x128xbf16, #tpu.memory_space<vmem>>, vector<512x128xbf16>
    %cst_63 = arith.constant dense<0.000000e+00> : vector<32x128xf32>
    %183 = tpu.matmul %181, %182, %cst_63 {dimension_numbers = #tpu.dot_dimension_numbers<[1], [0], [0], [1], [0, 0, 1, 1], [], []>} : vector<32x512xbf16>, vector<512x128xbf16>, vector<32x128xf32> -> vector<32x128xf32>
    %c0_64 = arith.constant 0 : index
    %c0_65 = arith.constant 0 : index
    %184 = vector.load %arg12[%c0_64, %c0_65] : memref<1x128xf32, #tpu.memory_space<vmem>>, vector<1x128xf32>
    %185 = vector.broadcast %184 : vector<1x128xf32> to vector<32x128xf32>
    %186 = arith.addf %183, %185 : vector<32x128xf32>
    %187 = arith.addf %135, %186 : vector<32x128xf32>
    %188 = vector.shape_cast %187 : vector<32x128xf32> to vector<2x16x128xf32>
    %c0_66 = arith.constant 0 : index
    %c0_67 = arith.constant 0 : index
    %c0_68 = arith.constant 0 : index
    %189 = vector.load %arg13[%c0_66, %c0_67, %c0_68] : memref<2x16x128xf32, #tpu.memory_space<vmem>>, vector<2x16x128xf32>
    tpu.vector_store %arg13[%c0_66, %c0_67, %c0_68], %188 {strides = array<i32>} : memref<2x16x128xf32, #tpu.memory_space<vmem>>, vector<2x16x128xf32>,
    return
  }
  func.func @transform_0(%arg0: i32) -> (i32, i32, i32) {
    %c0_i32 = arith.constant 0 : i32
    %c0_i32_0 = arith.constant 0 : i32
    %c0_i32_1 = arith.constant 0 : i32
    return %arg0, %c0_i32, %c0_i32_0 : i32, i32, i32
  }
  func.func @transform_1(%arg0: i32) -> (i32, i32) {
    %c0_i32 = arith.constant 0 : i32
    %c0_i32_0 = arith.constant 0 : i32
    %c0_i32_1 = arith.constant 0 : i32
    return %c0_i32, %c0_i32_0 : i32, i32
  }
  func.func @transform_2(%arg0: i32) -> (i32, i32) {
    %c0_i32 = arith.constant 0 : i32
    %c0_i32_0 = arith.constant 0 : i32
    %c0_i32_1 = arith.constant 0 : i32
    return %c0_i32, %c0_i32_0 : i32, i32
  }
  func.func @transform_3(%arg0: i32) -> (i32, i32) {
    %c0_i32 = arith.constant 0 : i32
    %c0_i32_0 = arith.constant 0 : i32
    %c0_i32_1 = arith.constant 0 : i32
    return %c0_i32, %c0_i32_0 : i32, i32
  }
  func.func @transform_4(%arg0: i32) -> (i32, i32) {
    %c0_i32 = arith.constant 0 : i32
    %c0_i32_0 = arith.constant 0 : i32
    %c0_i32_1 = arith.constant 0 : i32
    return %c0_i32, %c0_i32_0 : i32, i32
  }
  func.func @transform_5(%arg0: i32) -> (i32, i32) {
    %c0_i32 = arith.constant 0 : i32
    %c0_i32_0 = arith.constant 0 : i32
    %c0_i32_1 = arith.constant 0 : i32
    return %c0_i32, %c0_i32_0 : i32, i32
  }
  func.func @transform_6(%arg0: i32) -> (i32, i32) {
    %c0_i32 = arith.constant 0 : i32
    %c0_i32_0 = arith.constant 0 : i32
    %c0_i32_1 = arith.constant 0 : i32
    return %c0_i32, %c0_i32_0 : i32, i32
  }
  func.func @transform_7(%arg0: i32) -> (i32, i32) {
    %c0_i32 = arith.constant 0 : i32
    %c0_i32_0 = arith.constant 0 : i32
    %c0_i32_1 = arith.constant 0 : i32
    return %c0_i32, %c0_i32_0 : i32, i32
  }
  func.func @transform_8(%arg0: i32) -> (i32, i32) {
    %c0_i32 = arith.constant 0 : i32
    %c0_i32_0 = arith.constant 0 : i32
    %c0_i32_1 = arith.constant 0 : i32
    return %c0_i32, %c0_i32_0 : i32, i32
  }
  func.func @transform_9(%arg0: i32) -> (i32, i32) {
    %c0_i32 = arith.constant 0 : i32
    %c0_i32_0 = arith.constant 0 : i32
    %c0_i32_1 = arith.constant 0 : i32
    return %c0_i32, %c0_i32_0 : i32, i32
  }
  func.func @transform_10(%arg0: i32) -> (i32, i32) {
    %c0_i32 = arith.constant 0 : i32
    %c0_i32_0 = arith.constant 0 : i32
    %c0_i32_1 = arith.constant 0 : i32
    return %c0_i32, %c0_i32_0 : i32, i32
  }
  func.func @transform_11(%arg0: i32) -> (i32, i32) {
    %c0_i32 = arith.constant 0 : i32
    %c0_i32_0 = arith.constant 0 : i32
    %c0_i32_1 = arith.constant 0 : i32
    return %c0_i32, %c0_i32_0 : i32, i32
  }
  func.func @transform_12(%arg0: i32) -> (i32, i32, i32) {
    %c0_i32 = arith.constant 0 : i32
    %c0_i32_0 = arith.constant 0 : i32
    %c0_i32_1 = arith.constant 0 : i32
    return %arg0, %c0_i32, %c0_i32_0 : i32, i32, i32
  }
}

</mosaic_0001>

<llo_original>
// kernel: tpu_custom_call.1
$region0: #{tpu_custom_call.1}
  #allocation0 [shape = 'u32[]', space=smem, size = 0x4, offset = 0x4, fixed_abs, tag = 'smem constant byte address 0x4 - core index']
  #allocation1 [shape = 'u32[144,128]{1,0:T(1,128)}', space=vmem, size = 0x12000, scoped, tag = 'internal scratch']
  %s0 = inlined_call_operand.hbm [shape: f32[4,16,128], index: 0, kind: input, shape index: {}]
  %s1 = inlined_call_operand.vmem [shape: f32[1,128], index: 1, kind: input, shape index: {}]
  %s2 = inlined_call_operand.vmem [shape: f32[1,128], index: 2, kind: input, shape index: {}]
  %s3 = inlined_call_operand.hbm [shape: bf16[128,384], index: 3, kind: input, shape index: {}]
  %s4 = inlined_call_operand.hbm [shape: bf16[128,128], index: 4, kind: input, shape index: {}]
  %s5 = inlined_call_operand.vmem [shape: f32[1,128], index: 5, kind: input, shape index: {}]
  %s6 = inlined_call_operand.vmem [shape: f32[1,128], index: 6, kind: input, shape index: {}]
  %s7 = inlined_call_operand.vmem [shape: f32[1,128], index: 7, kind: input, shape index: {}]
  %s8 = inlined_call_operand.hbm [shape: bf16[128,512], index: 8, kind: input, shape index: {}]
  %s9 = inlined_call_operand.vmem [shape: f32[1,512], index: 9, kind: input, shape index: {}]
  %s10 = inlined_call_operand.hbm [shape: bf16[512,128], index: 10, kind: input, shape index: {}]
  %s11 = inlined_call_operand.vmem [shape: f32[1,128], index: 11, kind: input, shape index: {}]
  %s12 = inlined_call_operand.hbm [shape: f32[4,16,128], index: 12, kind: output, shape index: {}]
  %s13 = sld [smem:[#allocation0]]
  $region101: #{tpu_custom_call.1} parent=0
    _
  %s15 = ssub.s32 1, %s13
  %s16 = scalar_select 0, %s15, %s13
  $region1: #{tpu_custom_call.1} parent=0
    #allocation2 [shape = 'u8[32768]{0}', space=vmem, size = 0x8000, scoped, tag = 'input window, operand 0']
    #allocation3 [shape = 's32[2]{0}', space=sflag, size = 0x8, scoped, tag = 'scoped memory for tpu_custom_call.1']
    #allocation4 [shape = 's32[2]{0}', space=sflag, size = 0x8, scoped, tag = 'scoped memory for tpu_custom_call.1']
    #allocation5 [shape = 'u8[98304]{0}', space=vmem, size = 0x18000, scoped, tag = 'input window, operand 3, single buffered']
    #allocation6 [shape = 's32[1]{0}', space=sflag, size = 0x4, scoped, tag = 'scoped memory for tpu_custom_call.1']
    #allocation7 [shape = 'u8[32768]{0}', space=vmem, size = 0x8000, scoped, tag = 'input window, operand 4, single buffered']
    #allocation8 [shape = 'u8[131072]{0}', space=vmem, size = 0x20000, scoped, tag = 'input window, operand 8, single buffered']
    #allocation9 [shape = 's32[1]{0}', space=sflag, size = 0x4, scoped, tag = 'scoped memory for tpu_custom_call.1']
    #allocation10 [shape = 'u8[131072]{0}', space=vmem, size = 0x20000, scoped, tag = 'input window, operand 10, single buffered']
    #allocation11 [shape = 'u8[32768]{0}', space=vmem, size = 0x8000, scoped, tag = 'output window, operand 0']
    %17 = vsyncpa [#allocation3], 0
    %s18 = scalar_lea.sflag [#allocation3], 1
    %19 = vsyncpa %s18, 0
    %20 = vsyncpa [#allocation6], 0
    %21 = vsyncpa [#allocation9], 0
    %22 = vsyncpa [#allocation4], 0
    %s23 = scalar_lea.sflag [#allocation4], 1
    %24 = vsyncpa %s23, 0
    loop: start=0, step=1, limit=4
    $region2: #{tpu_custom_call.1} parent=1 // loop_pre_header
      _
    $region3: #{tpu_custom_call.1} parent=1 // loop_header
      %s26 = sphi 0, %s30
      %p27 = scmp.ge.s32.totalorder %s26, 4
      %s36 = sphi 0, %s38
      %s39 = sphi 0, %s36
      %s40 = sphi 0, %s39
      %s56 = sphi 0, %s40
      %s60 = sphi 0, %s60
      %s62 = sphi 0, %s60
      %s63 = sphi 0, %s62
      %s77 = sphi 0, %s63
      %s81 = sphi 0, %s81
      %s83 = sphi 0, %s81
      %s84 = sphi 0, %s83
      %s98 = sphi 0, %s84
      %s102 = sphi 0, %s102
      %s104 = sphi 0, %s102
      %s105 = sphi 0, %s104
      %s119 = sphi 0, %s105
      %s123 = sphi 0, %s123
      %s125 = sphi 0, %s123
      %s126 = sphi 0, %s125
      %s140 = sphi 0, %s126
      %s144 = sphi 0, %s144
      %s146 = sphi 0, %s144
      %s147 = sphi 0, %s146
      %s161 = sphi 0, %s147
      %s165 = sphi 0, %s165
      %s167 = sphi 0, %s165
      %s168 = sphi 0, %s167
      %s182 = sphi 0, %s168
      %s186 = sphi 0, %s186
      %s188 = sphi 0, %s186
      %s189 = sphi 0, %s188
      %s203 = sphi 0, %s189
      %s207 = sphi 0, %s207
      %s209 = sphi 0, %s207
      %s210 = sphi 0, %s209
      %s224 = sphi 0, %s210
      %s228 = sphi 0, %s228
      %s230 = sphi 0, %s228
      %s231 = sphi 0, %s230
      %s245 = sphi 0, %s231
      %s249 = sphi 0, %s249
      %s251 = sphi 0, %s249
      %s252 = sphi 0, %s251
      %s266 = sphi 0, %s252
      %s270 = sphi 0, %s270
      %s272 = sphi 0, %s270
      %s273 = sphi 0, %s272
      %s287 = sphi 0, %s273
      %s293 = sphi 0, %s295
      %s296 = sphi 0, %s293
      %s297 = sphi 0, %s296
      %s313 = sphi 0, %s297
    $region4: #{tpu_custom_call.1} parent=1 // loop_header_branch
      %29 = sbr.rel (%p27) target = $region8
    $region5: #{tpu_custom_call.1} parent=1 // loop_body
      %s31 = ssub.s32 %s26, 1
      %s32 = ssub.s32 %s26, 2
      %s33 = sadd.s32 %s26, 1
      %s34 = ssub.s32 %s26, %s33
      %p35 = scmp.eq.s32.totalorder %s34, 0
      %s37 = sadd.s32 %s36, 1
      %s38 = scalar_select %p35, %s36, %s37
      %p41 = pneg %p35
      %p42 = scmp.eq.s32.totalorder %s26, 1
      %p43 = por %p41, %p42
      %p44 = scmp.ne.s32.totalorder %s36, %s39
      %p45 = scmp.eq.s32.totalorder %s26, 0
      %p46 = por %p44, %p45
      %p47 = scmp.ne.s32.totalorder %s36, %s39
      %p48 = scmp.eq.s32.totalorder %s31, 1
      %p49 = por %p47, %p48
      %p50 = scmp.ne.s32.totalorder %s39, %s40
      %p51 = scmp.eq.s32.totalorder %s31, 0
      %p52 = por %p50, %p51
      %p53 = scmp.ne.s32.totalorder %s39, %s40
      %p54 = scmp.eq.s32.totalorder %s32, 1
      %p55 = por %p53, %p54
      %p57 = scmp.ne.s32.totalorder %s40, %s56
      %p58 = scmp.eq.s32.totalorder %s32, 0
      %p59 = por %p57, %p58
      %s61 = sadd.s32 %s60, 1
      %p64 = scmp.eq.s32.totalorder %s26, 1
      %p65 = scmp.ne.s32.totalorder %s60, %s62
      %p66 = scmp.eq.s32.totalorder %s26, 0
      %p67 = por %p65, %p66
      %p68 = scmp.ne.s32.totalorder %s60, %s62
      %p69 = scmp.eq.s32.totalorder %s31, 1
      %p70 = por %p68, %p69
      %p71 = scmp.ne.s32.totalorder %s62, %s63
      %p72 = scmp.eq.s32.totalorder %s31, 0
      %p73 = por %p71, %p72
      %p74 = scmp.ne.s32.totalorder %s62, %s63
      %p75 = scmp.eq.s32.totalorder %s32, 1
      %p76 = por %p74, %p75
      %p78 = scmp.ne.s32.totalorder %s63, %s77
      %p79 = scmp.eq.s32.totalorder %s32, 0
      %p80 = por %p78, %p79
      %s82 = sadd.s32 %s81, 1
      %p85 = scmp.eq.s32.totalorder %s26, 1
      %p86 = scmp.ne.s32.totalorder %s81, %s83
      %p87 = scmp.eq.s32.totalorder %s26, 0
      %p88 = por %p86, %p87
      %p89 = scmp.ne.s32.totalorder %s81, %s83
      %p90 = scmp.eq.s32.totalorder %s31, 1
      %p91 = por %p89, %p90
      %p92 = scmp.ne.s32.totalorder %s83, %s84
      %p93 = scmp.eq.s32.totalorder %s31, 0
      %p94 = por %p92, %p93
      %p95 = scmp.ne.s32.totalorder %s83, %s84
      %p96 = scmp.eq.s32.totalorder %s32, 1
      %p97 = por %p95, %p96
      %p99 = scmp.ne.s32.totalorder %s84, %s98
      %p100 = scmp.eq.s32.totalorder %s32, 0
      %p101 = por %p99, %p100
      %s103 = sadd.s32 %s102, 1
      %p106 = scmp.eq.s32.totalorder %s26, 1
      %p107 = scmp.ne.s32.totalorder %s102, %s104
      %p108 = scmp.eq.s32.totalorder %s26, 0
      %p109 = por %p107, %p108
      %p110 = scmp.ne.s32.totalorder %s102, %s104
      %p111 = scmp.eq.s32.totalorder %s31, 1
      %p112 = por %p110, %p111
      %p113 = scmp.ne.s32.totalorder %s104, %s105
      %p114 = scmp.eq.s32.totalorder %s31, 0
      %p115 = por %p113, %p114
      %p116 = scmp.ne.s32.totalorder %s104, %s105
      %p117 = scmp.eq.s32.totalorder %s32, 1
      %p118 = por %p116, %p117
      %p120 = scmp.ne.s32.totalorder %s105, %s119
      %p121 = scmp.eq.s32.totalorder %s32, 0
      %p122 = por %p120, %p121
      %s124 = sadd.s32 %s123, 1
      %p127 = scmp.eq.s32.totalorder %s26, 1
      %p128 = scmp.ne.s32.totalorder %s123, %s125
      %p129 = scmp.eq.s32.totalorder %s26, 0
      %p130 = por %p128, %p129
      %p131 = scmp.ne.s32.totalorder %s123, %s125
      %p132 = scmp.eq.s32.totalorder %s31, 1
      %p133 = por %p131, %p132
      %p134 = scmp.ne.s32.totalorder %s125, %s126
      %p135 = scmp.eq.s32.totalorder %s31, 0
      %p136 = por %p134, %p135
      %p137 = scmp.ne.s32.totalorder %s125, %s126
      %p138 = scmp.eq.s32.totalorder %s32, 1
      %p139 = por %p137, %p138
      %p141 = scmp.ne.s32.totalorder %s126, %s140
      %p142 = scmp.eq.s32.totalorder %s32, 0
      %p143 = por %p141, %p142
      %s145 = sadd.s32 %s144, 1
      %p148 = scmp.eq.s32.totalorder %s26, 1
      %p149 = scmp.ne.s32.totalorder %s144, %s146
      %p150 = scmp.eq.s32.totalorder %s26, 0
      %p151 = por %p149, %p150
      %p152 = scmp.ne.s32.totalorder %s144, %s146
      %p153 = scmp.eq.s32.totalorder %s31, 1
      %p154 = por %p152, %p153
      %p155 = scmp.ne.s32.totalorder %s146, %s147
      %p156 = scmp.eq.s32.totalorder %s31, 0
      %p157 = por %p155, %p156
      %p158 = scmp.ne.s32.totalorder %s146, %s147
      %p159 = scmp.eq.s32.totalorder %s32, 1
      %p160 = por %p158, %p159
      %p162 = scmp.ne.s32.totalorder %s147, %s161
      %p163 = scmp.eq.s32.totalorder %s32, 0
      %p164 = por %p162, %p163
      %s166 = sadd.s32 %s165, 1
      %p169 = scmp.eq.s32.totalorder %s26, 1
      %p170 = scmp.ne.s32.totalorder %s165, %s167
      %p171 = scmp.eq.s32.totalorder %s26, 0
      %p172 = por %p170, %p171
      %p173 = scmp.ne.s32.totalorder %s165, %s167
      %p174 = scmp.eq.s32.totalorder %s31, 1
      %p175 = por %p173, %p174
      %p176 = scmp.ne.s32.totalorder %s167, %s168
      %p177 = scmp.eq.s32.totalorder %s31, 0
      %p178 = por %p176, %p177
      %p179 = scmp.ne.s32.totalorder %s167, %s168
      %p180 = scmp.eq.s32.totalorder %s32, 1
      %p181 = por %p179, %p180
      %p183 = scmp.ne.s32.totalorder %s168, %s182
      %p184 = scmp.eq.s32.totalorder %s32, 0
      %p185 = por %p183, %p184
      %s187 = sadd.s32 %s186, 1
      %p190 = scmp.eq.s32.totalorder %s26, 1
      %p191 = scmp.ne.s32.totalorder %s186, %s188
      %p192 = scmp.eq.s32.totalorder %s26, 0
      %p193 = por %p191, %p192
      %p194 = scmp.ne.s32.totalorder %s186, %s188
      %p195 = scmp.eq.s32.totalorder %s31, 1
      %p196 = por %p194, %p195
      %p197 = scmp.ne.s32.totalorder %s188, %s189
      %p198 = scmp.eq.s32.totalorder %s31, 0
      %p199 = por %p197, %p198
      %p200 = scmp.ne.s32.totalorder %s188, %s189
      %p201 = scmp.eq.s32.totalorder %s32, 1
      %p202 = por %p200, %p201
      %p204 = scmp.ne.s32.totalorder %s189, %s203
      %p205 = scmp.eq.s32.totalorder %s32, 0
      %p206 = por %p204, %p205
      %s208 = sadd.s32 %s207, 1
      %p211 = scmp.eq.s32.totalorder %s26, 1
      %p212 = scmp.ne.s32.totalorder %s207, %s209
      %p213 = scmp.eq.s32.totalorder %s26, 0
      %p214 = por %p212, %p213
      %p215 = scmp.ne.s32.totalorder %s207, %s209
      %p216 = scmp.eq.s32.totalorder %s31, 1
      %p217 = por %p215, %p216
      %p218 = scmp.ne.s32.totalorder %s209, %s210
      %p219 = scmp.eq.s32.totalorder %s31, 0
      %p220 = por %p218, %p219
      %p221 = scmp.ne.s32.totalorder %s209, %s210
      %p222 = scmp.eq.s32.totalorder %s32, 1
      %p223 = por %p221, %p222
      %p225 = scmp.ne.s32.totalorder %s210, %s224
      %p226 = scmp.eq.s32.totalorder %s32, 0
      %p227 = por %p225, %p226
      %s229 = sadd.s32 %s228, 1
      %p232 = scmp.eq.s32.totalorder %s26, 1
      %p233 = scmp.ne.s32.totalorder %s228, %s230
      %p234 = scmp.eq.s32.totalorder %s26, 0
      %p235 = por %p233, %p234
      %p236 = scmp.ne.s32.totalorder %s228, %s230
      %p237 = scmp.eq.s32.totalorder %s31, 1
      %p238 = por %p236, %p237
      %p239 = scmp.ne.s32.totalorder %s230, %s231
      %p240 = scmp.eq.s32.totalorder %s31, 0
      %p241 = por %p239, %p240
      %p242 = scmp.ne.s32.totalorder %s230, %s231
      %p243 = scmp.eq.s32.totalorder %s32, 1
      %p244 = por %p242, %p243
      %p246 = scmp.ne.s32.totalorder %s231, %s245
      %p247 = scmp.eq.s32.totalorder %s32, 0
      %p248 = por %p246, %p247
      %s250 = sadd.s32 %s249, 1
      %p253 = scmp.eq.s32.totalorder %s26, 1
      %p254 = scmp.ne.s32.totalorder %s249, %s251
      %p255 = scmp.eq.s32.totalorder %s26, 0
      %p256 = por %p254, %p255
      %p257 = scmp.ne.s32.totalorder %s249, %s251
      %p258 = scmp.eq.s32.totalorder %s31, 1
      %p259 = por %p257, %p258
      %p260 = scmp.ne.s32.totalorder %s251, %s252
      %p261 = scmp.eq.s32.totalorder %s31, 0
      %p262 = por %p260, %p261
      %p263 = scmp.ne.s32.totalorder %s251, %s252
      %p264 = scmp.eq.s32.totalorder %s32, 1
      %p265 = por %p263, %p264
      %p267 = scmp.ne.s32.totalorder %s252, %s266
      %p268 = scmp.eq.s32.totalorder %s32, 0
      %p269 = por %p267, %p268
      %s271 = sadd.s32 %s270, 1
      %p274 = scmp.eq.s32.totalorder %s26, 1
      %p275 = scmp.ne.s32.totalorder %s270, %s272
      %p276 = scmp.eq.s32.totalorder %s26, 0
      %p277 = por %p275, %p276
      %p278 = scmp.ne.s32.totalorder %s270, %s272
      %p279 = scmp.eq.s32.totalorder %s31, 1
      %p280 = por %p278, %p279
      %p281 = scmp.ne.s32.totalorder %s272, %s273
      %p282 = scmp.eq.s32.totalorder %s31, 0
      %p283 = por %p281, %p282
      %p284 = scmp.ne.s32.totalorder %s272, %s273
      %p285 = scmp.eq.s32.totalorder %s32, 1
      %p286 = por %p284, %p285
      %p288 = scmp.ne.s32.totalorder %s273, %s287
      %p289 = scmp.eq.s32.totalorder %s32, 0
      %p290 = por %p288, %p289
      %s291 = ssub.s32 %s26, %s33
      %p292 = scmp.eq.s32.totalorder %s291, 0
      %s294 = sadd.s32 %s293, 1
      %s295 = scalar_select %p292, %s293, %s294
      %p298 = pneg %p292
      %p299 = scmp.eq.s32.totalorder %s26, 1
      %p300 = por %p298, %p299
      %p301 = scmp.ne.s32.totalorder %s293, %s296
      %p302 = scmp.eq.s32.totalorder %s26, 0
      %p303 = por %p301, %p302
      %p304 = scmp.ne.s32.totalorder %s293, %s296
      %p305 = scmp.eq.s32.totalorder %s31, 1
      %p306 = por %p304, %p305
      %p307 = scmp.ne.s32.totalorder %s296, %s297
      %p308 = scmp.eq.s32.totalorder %s31, 0
      %p309 = por %p307, %p308
      %p310 = scmp.ne.s32.totalorder %s296, %s297
      %p311 = scmp.eq.s32.totalorder %s32, 1
      %p312 = por %p310, %p311
      %p314 = scmp.ne.s32.totalorder %s297, %s313
      %p315 = scmp.eq.s32.totalorder %s32, 0
      %p316 = por %p314, %p315
      %p317 = scmp.le.s32.totalorder 1, %s26
      %p318 = scmp.lt.s32.totalorder %s26, 3
      %p319 = pnand %p317, %p318
      %p320 = pneg %p319
      // Predicated region
      $region9: #{tpu_custom_call.1} parent=5 // pred_check
        _
      $region10: #{tpu_custom_call.1} parent=5 // pred_check_branch
        %322 = sbr.rel (%p319) target = $region12
      $region11: #{tpu_custom_call.1} parent=5 // pred_region
        %s323 = ssub.s32 %s26, 1
        // Predicated region
        $region13: #{tpu_custom_call.1} parent=11 // pred_check
          %p324 = pneg %p73
        $region14: #{tpu_custom_call.1} parent=11 // pred_check_branch
          %326 = sbr.rel (%p324) target = $region16
        $region15: #{tpu_custom_call.1} parent=11 // pred_region
          _
        $region16: #{tpu_custom_call.1} parent=11 // pred_fallthru
          _
        // Predicated region
        $region17: #{tpu_custom_call.1} parent=11 // pred_check
          %p327 = pneg %p94
        $region18: #{tpu_custom_call.1} parent=11 // pred_check_branch
          %329 = sbr.rel (%p327) target = $region20
        $region19: #{tpu_custom_call.1} parent=11 // pred_region
          _
        $region20: #{tpu_custom_call.1} parent=11 // pred_fallthru
          _
        // Predicated region
        $region21: #{tpu_custom_call.1} parent=11 // pred_check
          %p330 = pneg %p115
        $region22: #{tpu_custom_call.1} parent=11 // pred_check_branch
          %332 = sbr.rel (%p330) target = $region24
        $region23: #{tpu_custom_call.1} parent=11 // pred_region
          %s334 = ssub.s32 3072, 3072
          %335 = vsyncadd [#allocation6], %s334
          %s336 = sshll.u32 [#allocation5], 4
          %s337 = int_to_ptr.vmem [resolvable:$true] %s336
          %342 = dma.hbm_to_vmem [thread:$0]  %s3, 3072, %s337, [#allocation6], 192, 192, 12
        $region24: #{tpu_custom_call.1} parent=11 // pred_fallthru
          _
        // Predicated region
        $region25: #{tpu_custom_call.1} parent=11 // pred_check
          %p343 = pneg %p136
        $region26: #{tpu_custom_call.1} parent=11 // pred_check_branch
          %345 = sbr.rel (%p343) target = $region28
        $region27: #{tpu_custom_call.1} parent=11 // pred_region
          %s347 = ssub.s32 1024, 1024
          %348 = vsyncadd [#allocation6], %s347
          %s349 = sshll.u32 [#allocation7], 4
          %s350 = int_to_ptr.vmem [resolvable:$true] %s349
          %355 = dma.hbm_to_vmem [thread:$0]  %s4, 1024, %s350, [#allocation6], 64, 64, 4
        $region28: #{tpu_custom_call.1} parent=11 // pred_fallthru
          _
        // Predicated region
        $region29: #{tpu_custom_call.1} parent=11 // pred_check
          %p356 = pneg %p157
        $region30: #{tpu_custom_call.1} parent=11 // pred_check_branch
          %358 = sbr.rel (%p356) target = $region32
        $region31: #{tpu_custom_call.1} parent=11 // pred_region
          _
        $region32: #{tpu_custom_call.1} parent=11 // pred_fallthru
          _
        // Predicated region
        $region33: #{tpu_custom_call.1} parent=11 // pred_check
          %p359 = pneg %p178
        $region34: #{tpu_custom_call.1} parent=11 // pred_check_branch
          %361 = sbr.rel (%p359) target = $region36
        $region35: #{tpu_custom_call.1} parent=11 // pred_region
          _
        $region36: #{tpu_custom_call.1} parent=11 // pred_fallthru
          _
        // Predicated region
        $region37: #{tpu_custom_call.1} parent=11 // pred_check
          %p362 = pneg %p199
        $region38: #{tpu_custom_call.1} parent=11 // pred_check_branch
          %364 = sbr.rel (%p362) target = $region40
        $region39: #{tpu_custom_call.1} parent=11 // pred_region
          _
        $region40: #{tpu_custom_call.1} parent=11 // pred_fallthru
          _
        // Predicated region
        $region41: #{tpu_custom_call.1} parent=11 // pred_check
          %p365 = pneg %p220
        $region42: #{tpu_custom_call.1} parent=11 // pred_check_branch
          %367 = sbr.rel (%p365) target = $region44
        $region43: #{tpu_custom_call.1} parent=11 // pred_region
          %s369 = ssub.s32 4096, 4096
          %370 = vsyncadd [#allocation9], %s369
          %s371 = sshll.u32 [#allocation8], 4
          %s372 = int_to_ptr.vmem [resolvable:$true] %s371
          %377 = dma.hbm_to_vmem [thread:$0]  %s8, 4096, %s372, [#allocation9], 256, 256, 16
        $region44: #{tpu_custom_call.1} parent=11 // pred_fallthru
          _
        // Predicated region
        $region45: #{tpu_custom_call.1} parent=11 // pred_check
          %p378 = pneg %p241
        $region46: #{tpu_custom_call.1} parent=11 // pred_check_branch
          %380 = sbr.rel (%p378) target = $region48
        $region47: #{tpu_custom_call.1} parent=11 // pred_region
          _
        $region48: #{tpu_custom_call.1} parent=11 // pred_fallthru
          _
        // Predicated region
        $region49: #{tpu_custom_call.1} parent=11 // pred_check
          %p381 = pneg %p262
        $region50: #{tpu_custom_call.1} parent=11 // pred_check_branch
          %383 = sbr.rel (%p381) target = $region52
        $region51: #{tpu_custom_call.1} parent=11 // pred_region
          %s385 = ssub.s32 4096, 4096
          %386 = vsyncadd [#allocation9], %s385
          %s387 = sshll.u32 [#allocation10], 4
          %s388 = int_to_ptr.vmem [resolvable:$true] %s387
          %393 = dma.hbm_to_vmem [thread:$0]  %s10, 4096, %s388, [#allocation9], 64, 64, 4
        $region52: #{tpu_custom_call.1} parent=11 // pred_fallthru
          _
        // Predicated region
        $region53: #{tpu_custom_call.1} parent=11 // pred_check
          %p394 = pneg %p283
        $region54: #{tpu_custom_call.1} parent=11 // pred_check_branch
          %396 = sbr.rel (%p394) target = $region56
        $region55: #{tpu_custom_call.1} parent=11 // pred_region
          _
        $region56: #{tpu_custom_call.1} parent=11 // pred_fallthru
          _
      $region12: #{tpu_custom_call.1} parent=5 // pred_fallthru
        _
      %p397 = scmp.lt.s32.totalorder %s26, 2
      // Predicated region
      $region57: #{tpu_custom_call.1} parent=5 // pred_check
        %p398 = pneg %p397
      $region58: #{tpu_custom_call.1} parent=5 // pred_check_branch
        %400 = sbr.rel (%p398) target = $region60
      $region59: #{tpu_custom_call.1} parent=5 // pred_region
        // Predicated region
        $region61: #{tpu_custom_call.1} parent=59 // pred_check
          %p401 = pneg %p46
        $region62: #{tpu_custom_call.1} parent=59 // pred_check_branch
          %403 = sbr.rel (%p401) target = $region64
        $region63: #{tpu_custom_call.1} parent=59 // pred_region
          %s404 = sand.u32 %s36, 1
          %s405 = scalar_lea.sflag [#allocation3], %s404
          %s406 = sand.u32 %s36, 1
          %s407 = smul.addr %s406, 32
          %s408 = scalar_lea.vmem [#allocation2], %s407
          %s409 = smul.u32 2, %s26
          %s411 = ssub.s32 512, 512
          %412 = vsyncadd %s405, %s411
          %s413 = smul.addr %s409, 2
          %s414 = smul.addr %s413, 128
          %s415 = scalar_lea.hbm %s0, %s414
          %s416 = sshll.u32 %s408, 4
          %s417 = int_to_ptr.vmem [resolvable:$true] %s416
          %422 = dma.hbm_to_vmem [thread:$0]  %s415, 512, %s417, %s405, 128, 128, 8
        $region64: #{tpu_custom_call.1} parent=59 // pred_fallthru
          _
      $region60: #{tpu_custom_call.1} parent=5 // pred_fallthru
        _
      %p423 = scmp.le.s32.totalorder 1, %s26
      %p424 = scmp.lt.s32.totalorder %s26, 3
      %p425 = pnand %p423, %p424
      %p426 = pneg %p425
      // Predicated region
      $region65: #{tpu_custom_call.1} parent=5 // pred_check
        _
      $region66: #{tpu_custom_call.1} parent=5 // pred_check_branch
        %428 = sbr.rel (%p425) target = $region68
      $region67: #{tpu_custom_call.1} parent=5 // pred_region
        %s429 = ssub.s32 %s26, 1
        %s430 = sand.u32 %s39, 1
        %s431 = scalar_lea.sflag [#allocation3], %s430
        %s432 = sand.u32 %s39, 1
        %s433 = smul.addr %s432, 32
        %s434 = scalar_lea.vmem [#allocation2], %s433
        // Predicated region
        $region69: #{tpu_custom_call.1} parent=67 // pred_check
          %p435 = pneg %p52
        $region70: #{tpu_custom_call.1} parent=67 // pred_check_branch
          %437 = sbr.rel (%p435) target = $region72
        $region71: #{tpu_custom_call.1} parent=67 // pred_region
          %438 = dma.done %s431, 512
        $region72: #{tpu_custom_call.1} parent=67 // pred_fallthru
          _
        // Predicated region
        $region73: #{tpu_custom_call.1} parent=67 // pred_check
          %p439 = pneg %p115
        $region74: #{tpu_custom_call.1} parent=67 // pred_check_branch
          %441 = sbr.rel (%p439) target = $region76
        $region75: #{tpu_custom_call.1} parent=67 // pred_region
          %442 = dma.done [#allocation6], 3072
        $region76: #{tpu_custom_call.1} parent=67 // pred_fallthru
          _
        // Predicated region
        $region77: #{tpu_custom_call.1} parent=67 // pred_check
          %p443 = pneg %p136
        $region78: #{tpu_custom_call.1} parent=67 // pred_check_branch
          %445 = sbr.rel (%p443) target = $region80
        $region79: #{tpu_custom_call.1} parent=67 // pred_region
          %446 = dma.done [#allocation6], 1024
        $region80: #{tpu_custom_call.1} parent=67 // pred_fallthru
          _
        // Predicated region
        $region81: #{tpu_custom_call.1} parent=67 // pred_check
          %p447 = pneg %p220
        $region82: #{tpu_custom_call.1} parent=67 // pred_check_branch
          %449 = sbr.rel (%p447) target = $region84
        $region83: #{tpu_custom_call.1} parent=67 // pred_region
          %450 = dma.done [#allocation9], 4096
        $region84: #{tpu_custom_call.1} parent=67 // pred_fallthru
          _
        // Predicated region
        $region85: #{tpu_custom_call.1} parent=67 // pred_check
          %p451 = pneg %p262
        $region86: #{tpu_custom_call.1} parent=67 // pred_check_branch
          %453 = sbr.rel (%p451) target = $region88
        $region87: #{tpu_custom_call.1} parent=67 // pred_region
          %454 = dma.done [#allocation9], 4096
        $region88: #{tpu_custom_call.1} parent=67 // pred_fallthru
          _
        %s455 = sand.u32 %s39, 1
        %s456 = scalar_lea.sflag [#allocation3], %s455
        %s457 = sand.u32 %s39, 1
        %s458 = smul.addr %s457, 32
        %s459 = scalar_lea.vmem [#allocation2], %s458
        %p460 = pneg %p52
        %p461 = pneg %p49
        %p462 = pneg %p73
        %p463 = pneg %p70
        %p464 = pneg %p94
        %p465 = pneg %p91
        %p466 = pneg %p115
        %p467 = pneg %p112
        %p468 = pneg %p136
        %p469 = pneg %p133
        %p470 = pneg %p157
        %p471 = pneg %p154
        %p472 = pneg %p178
        %p473 = pneg %p175
        %p474 = pneg %p199
        %p475 = pneg %p196
        %p476 = pneg %p220
        %p477 = pneg %p217
        %p478 = pneg %p241
        %p479 = pneg %p238
        %p480 = pneg %p262
        %p481 = pneg %p259
        %p482 = pneg %p283
        %p483 = pneg %p280
        %p484 = pneg %p309
        %p485 = pneg %p306
        %s486 = sand.u32 %s296, 1
        %s487 = scalar_lea.sflag [#allocation4], %s486
        %s488 = sand.u32 %s296, 1
        %s489 = smul.addr %s488, 32
        %s490 = scalar_lea.vmem [#allocation11], %s489
        %s491 = smul.u32 2, %s31
        %s492 = smul.u32 2, %s31
        %v494 = vld [vmem:[%s434] sm:$0xff]
        %v495 = vld [vmem:[%s434 + $0x8] sm:$0xff]
        %v496 = vld [vmem:[%s434 + $0x10] sm:$0xff]
        %v497 = vld [vmem:[%s434 + $0x18] sm:$0xff]
        %v498 = vld [vmem:[%s1] sm:$0x1]
        %v499 = vld [vmem:[%s2] sm:$0x1]
        %500 = vadd.xlane.f32.xlu0 %v494
        %v501 = vpop.xlane.xlu0 %500
        %502 = vadd.xlane.f32.xlu0 %v495
        %v503 = vpop.xlane.xlu0 %502
        %504 = vadd.xlane.f32.xlu0 %v496
        %v505 = vpop.xlane.xlu0 %504
        %506 = vadd.xlane.f32.xlu0 %v497
        %v507 = vpop.xlane.xlu0 %506
        %v508 = vrcp.pop 128.0
        %v509 = vmul.f32 %v501, %v508
        %v510 = vmul.f32 %v503, %v508
        %v511 = vmul.f32 %v505, %v508
        %v512 = vmul.f32 %v507, %v508
        %v513 = vmul.f32 %v494, %v494
        %v514 = vmul.f32 %v495, %v495
        %v515 = vmul.f32 %v496, %v496
        %v516 = vmul.f32 %v497, %v497
        %517 = vadd.xlane.f32.xlu0 %v513
        %v518 = vpop.xlane.xlu0 %517
        %519 = vadd.xlane.f32.xlu0 %v514
        %v520 = vpop.xlane.xlu0 %519
        %521 = vadd.xlane.f32.xlu0 %v515
        %v522 = vpop.xlane.xlu0 %521
        %523 = vadd.xlane.f32.xlu0 %v516
        %v524 = vpop.xlane.xlu0 %523
        %v525 = vmul.f32 %v518, %v508
        %v526 = vmul.f32 %v520, %v508
        %v527 = vmul.f32 %v522, %v508
        %v528 = vmul.f32 %v524, %v508
        %v529 = vmul.f32 %v509, %v509
        %v530 = vmul.f32 %v510, %v510
        %v531 = vmul.f32 %v511, %v511
        %v532 = vmul.f32 %v512, %v512
        %v533 = vsub.f32 %v525, %v529
        %v534 = vsub.f32 %v526, %v530
        %v535 = vsub.f32 %v527, %v531
        %v536 = vsub.f32 %v528, %v532
        %v537 = vmax.f32 %v533, 0.0
        %v538 = vmax.f32 %v534, 0.0
        %v539 = vmax.f32 %v535, 0.0
        %v540 = vmax.f32 %v536, 0.0
        %v541 = vsub.f32 %v494, %v509
        %v542 = vsub.f32 %v495, %v510
        %v543 = vsub.f32 %v496, %v511
        %v544 = vsub.f32 %v497, %v512
        %v545 = vadd.f32 %v537, 1e-05
        %v546 = vadd.f32 %v538, 1e-05
        %v547 = vadd.f32 %v539, 1e-05
        %v548 = vadd.f32 %v540, 1e-05
        %v549 = vrsqrt.pop %v545
        %v550 = vrsqrt.pop %v546
        %v551 = vrsqrt.pop %v547
        %v552 = vrsqrt.pop %v548
        %v553 = vmul.f32 %v541, %v549
        %v554 = vmul.f32 %v542, %v550
        %v555 = vmul.f32 %v543, %v551
        %v556 = vmul.f32 %v544, %v552
        %v558 = vlaneseq
        %v559 = vshrl.u32 %v558, 7
        %v560 = vsub.s32 0, %v559
        %v561 = vrot.slane %v498, %v560
        %v563 = vmul.f32 %v553, %v561
        %v564 = vmul.f32 %v554, %v561
        %v565 = vmul.f32 %v555, %v561
        %v566 = vmul.f32 %v556, %v561
        %v568 = vlaneseq
        %v569 = vshrl.u32 %v568, 7
        %v570 = vsub.s32 0, %v569
        %v571 = vrot.slane %v499, %v570
        %v573 = vadd.f32 %v563, %v571
        %v574 = vadd.f32 %v564, %v571
        %v575 = vadd.f32 %v565, %v571
        %v576 = vadd.f32 %v566, %v571
        %v577 = vpack.c.bf16 %v574, %v573
        %v578 = vpack.c.bf16 %v576, %v575
        %v579 = vld [vmem:[#allocation5] sm:$0xff]
        %v580 = vld [vmem:[#allocation5 + $0x8] sm:$0xf]
        %v581 = vld [vmem:[#allocation5 + $0xc] sm:$0xff]
        %v582 = vld [vmem:[#allocation5 + $0x14] sm:$0xf]
        %v583 = vld [vmem:[#allocation5 + $0x18] sm:$0xff]
        %v584 = vld [vmem:[#allocation5 + $0x20] sm:$0xf]
        %v585 = vld [vmem:[#allocation5 + $0x24] sm:$0xff]
        %v586 = vld [vmem:[#allocation5 + $0x2c] sm:$0xf]
        %v587 = vld [vmem:[#allocation5 + $0x30] sm:$0xff]
        %v588 = vld [vmem:[#allocation5 + $0x38] sm:$0xf]
        %v589 = vld [vmem:[#allocation5 + $0x3c] sm:$0xff]
        %v590 = vld [vmem:[#allocation5 + $0x44] sm:$0xf]
        %v591 = vld [vmem:[#allocation5 + $0x48] sm:$0xff]
        %v592 = vld [vmem:[#allocation5 + $0x50] sm:$0xf]
        %v593 = vld [vmem:[#allocation5 + $0x54] sm:$0xff]
        %v594 = vld [vmem:[#allocation5 + $0x5c] sm:$0xf]
        %v595 = vld [vmem:[#allocation5 + $0x60] sm:$0xff]
        %v596 = vld [vmem:[#allocation5 + $0x68] sm:$0xf]
        %v597 = vld [vmem:[#allocation5 + $0x6c] sm:$0xff]
        %v598 = vld [vmem:[#allocation5 + $0x74] sm:$0xf]
        %v599 = vld [vmem:[#allocation5 + $0x78] sm:$0xff]
        %v600 = vld [vmem:[#allocation5 + $0x80] sm:$0xf]
        %v601 = vld [vmem:[#allocation5 + $0x84] sm:$0xff]
        %v602 = vld [vmem:[#allocation5 + $0x8c] sm:$0xf]
        %v603 = vld [vmem:[#allocation5 + $0x90] sm:$0xff]
        %v604 = vld [vmem:[#allocation5 + $0x98] sm:$0xf]
        %v605 = vld [vmem:[#allocation5 + $0x9c] sm:$0xff]
        %v606 = vld [vmem:[#allocation5 + $0xa4] sm:$0xf]
        %v607 = vld [vmem:[#allocation5 + $0xa8] sm:$0xff]
        %v608 = vld [vmem:[#allocation5 + $0xb0] sm:$0xf]
        %v609 = vld [vmem:[#allocation5 + $0xb4] sm:$0xff]
        %v610 = vld [vmem:[#allocation5 + $0xbc] sm:$0xf]
        %v643 = vunpack.c.l.b16 %v579
        %v644 = vunpack.c.h.b16 %v579
        %v645 = vunpack.c.l.b16 %v580
        %v646 = vunpack.c.l.b16 %v581
        %v647 = vunpack.c.h.b16 %v581
        %v648 = vunpack.c.l.b16 %v582
        %v649 = vunpack.c.l.b16 %v583
        %v650 = vunpack.c.h.b16 %v583
        %v651 = vunpack.c.l.b16 %v584
        %v652 = vunpack.c.l.b16 %v585
        %v653 = vunpack.c.h.b16 %v585
        %v654 = vunpack.c.l.b16 %v586
        %v655 = vunpack.c.l.b16 %v587
        %v656 = vunpack.c.h.b16 %v587
        %v657 = vunpack.c.l.b16 %v588
        %v658 = vunpack.c.l.b16 %v589
        %v659 = vunpack.c.h.b16 %v589
        %v660 = vunpack.c.l.b16 %v590
        %v661 = vunpack.c.l.b16 %v591
        %v662 = vunpack.c.h.b16 %v591
        %v663 = vunpack.c.l.b16 %v592
        %v664 = vunpack.c.l.b16 %v593
        %v665 = vunpack.c.h.b16 %v593
        %v666 = vunpack.c.l.b16 %v594
        %v667 = vunpack.c.l.b16 %v595
        %v668 = vunpack.c.h.b16 %v595
        %v669 = vunpack.c.l.b16 %v596
        %v670 = vunpack.c.l.b16 %v597
        %v671 = vunpack.c.h.b16 %v597
        %v672 = vunpack.c.l.b16 %v598
        %v673 = vunpack.c.l.b16 %v599
        %v674 = vunpack.c.h.b16 %v599
        %v675 = vunpack.c.l.b16 %v600
        %v676 = vunpack.c.l.b16 %v601
        %v677 = vunpack.c.h.b16 %v601
        %v678 = vunpack.c.l.b16 %v602
        %v679 = vunpack.c.l.b16 %v603
        %v680 = vunpack.c.h.b16 %v603
        %v681 = vunpack.c.l.b16 %v604
        %v682 = vunpack.c.l.b16 %v605
        %v683 = vunpack.c.h.b16 %v605
        %v684 = vunpack.c.l.b16 %v606
        %v685 = vunpack.c.l.b16 %v607
        %v686 = vunpack.c.h.b16 %v607
        %v687 = vunpack.c.l.b16 %v608
        %v688 = vunpack.c.l.b16 %v609
        %v689 = vunpack.c.h.b16 %v609
        %v690 = vunpack.c.l.b16 %v610
        %v691 = vpack.c.b16 %v646, %v643
        %v692 = vpack.c.b16 %v647, %v644
        %v693 = vpack.c.b16 %v648, %v645
        %v694 = vpack.c.b16 %v652, %v649
        %v695 = vpack.c.b16 %v653, %v650
        %v696 = vpack.c.b16 %v654, %v651
        %v697 = vpack.c.b16 %v658, %v655
        %v698 = vpack.c.b16 %v659, %v656
        %v699 = vpack.c.b16 %v660, %v657
        %v700 = vpack.c.b16 %v664, %v661
        %v701 = vpack.c.b16 %v665, %v662
        %v702 = vpack.c.b16 %v666, %v663
        %v703 = vpack.c.b16 %v670, %v667
        %v704 = vpack.c.b16 %v671, %v668
        %v705 = vpack.c.b16 %v672, %v669
        %v706 = vpack.c.b16 %v676, %v673
        %v707 = vpack.c.b16 %v677, %v674
        %v708 = vpack.c.b16 %v678, %v675
        %v709 = vpack.c.b16 %v682, %v679
        %v710 = vpack.c.b16 %v683, %v680
        %v711 = vpack.c.b16 %v684, %v681
        %v712 = vpack.c.b16 %v688, %v685
        %v713 = vpack.c.b16 %v689, %v686
        %v714 = vpack.c.b16 %v690, %v687
        %739 = vmatprep.subr.bf16.mxu0 %v713
        %740 = vmatpush1.bf16.msra.mxu0 %v712
        %741 = vmatprep.subr.bf16.mxu0 %v710
        %742 = vmatpush1.bf16.msra.mxu0 %v709
        %743 = vmatprep.subr.bf16.mxu0 %v707
        %744 = vmatpush1.bf16.msra.mxu0 %v706
        %745 = vmatprep.subr.bf16.mxu0 %v704
        %746 = vmatpush1.bf16.msra.mxu0 %v703
        %747 = vmatprep.subr.bf16.mxu0 %v701
        %748 = vmatpush1.bf16.msra.mxu0 %v700
        %749 = vmatprep.subr.bf16.mxu0 %v698
        %750 = vmatpush1.bf16.msra.mxu0 %v697
        %751 = vmatprep.subr.bf16.mxu0 %v695
        %752 = vmatpush1.bf16.msra.mxu0 %v694
        %753 = vmatprep.subr.bf16.mxu0 %v692
        %754 = vmatpush1.bf16.msra.mxu0 %v691
        %755 = vmatprep.subr.bf16.mxu0 0
        %756 = vmatpush2.bf16.msra.mxu0 0
        %757 = vmatprep.subr.bf16.mxu0 0
        %758 = vmatpush2.bf16.msra.mxu0 0
        %759 = vmatprep.subr.bf16.mxu0 0
        %760 = vmatpush2.bf16.msra.mxu0 0
        %761 = vmatprep.subr.bf16.mxu0 0
        %762 = vmatpush2.bf16.msra.mxu0 0
        %763 = vmatprep.subr.bf16.mxu0 0
        %764 = vmatpush2.bf16.msra.mxu0 0
        %765 = vmatprep.subr.bf16.mxu0 0
        %766 = vmatpush2.bf16.msra.mxu0 0
        %767 = vmatprep.subr.bf16.mxu0 0
        %768 = vmatpush2.bf16.msra.mxu0 0
        %769 = vmatprep.subr.bf16.mxu0 0
        %770 = vmatpush2.bf16.msra.mxu0 0
        %771 = vmatprep.mubr.bf16.mxu0 0
        %772 = vmatmul.mubr.bf16.gmra.mxu0 %v577
        %v773 = vpop.f32.mrf.mxu0
        %v774 = vadd.f32 0.0, %v773
        %v775 = vpop.f32.mrf.mxu0
        %v776 = vadd.f32 0.0, %v775
        %v777 = vpop.f32.mrf.mxu0
        %v778 = vadd.f32 0.0, %v777
        %v779 = vpop.f32.mrf.mxu0
        %v780 = vadd.f32 0.0, %v779
        %781 = vmatprep.mubr.bf16.mxu0 0
        %782 = vmatmul.mubr.bf16.gmra.mxu0 %v578
        %v783 = vpop.f32.mrf.mxu0
        %v784 = vadd.f32 0.0, %v783
        %v785 = vpop.f32.mrf.mxu0
        %v786 = vadd.f32 0.0, %v785
        %v787 = vpop.f32.mrf.mxu0
        %v788 = vadd.f32 0.0, %v787
        %v789 = vpop.f32.mrf.mxu0
        %v790 = vadd.f32 0.0, %v789
        %791 = vdwg.mxu0
        %792 = vmatprep.subr.bf16.mxu0 0
        %793 = vmatpush1.bf16.msra.mxu0 %v714
        %794 = vmatprep.subr.bf16.mxu0 0
        %795 = vmatpush1.bf16.msra.mxu0 %v711
        %796 = vmatprep.subr.bf16.mxu0 0
        %797 = vmatpush1.bf16.msra.mxu0 %v708
        %798 = vmatprep.subr.bf16.mxu0 0
        %799 = vmatpush1.bf16.msra.mxu0 %v705
        %800 = vmatprep.subr.bf16.mxu0 0
        %801 = vmatpush1.bf16.msra.mxu0 %v702
        %802 = vmatprep.subr.bf16.mxu0 0
        %803 = vmatpush1.bf16.msra.mxu0 %v699
        %804 = vmatprep.subr.bf16.mxu0 0
        %805 = vmatpush1.bf16.msra.mxu0 %v696
        %806 = vmatprep.subr.bf16.mxu0 0
        %807 = vmatpush1.bf16.msra.mxu0 %v693
        %808 = vmatprep.subr.bf16.mxu0 0
        %809 = vmatpush2.bf16.msra.mxu0 0
        %810 = vmatprep.subr.bf16.mxu0 0
        %811 = vmatpush2.bf16.msra.mxu0 0
        %812 = vmatprep.subr.bf16.mxu0 0
        %813 = vmatpush2.bf16.msra.mxu0 0
        %814 = vmatprep.subr.bf16.mxu0 0
        %815 = vmatpush2.bf16.msra.mxu0 0
        %816 = vmatprep.subr.bf16.mxu0 0
        %817 = vmatpush2.bf16.msra.mxu0 0
        %818 = vmatprep.subr.bf16.mxu0 0
        %819 = vmatpush2.bf16.msra.mxu0 0
        %820 = vmatprep.subr.bf16.mxu0 0
        %821 = vmatpush2.bf16.msra.mxu0 0
        %822 = vmatprep.subr.bf16.mxu0 0
        %823 = vmatpush2.bf16.msra.mxu0 0
        %824 = vmatprep.mubr.bf16.mxu0 0
        %825 = vmatmul.mubr.bf16.gmra.mxu0 %v577
        %v826 = vpop.f32.mrf.mxu0
        %v827 = vadd.f32 0.0, %v826
        %v828 = vpop.f32.mrf.mxu0
        %v829 = vpop.f32.mrf.mxu0
        %v830 = vadd.f32 0.0, %v829
        %v831 = vpop.f32.mrf.mxu0
        %832 = vmatprep.mubr.bf16.mxu0 0
        %833 = vmatmul.mubr.bf16.gmra.mxu0 %v578
        %v834 = vpop.f32.mrf.mxu0
        %v835 = vadd.f32 0.0, %v834
        %v836 = vpop.f32.mrf.mxu0
        %v837 = vpop.f32.mrf.mxu0
        %v838 = vadd.f32 0.0, %v837
        %v839 = vpop.f32.mrf.mxu0
        %840 = vdwg.mxu0
        %v841 = vpack.c.bf16 %v778, %v774
        %v842 = vpack.c.bf16 %v780, %v776
        %v843 = vpack.c.bf16 %v830, %v827
        %v844 = vpack.c.bf16 %v788, %v784
        %v845 = vpack.c.bf16 %v790, %v786
        %v846 = vpack.c.bf16 %v838, %v835
        %vm847 = vcmask 261120
        %v849 = vsel %vm847, %v841, 0
        %v852 = vsel %vm847, %v842, 0
        %854 = vmatprep.subr.bf16.mxu0 0
        %855 = vmatpush1.bf16.xpose.msra.mxu0 0
        %856 = vmatprep.subr.bf16.mxu0 0
        %857 = vmatpush1.bf16.xpose.msra.mxu0 0
        %858 = vmatprep.subr.bf16.mxu0 0
        %859 = vmatpush1.bf16.xpose.msra.mxu0 0
        %860 = vmatprep.subr.bf16.mxu0 0
        %861 = vmatpush1.bf16.xpose.msra.mxu0 0
        %862 = vmatprep.subr.bf16.mxu0 0
        %863 = vmatpush1.bf16.xpose.msra.mxu0 0
        %864 = vmatprep.subr.bf16.mxu0 0
        %865 = vmatpush1.bf16.xpose.msra.mxu0 0
        %866 = vmatprep.subr.bf16.mxu0 0
        %867 = vmatpush1.bf16.xpose.msra.mxu0 0
        %868 = vmatprep.subr.bf16.mxu0 0
        %869 = vmatpush1.bf16.xpose.msra.mxu0 %v852
        %870 = vmatprep.subr.bf16.mxu0 0
        %871 = vmatpush2.bf16.xpose.msra.mxu0 0
        %872 = vmatprep.subr.bf16.mxu0 0
        %873 = vmatpush2.bf16.xpose.msra.mxu0 0
        %874 = vmatprep.subr.bf16.mxu0 0
        %875 = vmatpush2.bf16.xpose.msra.mxu0 0
        %876 = vmatprep.subr.bf16.mxu0 0
        %877 = vmatpush2.bf16.xpose.msra.mxu0 0
        %878 = vmatprep.subr.bf16.mxu0 0
        %879 = vmatpush2.bf16.xpose.msra.mxu0 0
        %880 = vmatprep.subr.bf16.mxu0 0
        %881 = vmatpush2.bf16.xpose.msra.mxu0 0
        %882 = vmatprep.subr.bf16.mxu0 0
        %883 = vmatpush2.bf16.xpose.msra.mxu0 0
        %884 = vmatprep.subr.bf16.mxu0 0
        %885 = vmatpush2.bf16.xpose.msra.mxu0 0
        %886 = vmatprep.mubr.bf16.mxu0 0
        %887 = vmatmul.mubr.bf16.gmra.mxu0 %v849
        %v888 = vpop.f32.mrf.mxu0
        %v889 = vadd.f32 0.0, %v888
        %v890 = vpop.f32.mrf.mxu0
        %v891 = vpop.f32.mrf.mxu0
        %v892 = vadd.f32 0.0, %v891
        %v893 = vpop.f32.mrf.mxu0
        %894 = vdwg.mxu0
        %v896 = vsel %vm847, %v844, 0
        %v899 = vsel %vm847, %v845, 0
        %901 = vmatprep.subr.bf16.mxu0 0
        %902 = vmatpush1.bf16.xpose.msra.mxu0 0
        %903 = vmatprep.subr.bf16.mxu0 0
        %904 = vmatpush1.bf16.xpose.msra.mxu0 0
        %905 = vmatprep.subr.bf16.mxu0 0
        %906 = vmatpush1.bf16.xpose.msra.mxu0 0
        %907 = vmatprep.subr.bf16.mxu0 0
        %908 = vmatpush1.bf16.xpose.msra.mxu0 0
        %909 = vmatprep.subr.bf16.mxu0 0
        %910 = vmatpush1.bf16.xpose.msra.mxu0 0
        %911 = vmatprep.subr.bf16.mxu0 0
        %912 = vmatpush1.bf16.xpose.msra.mxu0 0
        %913 = vmatprep.subr.bf16.mxu0 0
        %914 = vmatpush1.bf16.xpose.msra.mxu0 0
        %915 = vmatprep.subr.bf16.mxu0 0
        %916 = vmatpush1.bf16.xpose.msra.mxu0 %v899
        %917 = vmatprep.subr.bf16.mxu0 0
        %918 = vmatpush2.bf16.xpose.msra.mxu0 0
        %919 = vmatprep.subr.bf16.mxu0 0
        %920 = vmatpush2.bf16.xpose.msra.mxu0 0
        %921 = vmatprep.subr.bf16.mxu0 0
        %922 = vmatpush2.bf16.xpose.msra.mxu0 0
        %923 = vmatprep.subr.bf16.mxu0 0
        %924 = vmatpush2.bf16.xpose.msra.mxu0 0
        %925 = vmatprep.subr.bf16.mxu0 0
        %926 = vmatpush2.bf16.xpose.msra.mxu0 0
        %927 = vmatprep.subr.bf16.mxu0 0
        %928 = vmatpush2.bf16.xpose.msra.mxu0 0
        %929 = vmatprep.subr.bf16.mxu0 0
        %930 = vmatpush2.bf16.xpose.msra.mxu0 0
        %931 = vmatprep.subr.bf16.mxu0 0
        %932 = vmatpush2.bf16.xpose.msra.mxu0 0
        %933 = vmatprep.mubr.bf16.mxu0 0
        %934 = vmatmul.mubr.bf16.gmra.mxu0 %v896
        %v935 = vpop.f32.mrf.mxu0
        %v936 = vadd.f32 0.0, %v935
        %v937 = vpop.f32.mrf.mxu0
        %v938 = vpop.f32.mrf.mxu0
        %v939 = vadd.f32 0.0, %v938
        %v940 = vpop.f32.mrf.mxu0
        %941 = vdwg.mxu0
        %vm942 = vcmask 130048
        %v943 = vsel %vm942, %v889, -inf
        %944 = vmax.xlane.f32.xlu0 %v943
        %v945 = vpop.xlane.xlu0 %944
        %v946 = vsel %vm942, %v892, -inf
        %947 = vmax.xlane.f32.xlu0 %v946
        %v948 = vpop.xlane.xlu0 %947
        %v949 = vsel %vm942, %v936, -inf
        %950 = vmax.xlane.f32.xlu0 %v949
        %v951 = vpop.xlane.xlu0 %950
        %v952 = vsel %vm942, %v939, -inf
        %953 = vmax.xlane.f32.xlu0 %v952
        %v954 = vpop.xlane.xlu0 %953
        %v955 = vsub.f32 %v889, %v945
        %v956 = vsub.f32 %v892, %v948
        %v957 = vsub.f32 %v936, %v951
        %v958 = vsub.f32 %v939, %v954
        %v959 = vmul.f32 %v955, 1.442695
        %v960 = vpow.pop %v959
        %v961 = vmul.f32 %v956, 1.442695
        %v962 = vpow.pop %v961
        %v963 = vmul.f32 %v957, 1.442695
        %v964 = vpow.pop %v963
        %v965 = vmul.f32 %v958, 1.442695
        %v966 = vpow.pop %v965
        %v967 = vsel %vm942, %v960, 0.0
        %968 = vadd.xlane.f32.xlu0 %v967
        %v969 = vpop.xlane.xlu0 %968
        %v970 = vsel %vm942, %v962, 0.0
        %971 = vadd.xlane.f32.xlu0 %v970
        %v972 = vpop.xlane.xlu0 %971
        %v973 = vsel %vm942, %v964, 0.0
        %974 = vadd.xlane.f32.xlu0 %v973
        %v975 = vpop.xlane.xlu0 %974
        %v976 = vsel %vm942, %v966, 0.0
        %977 = vadd.xlane.f32.xlu0 %v976
        %v978 = vpop.xlane.xlu0 %977
        %v979 = vrcp.pop %v969
        %v980 = vrcp.pop %v972
        %v981 = vrcp.pop %v975
        %v982 = vrcp.pop %v978
        %v983 = vmul.f32 %v960, %v979
        %v984 = vmul.f32 %v962, %v980
        %v985 = vmul.f32 %v964, %v981
        %v986 = vmul.f32 %v966, %v982
        %v987 = vpack.c.bf16 %v984, %v983
        %v988 = vpack.c.bf16 %v986, %v985
        %v990 = vsel %vm942, %v987, 0
        %992 = vmatprep.subr.bf16.mxu0 0
        %993 = vmatpush1.bf16.msra.mxu0 0
        %994 = vmatprep.subr.bf16.mxu0 0
        %995 = vmatpush1.bf16.msra.mxu0 0
        %996 = vmatprep.subr.bf16.mxu0 0
        %997 = vmatpush1.bf16.msra.mxu0 0
        %998 = vmatprep.subr.bf16.mxu0 0
        %999 = vmatpush1.bf16.msra.mxu0 0
        %1000 = vmatprep.subr.bf16.mxu0 0
        %1001 = vmatpush1.bf16.msra.mxu0 0
        %1002 = vmatprep.subr.bf16.mxu0 0
        %1003 = vmatpush1.bf16.msra.mxu0 0
        %1004 = vmatprep.subr.bf16.mxu0 0
        %1005 = vmatpush1.bf16.msra.mxu0 0
        %1006 = vmatprep.subr.bf16.mxu0 0
        %1007 = vmatpush1.bf16.msra.mxu0 %v843
        %1008 = vmatprep.subr.bf16.mxu0 0
        %1009 = vmatpush2.bf16.msra.mxu0 0
        %1010 = vmatprep.subr.bf16.mxu0 0
        %1011 = vmatpush2.bf16.msra.mxu0 0
        %1012 = vmatprep.subr.bf16.mxu0 0
        %1013 = vmatpush2.bf16.msra.mxu0 0
        %1014 = vmatprep.subr.bf16.mxu0 0
        %1015 = vmatpush2.bf16.msra.mxu0 0
        %1016 = vmatprep.subr.bf16.mxu0 0
        %1017 = vmatpush2.bf16.msra.mxu0 0
        %1018 = vmatprep.subr.bf16.mxu0 0
        %1019 = vmatpush2.bf16.msra.mxu0 0
        %1020 = vmatprep.subr.bf16.mxu0 0
        %1021 = vmatpush2.bf16.msra.mxu0 0
        %1022 = vmatprep.subr.bf16.mxu0 0
        %1023 = vmatpush2.bf16.msra.mxu0 0
        %1024 = vmatprep.mubr.bf16.mxu0 0
        %1025 = vmatmul.mubr.bf16.gmra.mxu0 %v990
        %v1026 = vpop.f32.mrf.mxu0
        %v1027 = vadd.f32 0.0, %v1026
        %v1028 = vpop.f32.mrf.mxu0
        %v1029 = vpop.f32.mrf.mxu0
        %v1030 = vadd.f32 0.0, %v1029
        %v1031 = vpop.f32.mrf.mxu0
        %1032 = vdwg.mxu0
        %v1034 = vsel %vm942, %v988, 0
        %1036 = vmatprep.subr.bf16.mxu0 0
        %1037 = vmatpush1.bf16.msra.mxu0 0
        %1038 = vmatprep.subr.bf16.mxu0 0
        %1039 = vmatpush1.bf16.msra.mxu0 0
        %1040 = vmatprep.subr.bf16.mxu0 0
        %1041 = vmatpush1.bf16.msra.mxu0 0
        %1042 = vmatprep.subr.bf16.mxu0 0
        %1043 = vmatpush1.bf16.msra.mxu0 0
        %1044 = vmatprep.subr.bf16.mxu0 0
        %1045 = vmatpush1.bf16.msra.mxu0 0
        %1046 = vmatprep.subr.bf16.mxu0 0
        %1047 = vmatpush1.bf16.msra.mxu0 0
        %1048 = vmatprep.subr.bf16.mxu0 0
        %1049 = vmatpush1.bf16.msra.mxu0 0
        %1050 = vmatprep.subr.bf16.mxu0 0
        %1051 = vmatpush1.bf16.msra.mxu0 %v846
        %1052 = vmatprep.subr.bf16.mxu0 0
        %1053 = vmatpush2.bf16.msra.mxu0 0
        %1054 = vmatprep.subr.bf16.mxu0 0
        %1055 = vmatpush2.bf16.msra.mxu0 0
        %1056 = vmatprep.subr.bf16.mxu0 0
        %1057 = vmatpush2.bf16.msra.mxu0 0
        %1058 = vmatprep.subr.bf16.mxu0 0
        %1059 = vmatpush2.bf16.msra.mxu0 0
        %1060 = vmatprep.subr.bf16.mxu0 0
        %1061 = vmatpush2.bf16.msra.mxu0 0
        %1062 = vmatprep.subr.bf16.mxu0 0
        %1063 = vmatpush2.bf16.msra.mxu0 0
        %1064 = vmatprep.subr.bf16.mxu0 0
        %1065 = vmatpush2.bf16.msra.mxu0 0
        %1066 = vmatprep.subr.bf16.mxu0 0
        %1067 = vmatpush2.bf16.msra.mxu0 0
        %1068 = vmatprep.mubr.bf16.mxu0 0
        %1069 = vmatmul.mubr.bf16.gmra.mxu0 %v1034
        %v1070 = vpop.f32.mrf.mxu0
        %v1071 = vadd.f32 0.0, %v1070
        %v1072 = vpop.f32.mrf.mxu0
        %v1073 = vpop.f32.mrf.mxu0
        %v1074 = vadd.f32 0.0, %v1073
        %v1075 = vpop.f32.mrf.mxu0
        %1076 = vdwg.mxu0
        %v1077 = vpack.c.bf16 %v1030, %v1027
        %v1078 = vpack.c.bf16 %v1074, %v1071
        %v1079 = vld [vmem:[#allocation7] sm:$0xf]
        %v1080 = vld [vmem:[#allocation7 + $0x4] sm:$0xf]
        %v1081 = vld [vmem:[#allocation7 + $0x8] sm:$0xf]
        %v1082 = vld [vmem:[#allocation7 + $0xc] sm:$0xf]
        %1084 = vrot.lane.b32.xlu0 %v841, 96
        %v1085 = vpop.permute.xlu0 %1084
        %1087 = vrot.lane.b32.xlu0 %v842, 96
        %v1088 = vpop.permute.xlu0 %1087
        %v1090 = vsel %vm847, %v1085, 0
        %v1093 = vsel %vm847, %v1088, 0
        %1095 = vmatprep.subr.bf16.mxu0 0
        %1096 = vmatpush1.bf16.xpose.msra.mxu0 0
        %1097 = vmatprep.subr.bf16.mxu0 0
        %1098 = vmatpush1.bf16.xpose.msra.mxu0 0
        %1099 = vmatprep.subr.bf16.mxu0 0
        %1100 = vmatpush1.bf16.xpose.msra.mxu0 0
        %1101 = vmatprep.subr.bf16.mxu0 0
        %1102 = vmatpush1.bf16.xpose.msra.mxu0 0
        %1103 = vmatprep.subr.bf16.mxu0 0
        %1104 = vmatpush1.bf16.xpose.msra.mxu0 0
        %1105 = vmatprep.subr.bf16.mxu0 0
        %1106 = vmatpush1.bf16.xpose.msra.mxu0 0
        %1107 = vmatprep.subr.bf16.mxu0 0
        %1108 = vmatpush1.bf16.xpose.msra.mxu0 0
        %1109 = vmatprep.subr.bf16.mxu0 0
        %1110 = vmatpush1.bf16.xpose.msra.mxu0 %v1093
        %1111 = vmatprep.subr.bf16.mxu0 0
        %1112 = vmatpush2.bf16.xpose.msra.mxu0 0
        %1113 = vmatprep.subr.bf16.mxu0 0
        %1114 = vmatpush2.bf16.xpose.msra.mxu0 0
        %1115 = vmatprep.subr.bf16.mxu0 0
        %1116 = vmatpush2.bf16.xpose.msra.mxu0 0
        %1117 = vmatprep.subr.bf16.mxu0 0
        %1118 = vmatpush2.bf16.xpose.msra.mxu0 0
        %1119 = vmatprep.subr.bf16.mxu0 0
        %1120 = vmatpush2.bf16.xpose.msra.mxu0 0
        %1121 = vmatprep.subr.bf16.mxu0 0
        %1122 = vmatpush2.bf16.xpose.msra.mxu0 0
        %1123 = vmatprep.subr.bf16.mxu0 0
        %1124 = vmatpush2.bf16.xpose.msra.mxu0 0
        %1125 = vmatprep.subr.bf16.mxu0 0
        %1126 = vmatpush2.bf16.xpose.msra.mxu0 0
        %1127 = vmatprep.mubr.bf16.mxu0 0
        %1128 = vmatmul.mubr.bf16.gmra.mxu0 %v1090
        %v1129 = vpop.f32.mrf.mxu0
        %v1130 = vadd.f32 0.0, %v1129
        %v1131 = vpop.f32.mrf.mxu0
        %v1132 = vpop.f32.mrf.mxu0
        %v1133 = vadd.f32 0.0, %v1132
        %v1134 = vpop.f32.mrf.mxu0
        %1135 = vdwg.mxu0
        %1137 = vrot.lane.b32.xlu0 %v844, 96
        %v1138 = vpop.permute.xlu0 %1137
        %1140 = vrot.lane.b32.xlu0 %v845, 96
        %v1141 = vpop.permute.xlu0 %1140
        %v1143 = vsel %vm847, %v1138, 0
        %v1146 = vsel %vm847, %v1141, 0
        %1148 = vmatprep.subr.bf16.mxu0 0
        %1149 = vmatpush1.bf16.xpose.msra.mxu0 0
        %1150 = vmatprep.subr.bf16.mxu0 0
        %1151 = vmatpush1.bf16.xpose.msra.mxu0 0
        %1152 = vmatprep.subr.bf16.mxu0 0
        %1153 = vmatpush1.bf16.xpose.msra.mxu0 0
        %1154 = vmatprep.subr.bf16.mxu0 0
        %1155 = vmatpush1.bf16.xpose.msra.mxu0 0
        %1156 = vmatprep.subr.bf16.mxu0 0
        %1157 = vmatpush1.bf16.xpose.msra.mxu0 0
        %1158 = vmatprep.subr.bf16.mxu0 0
        %1159 = vmatpush1.bf16.xpose.msra.mxu0 0
        %1160 = vmatprep.subr.bf16.mxu0 0
        %1161 = vmatpush1.bf16.xpose.msra.mxu0 0
        %1162 = vmatprep.subr.bf16.mxu0 0
        %1163 = vmatpush1.bf16.xpose.msra.mxu0 %v1146
        %1164 = vmatprep.subr.bf16.mxu0 0
        %1165 = vmatpush2.bf16.xpose.msra.mxu0 0
        %1166 = vmatprep.subr.bf16.mxu0 0
        %1167 = vmatpush2.bf16.xpose.msra.mxu0 0
        %1168 = vmatprep.subr.bf16.mxu0 0
        %1169 = vmatpush2.bf16.xpose.msra.mxu0 0
        %1170 = vmatprep.subr.bf16.mxu0 0
        %1171 = vmatpush2.bf16.xpose.msra.mxu0 0
        %1172 = vmatprep.subr.bf16.mxu0 0
        %1173 = vmatpush2.bf16.xpose.msra.mxu0 0
        %1174 = vmatprep.subr.bf16.mxu0 0
        %1175 = vmatpush2.bf16.xpose.msra.mxu0 0
        %1176 = vmatprep.subr.bf16.mxu0 0
        %1177 = vmatpush2.bf16.xpose.msra.mxu0 0
        %1178 = vmatprep.subr.bf16.mxu0 0
        %1179 = vmatpush2.bf16.xpose.msra.mxu0 0
        %1180 = vmatprep.mubr.bf16.mxu0 0
        %1181 = vmatmul.mubr.bf16.gmra.mxu0 %v1143
        %v1182 = vpop.f32.mrf.mxu0
        %v1183 = vadd.f32 0.0, %v1182
        %v1184 = vpop.f32.mrf.mxu0
        %v1185 = vpop.f32.mrf.mxu0
        %v1186 = vadd.f32 0.0, %v1185
        %v1187 = vpop.f32.mrf.mxu0
        %1188 = vdwg.mxu0
        %v1189 = vsel %vm942, %v1130, -inf
        %1190 = vmax.xlane.f32.xlu0 %v1189
        %v1191 = vpop.xlane.xlu0 %1190
        %v1192 = vsel %vm942, %v1133, -inf
        %1193 = vmax.xlane.f32.xlu0 %v1192
        %v1194 = vpop.xlane.xlu0 %1193
        %v1195 = vsel %vm942, %v1183, -inf
        %1196 = vmax.xlane.f32.xlu0 %v1195
        %v1197 = vpop.xlane.xlu0 %1196
        %v1198 = vsel %vm942, %v1186, -inf
        %1199 = vmax.xlane.f32.xlu0 %v1198
        %v1200 = vpop.xlane.xlu0 %1199
        %v1201 = vsub.f32 %v1130, %v1191
        %v1202 = vsub.f32 %v1133, %v1194
        %v1203 = vsub.f32 %v1183, %v1197
        %v1204 = vsub.f32 %v1186, %v1200
        %v1205 = vmul.f32 %v1201, 1.442695
        %v1206 = vpow.pop %v1205
        %v1207 = vmul.f32 %v1202, 1.442695
        %v1208 = vpow.pop %v1207
        %v1209 = vmul.f32 %v1203, 1.442695
        %v1210 = vpow.pop %v1209
        %v1211 = vmul.f32 %v1204, 1.442695
        %v1212 = vpow.pop %v1211
        %v1213 = vsel %vm942, %v1206, 0.0
        %1214 = vadd.xlane.f32.xlu0 %v1213
        %v1215 = vpop.xlane.xlu0 %1214
        %v1216 = vsel %vm942, %v1208, 0.0
        %1217 = vadd.xlane.f32.xlu0 %v1216
        %v1218 = vpop.xlane.xlu0 %1217
        %v1219 = vsel %vm942, %v1210, 0.0
        %1220 = vadd.xlane.f32.xlu0 %v1219
        %v1221 = vpop.xlane.xlu0 %1220
        %v1222 = vsel %vm942, %v1212, 0.0
        %1223 = vadd.xlane.f32.xlu0 %v1222
        %v1224 = vpop.xlane.xlu0 %1223
        %v1225 = vrcp.pop %v1215
        %v1226 = vrcp.pop %v1218
        %v1227 = vrcp.pop %v1221
        %v1228 = vrcp.pop %v1224
        %v1229 = vmul.f32 %v1206, %v1225
        %v1230 = vmul.f32 %v1208, %v1226
        %v1231 = vmul.f32 %v1210, %v1227
        %v1232 = vmul.f32 %v1212, %v1228
        %v1233 = vpack.c.bf16 %v1230, %v1229
        %v1234 = vpack.c.bf16 %v1232, %v1231
        %1236 = vrot.lane.b32.xlu0 %v843, 96
        %v1237 = vpop.permute.xlu0 %1236
        %v1240 = vsel %vm942, %v1233, 0
        %1242 = vmatprep.subr.bf16.mxu0 0
        %1243 = vmatpush1.bf16.msra.mxu0 0
        %1244 = vmatprep.subr.bf16.mxu0 0
        %1245 = vmatpush1.bf16.msra.mxu0 0
        %1246 = vmatprep.subr.bf16.mxu0 0
        %1247 = vmatpush1.bf16.msra.mxu0 0
        %1248 = vmatprep.subr.bf16.mxu0 0
        %1249 = vmatpush1.bf16.msra.mxu0 0
        %1250 = vmatprep.subr.bf16.mxu0 0
        %1251 = vmatpush1.bf16.msra.mxu0 0
        %1252 = vmatprep.subr.bf16.mxu0 0
        %1253 = vmatpush1.bf16.msra.mxu0 0
        %1254 = vmatprep.subr.bf16.mxu0 0
        %1255 = vmatpush1.bf16.msra.mxu0 0
        %1256 = vmatprep.subr.bf16.mxu0 0
        %1257 = vmatpush1.bf16.msra.mxu0 %v1237
        %1258 = vmatprep.subr.bf16.mxu0 0
        %1259 = vmatpush2.bf16.msra.mxu0 0
        %1260 = vmatprep.subr.bf16.mxu0 0
        %1261 = vmatpush2.bf16.msra.mxu0 0
        %1262 = vmatprep.subr.bf16.mxu0 0
        %1263 = vmatpush2.bf16.msra.mxu0 0
        %1264 = vmatprep.subr.bf16.mxu0 0
        %1265 = vmatpush2.bf16.msra.mxu0 0
        %1266 = vmatprep.subr.bf16.mxu0 0
        %1267 = vmatpush2.bf16.msra.mxu0 0
        %1268 = vmatprep.subr.bf16.mxu0 0
        %1269 = vmatpush2.bf16.msra.mxu0 0
        %1270 = vmatprep.subr.bf16.mxu0 0
        %1271 = vmatpush2.bf16.msra.mxu0 0
        %1272 = vmatprep.subr.bf16.mxu0 0
        %1273 = vmatpush2.bf16.msra.mxu0 0
        %1274 = vmatprep.mubr.bf16.mxu0 0
        %1275 = vmatmul.mubr.bf16.gmra.mxu0 %v1240
        %v1276 = vpop.f32.mrf.mxu0
        %v1277 = vadd.f32 0.0, %v1276
        %v1278 = vpop.f32.mrf.mxu0
        %v1279 = vpop.f32.mrf.mxu0
        %v1280 = vadd.f32 0.0, %v1279
        %v1281 = vpop.f32.mrf.mxu0
        %1282 = vdwg.mxu0
        %1284 = vrot.lane.b32.xlu0 %v846, 96
        %v1285 = vpop.permute.xlu0 %1284
        %v1288 = vsel %vm942, %v1234, 0
        %1290 = vmatprep.subr.bf16.mxu0 0
        %1291 = vmatpush1.bf16.msra.mxu0 0
        %1292 = vmatprep.subr.bf16.mxu0 0
        %1293 = vmatpush1.bf16.msra.mxu0 0
        %1294 = vmatprep.subr.bf16.mxu0 0
        %1295 = vmatpush1.bf16.msra.mxu0 0
        %1296 = vmatprep.subr.bf16.mxu0 0
        %1297 = vmatpush1.bf16.msra.mxu0 0
        %1298 = vmatprep.subr.bf16.mxu0 0
        %1299 = vmatpush1.bf16.msra.mxu0 0
        %1300 = vmatprep.subr.bf16.mxu0 0
        %1301 = vmatpush1.bf16.msra.mxu0 0
        %1302 = vmatprep.subr.bf16.mxu0 0
        %1303 = vmatpush1.bf16.msra.mxu0 0
        %1304 = vmatprep.subr.bf16.mxu0 0
        %1305 = vmatpush1.bf16.msra.mxu0 %v1285
        %1306 = vmatprep.subr.bf16.mxu0 0
        %1307 = vmatpush2.bf16.msra.mxu0 0
        %1308 = vmatprep.subr.bf16.mxu0 0
        %1309 = vmatpush2.bf16.msra.mxu0 0
        %1310 = vmatprep.subr.bf16.mxu0 0
        %1311 = vmatpush2.bf16.msra.mxu0 0
        %1312 = vmatprep.subr.bf16.mxu0 0
        %1313 = vmatpush2.bf16.msra.mxu0 0
        %1314 = vmatprep.subr.bf16.mxu0 0
        %1315 = vmatpush2.bf16.msra.mxu0 0
        %1316 = vmatprep.subr.bf16.mxu0 0
        %1317 = vmatpush2.bf16.msra.mxu0 0
        %1318 = vmatprep.subr.bf16.mxu0 0
        %1319 = vmatpush2.bf16.msra.mxu0 0
        %1320 = vmatprep.subr.bf16.mxu0 0
        %1321 = vmatpush2.bf16.msra.mxu0 0
        %1322 = vmatprep.mubr.bf16.mxu0 0
        %1323 = vmatmul.mubr.bf16.gmra.mxu0 %v1288
        %v1324 = vpop.f32.mrf.mxu0
        %v1325 = vadd.f32 0.0, %v1324
        %v1326 = vpop.f32.mrf.mxu0
        %v1327 = vpop.f32.mrf.mxu0
        %v1328 = vadd.f32 0.0, %v1327
        %v1329 = vpop.f32.mrf.mxu0
        %1330 = vdwg.mxu0
        %v1331 = vpack.c.bf16 %v1280, %v1277
        %v1332 = vpack.c.bf16 %v1328, %v1325
        %v1333 = vld [vmem:[#allocation7 + $0x10] sm:$0xf]
        %v1334 = vld [vmem:[#allocation7 + $0x14] sm:$0xf]
        %v1335 = vld [vmem:[#allocation7 + $0x18] sm:$0xf]
        %v1336 = vld [vmem:[#allocation7 + $0x1c] sm:$0xf]
        %v1341 = vunpack.c.l.b16 %v1333
        %v1342 = vunpack.c.l.b16 %v1334
        %v1343 = vunpack.c.l.b16 %v1335
        %v1344 = vunpack.c.l.b16 %v1336
        %v1345 = vpack.c.b16 %v1342, %v1341
        %v1346 = vpack.c.b16 %v1344, %v1343
        %v1350 = vsel %vm847, %v1331, 0
        %v1353 = vsel %vm847, %v1332, 0
        %1355 = vmatprep.subr.bf16.mxu0 0
        %1356 = vmatpush1.bf16.msra.mxu0 0
        %1357 = vmatprep.subr.bf16.mxu0 0
        %1358 = vmatpush1.bf16.msra.mxu0 0
        %1359 = vmatprep.subr.bf16.mxu0 0
        %1360 = vmatpush1.bf16.msra.mxu0 0
        %1361 = vmatprep.subr.bf16.mxu0 0
        %1362 = vmatpush1.bf16.msra.mxu0 0
        %1363 = vmatprep.subr.bf16.mxu0 0
        %1364 = vmatpush1.bf16.msra.mxu0 0
        %1365 = vmatprep.subr.bf16.mxu0 0
        %1366 = vmatpush1.bf16.msra.mxu0 0
        %1367 = vmatprep.subr.bf16.mxu0 0
        %1368 = vmatpush1.bf16.msra.mxu0 %v1346
        %1369 = vmatprep.subr.bf16.mxu0 0
        %1370 = vmatpush1.bf16.msra.mxu0 %v1345
        %1371 = vmatprep.subr.bf16.mxu0 0
        %1372 = vmatpush2.bf16.msra.mxu0 0
        %1373 = vmatprep.subr.bf16.mxu0 0
        %1374 = vmatpush2.bf16.msra.mxu0 0
        %1375 = vmatprep.subr.bf16.mxu0 0
        %1376 = vmatpush2.bf16.msra.mxu0 0
        %1377 = vmatprep.subr.bf16.mxu0 0
        %1378 = vmatpush2.bf16.msra.mxu0 0
        %1379 = vmatprep.subr.bf16.mxu0 0
        %1380 = vmatpush2.bf16.msra.mxu0 0
        %1381 = vmatprep.subr.bf16.mxu0 0
        %1382 = vmatpush2.bf16.msra.mxu0 0
        %1383 = vmatprep.subr.bf16.mxu0 0
        %1384 = vmatpush2.bf16.msra.mxu0 0
        %1385 = vmatprep.subr.bf16.mxu0 0
        %1386 = vmatpush2.bf16.msra.mxu0 0
        %1387 = vmatprep.mubr.bf16.mxu0 0
        %1388 = vmatmul.mubr.bf16.gmra.mxu0 %v1350
        %v1389 = vpop.f32.mrf.mxu0
        %v1390 = vadd.f32 0.0, %v1389
        %v1391 = vpop.f32.mrf.mxu0
        %v1392 = vpop.f32.mrf.mxu0
        %v1393 = vadd.f32 0.0, %v1392
        %v1394 = vpop.f32.mrf.mxu0
        %1395 = vmatprep.mubr.bf16.mxu0 0
        %1396 = vmatmul.mubr.bf16.gmra.mxu0 %v1353
        %v1397 = vpop.f32.mrf.mxu0
        %v1398 = vadd.f32 0.0, %v1397
        %v1399 = vpop.f32.mrf.mxu0
        %v1400 = vpop.f32.mrf.mxu0
        %v1401 = vadd.f32 0.0, %v1400
        %v1402 = vpop.f32.mrf.mxu0
        %1403 = vdwg.mxu0
        %v1408 = vunpack.c.l.b16 %v1079
        %v1409 = vunpack.c.l.b16 %v1080
        %v1410 = vunpack.c.l.b16 %v1081
        %v1411 = vunpack.c.l.b16 %v1082
        %v1412 = vpack.c.b16 %v1409, %v1408
        %v1413 = vpack.c.b16 %v1411, %v1410
        %v1417 = vsel %vm847, %v1077, 0
        %v1420 = vsel %vm847, %v1078, 0
        %1422 = vmatprep.subr.bf16.mxu0 0
        %1423 = vmatpush1.bf16.msra.mxu0 0
        %1424 = vmatprep.subr.bf16.mxu0 0
        %1425 = vmatpush1.bf16.msra.mxu0 0
        %1426 = vmatprep.subr.bf16.mxu0 0
        %1427 = vmatpush1.bf16.msra.mxu0 0
        %1428 = vmatprep.subr.bf16.mxu0 0
        %1429 = vmatpush1.bf16.msra.mxu0 0
        %1430 = vmatprep.subr.bf16.mxu0 0
        %1431 = vmatpush1.bf16.msra.mxu0 0
        %1432 = vmatprep.subr.bf16.mxu0 0
        %1433 = vmatpush1.bf16.msra.mxu0 0
        %1434 = vmatprep.subr.bf16.mxu0 0
        %1435 = vmatpush1.bf16.msra.mxu0 %v1413
        %1436 = vmatprep.subr.bf16.mxu0 0
        %1437 = vmatpush1.bf16.msra.mxu0 %v1412
        %1438 = vmatprep.subr.bf16.mxu0 0
        %1439 = vmatpush2.bf16.msra.mxu0 0
        %1440 = vmatprep.subr.bf16.mxu0 0
        %1441 = vmatpush2.bf16.msra.mxu0 0
        %1442 = vmatprep.subr.bf16.mxu0 0
        %1443 = vmatpush2.bf16.msra.mxu0 0
        %1444 = vmatprep.subr.bf16.mxu0 0
        %1445 = vmatpush2.bf16.msra.mxu0 0
        %1446 = vmatprep.subr.bf16.mxu0 0
        %1447 = vmatpush2.bf16.msra.mxu0 0
        %1448 = vmatprep.subr.bf16.mxu0 0
        %1449 = vmatpush2.bf16.msra.mxu0 0
        %1450 = vmatprep.subr.bf16.mxu0 0
        %1451 = vmatpush2.bf16.msra.mxu0 0
        %1452 = vmatprep.subr.bf16.mxu0 0
        %1453 = vmatpush2.bf16.msra.mxu0 0
        %1454 = vmatprep.mubr.bf16.mxu0 0
        %1455 = vmatmul.mubr.bf16.gmra.mxu0 %v1417
        %v1456 = vpop.f32.mrf.mxu0
        %v1457 = vadd.f32 %v1390, %v1456
        %v1458 = vpop.f32.mrf.mxu0
        %v1459 = vpop.f32.mrf.mxu0
        %v1460 = vadd.f32 %v1393, %v1459
        %v1461 = vpop.f32.mrf.mxu0
        %1462 = vmatprep.mubr.bf16.mxu0 0
        %1463 = vmatmul.mubr.bf16.gmra.mxu0 %v1420
        %v1464 = vpop.f32.mrf.mxu0
        %v1465 = vadd.f32 %v1398, %v1464
        %v1466 = vpop.f32.mrf.mxu0
        %v1467 = vpop.f32.mrf.mxu0
        %v1468 = vadd.f32 %v1401, %v1467
        %v1469 = vpop.f32.mrf.mxu0
        %1470 = vdwg.mxu0
        %1471 = vrot.lane.b32.xlu0 %v841, 64
        %v1472 = vpop.permute.xlu0 %1471
        %1473 = vrot.lane.b32.xlu0 %v842, 64
        %v1474 = vpop.permute.xlu0 %1473
        %v1476 = vsel %vm847, %v1472, 0
        %v1479 = vsel %vm847, %v1474, 0
        %1481 = vmatprep.subr.bf16.mxu0 0
        %1482 = vmatpush1.bf16.xpose.msra.mxu0 0
        %1483 = vmatprep.subr.bf16.mxu0 0
        %1484 = vmatpush1.bf16.xpose.msra.mxu0 0
        %1485 = vmatprep.subr.bf16.mxu0 0
        %1486 = vmatpush1.bf16.xpose.msra.mxu0 0
        %1487 = vmatprep.subr.bf16.mxu0 0
        %1488 = vmatpush1.bf16.xpose.msra.mxu0 0
        %1489 = vmatprep.subr.bf16.mxu0 0
        %1490 = vmatpush1.bf16.xpose.msra.mxu0 0
        %1491 = vmatprep.subr.bf16.mxu0 0
        %1492 = vmatpush1.bf16.xpose.msra.mxu0 0
        %1493 = vmatprep.subr.bf16.mxu0 0
        %1494 = vmatpush1.bf16.xpose.msra.mxu0 0
        %1495 = vmatprep.subr.bf16.mxu0 0
        %1496 = vmatpush1.bf16.xpose.msra.mxu0 %v1479
        %1497 = vmatprep.subr.bf16.mxu0 0
        %1498 = vmatpush2.bf16.xpose.msra.mxu0 0
        %1499 = vmatprep.subr.bf16.mxu0 0
        %1500 = vmatpush2.bf16.xpose.msra.mxu0 0
        %1501 = vmatprep.subr.bf16.mxu0 0
        %1502 = vmatpush2.bf16.xpose.msra.mxu0 0
        %1503 = vmatprep.subr.bf16.mxu0 0
        %1504 = vmatpush2.bf16.xpose.msra.mxu0 0
        %1505 = vmatprep.subr.bf16.mxu0 0
        %1506 = vmatpush2.bf16.xpose.msra.mxu0 0
        %1507 = vmatprep.subr.bf16.mxu0 0
        %1508 = vmatpush2.bf16.xpose.msra.mxu0 0
        %1509 = vmatprep.subr.bf16.mxu0 0
        %1510 = vmatpush2.bf16.xpose.msra.mxu0 0
        %1511 = vmatprep.subr.bf16.mxu0 0
        %1512 = vmatpush2.bf16.xpose.msra.mxu0 0
        %1513 = vmatprep.mubr.bf16.mxu0 0
        %1514 = vmatmul.mubr.bf16.gmra.mxu0 %v1476
        %v1515 = vpop.f32.mrf.mxu0
        %v1516 = vadd.f32 0.0, %v1515
        %v1517 = vpop.f32.mrf.mxu0
        %v1518 = vpop.f32.mrf.mxu0
        %v1519 = vadd.f32 0.0, %v1518
        %v1520 = vpop.f32.mrf.mxu0
        %1521 = vdwg.mxu0
        %1522 = vrot.lane.b32.xlu0 %v844, 64
        %v1523 = vpop.permute.xlu0 %1522
        %1524 = vrot.lane.b32.xlu0 %v845, 64
        %v1525 = vpop.permute.xlu0 %1524
        %v1527 = vsel %vm847, %v1523, 0
        %v1530 = vsel %vm847, %v1525, 0
        %1532 = vmatprep.subr.bf16.mxu0 0
        %1533 = vmatpush1.bf16.xpose.msra.mxu0 0
        %1534 = vmatprep.subr.bf16.mxu0 0
        %1535 = vmatpush1.bf16.xpose.msra.mxu0 0
        %1536 = vmatprep.subr.bf16.mxu0 0
        %1537 = vmatpush1.bf16.xpose.msra.mxu0 0
        %1538 = vmatprep.subr.bf16.mxu0 0
        %1539 = vmatpush1.bf16.xpose.msra.mxu0 0
        %1540 = vmatprep.subr.bf16.mxu0 0
        %1541 = vmatpush1.bf16.xpose.msra.mxu0 0
        %1542 = vmatprep.subr.bf16.mxu0 0
        %1543 = vmatpush1.bf16.xpose.msra.mxu0 0
        %1544 = vmatprep.subr.bf16.mxu0 0
        %1545 = vmatpush1.bf16.xpose.msra.mxu0 0
        %1546 = vmatprep.subr.bf16.mxu0 0
        %1547 = vmatpush1.bf16.xpose.msra.mxu0 %v1530
        %1548 = vmatprep.subr.bf16.mxu0 0
        %1549 = vmatpush2.bf16.xpose.msra.mxu0 0
        %1550 = vmatprep.subr.bf16.mxu0 0
        %1551 = vmatpush2.bf16.xpose.msra.mxu0 0
        %1552 = vmatprep.subr.bf16.mxu0 0
        %1553 = vmatpush2.bf16.xpose.msra.mxu0 0
        %1554 = vmatprep.subr.bf16.mxu0 0
        %1555 = vmatpush2.bf16.xpose.msra.mxu0 0
        %1556 = vmatprep.subr.bf16.mxu0 0
        %1557 = vmatpush2.bf16.xpose.msra.mxu0 0
        %1558 = vmatprep.subr.bf16.mxu0 0
        %1559 = vmatpush2.bf16.xpose.msra.mxu0 0
        %1560 = vmatprep.subr.bf16.mxu0 0
        %1561 = vmatpush2.bf16.xpose.msra.mxu0 0
        %1562 = vmatprep.subr.bf16.mxu0 0
        %1563 = vmatpush2.bf16.xpose.msra.mxu0 0
        %1564 = vmatprep.mubr.bf16.mxu0 0
        %1565 = vmatmul.mubr.bf16.gmra.mxu0 %v1527
        %v1566 = vpop.f32.mrf.mxu0
        %v1567 = vadd.f32 0.0, %v1566
        %v1568 = vpop.f32.mrf.mxu0
        %v1569 = vpop.f32.mrf.mxu0
        %v1570 = vadd.f32 0.0, %v1569
        %v1571 = vpop.f32.mrf.mxu0
        %1572 = vdwg.mxu0
        %v1573 = vsel %vm942, %v1516, -inf
        %1574 = vmax.xlane.f32.xlu0 %v1573
        %v1575 = vpop.xlane.xlu0 %1574
        %v1576 = vsel %vm942, %v1519, -inf
        %1577 = vmax.xlane.f32.xlu0 %v1576
        %v1578 = vpop.xlane.xlu0 %1577
        %v1579 = vsel %vm942, %v1567, -inf
        %1580 = vmax.xlane.f32.xlu0 %v1579
        %v1581 = vpop.xlane.xlu0 %1580
        %v1582 = vsel %vm942, %v1570, -inf
        %1583 = vmax.xlane.f32.xlu0 %v1582
        %v1584 = vpop.xlane.xlu0 %1583
        %v1585 = vsub.f32 %v1516, %v1575
        %v1586 = vsub.f32 %v1519, %v1578
        %v1587 = vsub.f32 %v1567, %v1581
        %v1588 = vsub.f32 %v1570, %v1584
        %v1589 = vmul.f32 %v1585, 1.442695
        %v1590 = vpow.pop %v1589
        %v1591 = vmul.f32 %v1586, 1.442695
        %v1592 = vpow.pop %v1591
        %v1593 = vmul.f32 %v1587, 1.442695
        %v1594 = vpow.pop %v1593
        %v1595 = vmul.f32 %v1588, 1.442695
        %v1596 = vpow.pop %v1595
        %v1597 = vsel %vm942, %v1590, 0.0
        %1598 = vadd.xlane.f32.xlu0 %v1597
        %v1599 = vpop.xlane.xlu0 %1598
        %v1600 = vsel %vm942, %v1592, 0.0
        %1601 = vadd.xlane.f32.xlu0 %v1600
        %v1602 = vpop.xlane.xlu0 %1601
        %v1603 = vsel %vm942, %v1594, 0.0
        %1604 = vadd.xlane.f32.xlu0 %v1603
        %v1605 = vpop.xlane.xlu0 %1604
        %v1606 = vsel %vm942, %v1596, 0.0
        %1607 = vadd.xlane.f32.xlu0 %v1606
        %v1608 = vpop.xlane.xlu0 %1607
        %v1609 = vrcp.pop %v1599
        %v1610 = vrcp.pop %v1602
        %v1611 = vrcp.pop %v1605
        %v1612 = vrcp.pop %v1608
        %v1613 = vmul.f32 %v1590, %v1609
        %v1614 = vmul.f32 %v1592, %v1610
        %v1615 = vmul.f32 %v1594, %v1611
        %v1616 = vmul.f32 %v1596, %v1612
        %v1617 = vpack.c.bf16 %v1614, %v1613
        %v1618 = vpack.c.bf16 %v1616, %v1615
        %1619 = vrot.lane.b32.xlu0 %v843, 64
        %v1620 = vpop.permute.xlu0 %1619
        %v1623 = vsel %vm942, %v1617, 0
        %1625 = vmatprep.subr.bf16.mxu0 0
        %1626 = vmatpush1.bf16.msra.mxu0 0
        %1627 = vmatprep.subr.bf16.mxu0 0
        %1628 = vmatpush1.bf16.msra.mxu0 0
        %1629 = vmatprep.subr.bf16.mxu0 0
        %1630 = vmatpush1.bf16.msra.mxu0 0
        %1631 = vmatprep.subr.bf16.mxu0 0
        %1632 = vmatpush1.bf16.msra.mxu0 0
        %1633 = vmatprep.subr.bf16.mxu0 0
        %1634 = vmatpush1.bf16.msra.mxu0 0
        %1635 = vmatprep.subr.bf16.mxu0 0
        %1636 = vmatpush1.bf16.msra.mxu0 0
        %1637 = vmatprep.subr.bf16.mxu0 0
        %1638 = vmatpush1.bf16.msra.mxu0 0
        %1639 = vmatprep.subr.bf16.mxu0 0
        %1640 = vmatpush1.bf16.msra.mxu0 %v1620
        %1641 = vmatprep.subr.bf16.mxu0 0
        %1642 = vmatpush2.bf16.msra.mxu0 0
        %1643 = vmatprep.subr.bf16.mxu0 0
        %1644 = vmatpush2.bf16.msra.mxu0 0
        %1645 = vmatprep.subr.bf16.mxu0 0
        %1646 = vmatpush2.bf16.msra.mxu0 0
        %1647 = vmatprep.subr.bf16.mxu0 0
        %1648 = vmatpush2.bf16.msra.mxu0 0
        %1649 = vmatprep.subr.bf16.mxu0 0
        %1650 = vmatpush2.bf16.msra.mxu0 0
        %1651 = vmatprep.subr.bf16.mxu0 0
        %1652 = vmatpush2.bf16.msra.mxu0 0
        %1653 = vmatprep.subr.bf16.mxu0 0
        %1654 = vmatpush2.bf16.msra.mxu0 0
        %1655 = vmatprep.subr.bf16.mxu0 0
        %1656 = vmatpush2.bf16.msra.mxu0 0
        %1657 = vmatprep.mubr.bf16.mxu0 0
        %1658 = vmatmul.mubr.bf16.gmra.mxu0 %v1623
        %v1659 = vpop.f32.mrf.mxu0
        %v1660 = vadd.f32 0.0, %v1659
        %v1661 = vpop.f32.mrf.mxu0
        %v1662 = vpop.f32.mrf.mxu0
        %v1663 = vadd.f32 0.0, %v1662
        %v1664 = vpop.f32.mrf.mxu0
        %1665 = vdwg.mxu0
        %1666 = vrot.lane.b32.xlu0 %v846, 64
        %v1667 = vpop.permute.xlu0 %1666
        %v1670 = vsel %vm942, %v1618, 0
        %1672 = vmatprep.subr.bf16.mxu0 0
        %1673 = vmatpush1.bf16.msra.mxu0 0
        %1674 = vmatprep.subr.bf16.mxu0 0
        %1675 = vmatpush1.bf16.msra.mxu0 0
        %1676 = vmatprep.subr.bf16.mxu0 0
        %1677 = vmatpush1.bf16.msra.mxu0 0
        %1678 = vmatprep.subr.bf16.mxu0 0
        %1679 = vmatpush1.bf16.msra.mxu0 0
        %1680 = vmatprep.subr.bf16.mxu0 0
        %1681 = vmatpush1.bf16.msra.mxu0 0
        %1682 = vmatprep.subr.bf16.mxu0 0
        %1683 = vmatpush1.bf16.msra.mxu0 0
        %1684 = vmatprep.subr.bf16.mxu0 0
        %1685 = vmatpush1.bf16.msra.mxu0 0
        %1686 = vmatprep.subr.bf16.mxu0 0
        %1687 = vmatpush1.bf16.msra.mxu0 %v1667
        %1688 = vmatprep.subr.bf16.mxu0 0
        %1689 = vmatpush2.bf16.msra.mxu0 0
        %1690 = vmatprep.subr.bf16.mxu0 0
        %1691 = vmatpush2.bf16.msra.mxu0 0
        %1692 = vmatprep.subr.bf16.mxu0 0
        %1693 = vmatpush2.bf16.msra.mxu0 0
        %1694 = vmatprep.subr.bf16.mxu0 0
        %1695 = vmatpush2.bf16.msra.mxu0 0
        %1696 = vmatprep.subr.bf16.mxu0 0
        %1697 = vmatpush2.bf16.msra.mxu0 0
        %1698 = vmatprep.subr.bf16.mxu0 0
        %1699 = vmatpush2.bf16.msra.mxu0 0
        %1700 = vmatprep.subr.bf16.mxu0 0
        %1701 = vmatpush2.bf16.msra.mxu0 0
        %1702 = vmatprep.subr.bf16.mxu0 0
        %1703 = vmatpush2.bf16.msra.mxu0 0
        %1704 = vmatprep.mubr.bf16.mxu0 0
        %1705 = vmatmul.mubr.bf16.gmra.mxu0 %v1670
        %v1706 = vpop.f32.mrf.mxu0
        %v1707 = vadd.f32 0.0, %v1706
        %v1708 = vpop.f32.mrf.mxu0
        %v1709 = vpop.f32.mrf.mxu0
        %v1710 = vadd.f32 0.0, %v1709
        %v1711 = vpop.f32.mrf.mxu0
        %1712 = vdwg.mxu0
        %v1713 = vpack.c.bf16 %v1663, %v1660
        %v1714 = vpack.c.bf16 %v1710, %v1707
        %v1715 = vld [vmem:[#allocation7 + $0x20] sm:$0xf]
        %v1716 = vld [vmem:[#allocation7 + $0x24] sm:$0xf]
        %v1717 = vld [vmem:[#allocation7 + $0x28] sm:$0xf]
        %v1718 = vld [vmem:[#allocation7 + $0x2c] sm:$0xf]
        %v1723 = vunpack.c.l.b16 %v1715
        %v1724 = vunpack.c.l.b16 %v1716
        %v1725 = vunpack.c.l.b16 %v1717
        %v1726 = vunpack.c.l.b16 %v1718
        %v1727 = vpack.c.b16 %v1724, %v1723
        %v1728 = vpack.c.b16 %v1726, %v1725
        %v1732 = vsel %vm847, %v1713, 0
        %v1735 = vsel %vm847, %v1714, 0
        %1737 = vmatprep.subr.bf16.mxu0 0
        %1738 = vmatpush1.bf16.msra.mxu0 0
        %1739 = vmatprep.subr.bf16.mxu0 0
        %1740 = vmatpush1.bf16.msra.mxu0 0
        %1741 = vmatprep.subr.bf16.mxu0 0
        %1742 = vmatpush1.bf16.msra.mxu0 0
        %1743 = vmatprep.subr.bf16.mxu0 0
        %1744 = vmatpush1.bf16.msra.mxu0 0
        %1745 = vmatprep.subr.bf16.mxu0 0
        %1746 = vmatpush1.bf16.msra.mxu0 0
        %1747 = vmatprep.subr.bf16.mxu0 0
        %1748 = vmatpush1.bf16.msra.mxu0 0
        %1749 = vmatprep.subr.bf16.mxu0 0
        %1750 = vmatpush1.bf16.msra.mxu0 %v1728
        %1751 = vmatprep.subr.bf16.mxu0 0
        %1752 = vmatpush1.bf16.msra.mxu0 %v1727
        %1753 = vmatprep.subr.bf16.mxu0 0
        %1754 = vmatpush2.bf16.msra.mxu0 0
        %1755 = vmatprep.subr.bf16.mxu0 0
        %1756 = vmatpush2.bf16.msra.mxu0 0
        %1757 = vmatprep.subr.bf16.mxu0 0
        %1758 = vmatpush2.bf16.msra.mxu0 0
        %1759 = vmatprep.subr.bf16.mxu0 0
        %1760 = vmatpush2.bf16.msra.mxu0 0
        %1761 = vmatprep.subr.bf16.mxu0 0
        %1762 = vmatpush2.bf16.msra.mxu0 0
        %1763 = vmatprep.subr.bf16.mxu0 0
        %1764 = vmatpush2.bf16.msra.mxu0 0
        %1765 = vmatprep.subr.bf16.mxu0 0
        %1766 = vmatpush2.bf16.msra.mxu0 0
        %1767 = vmatprep.subr.bf16.mxu0 0
        %1768 = vmatpush2.bf16.msra.mxu0 0
        %1769 = vmatprep.mubr.bf16.mxu0 0
        %1770 = vmatmul.mubr.bf16.gmra.mxu0 %v1732
        %v1771 = vpop.f32.mrf.mxu0
        %v1772 = vadd.f32 0.0, %v1771
        %v1773 = vpop.f32.mrf.mxu0
        %v1774 = vpop.f32.mrf.mxu0
        %v1775 = vadd.f32 0.0, %v1774
        %v1776 = vpop.f32.mrf.mxu0
        %1777 = vmatprep.mubr.bf16.mxu0 0
        %1778 = vmatmul.mubr.bf16.gmra.mxu0 %v1735
        %v1779 = vpop.f32.mrf.mxu0
        %v1780 = vadd.f32 0.0, %v1779
        %v1781 = vpop.f32.mrf.mxu0
        %v1782 = vpop.f32.mrf.mxu0
        %v1783 = vadd.f32 0.0, %v1782
        %v1784 = vpop.f32.mrf.mxu0
        %1785 = vdwg.mxu0
        %v1786 = vadd.f32 %v1457, %v1772
        %v1787 = vadd.f32 %v1460, %v1775
        %v1788 = vadd.f32 %v1465, %v1780
        %v1789 = vadd.f32 %v1468, %v1783
        %1790 = vrot.lane.b32.xlu0 %v841, 32
        %v1791 = vpop.permute.xlu0 %1790
        %1792 = vrot.lane.b32.xlu0 %v842, 32
        %v1793 = vpop.permute.xlu0 %1792
        %v1795 = vsel %vm847, %v1791, 0
        %v1798 = vsel %vm847, %v1793, 0
        %1800 = vmatprep.subr.bf16.mxu0 0
        %1801 = vmatpush1.bf16.xpose.msra.mxu0 0
        %1802 = vmatprep.subr.bf16.mxu0 0
        %1803 = vmatpush1.bf16.xpose.msra.mxu0 0
        %1804 = vmatprep.subr.bf16.mxu0 0
        %1805 = vmatpush1.bf16.xpose.msra.mxu0 0
        %1806 = vmatprep.subr.bf16.mxu0 0
        %1807 = vmatpush1.bf16.xpose.msra.mxu0 0
        %1808 = vmatprep.subr.bf16.mxu0 0
        %1809 = vmatpush1.bf16.xpose.msra.mxu0 0
        %1810 = vmatprep.subr.bf16.mxu0 0
        %1811 = vmatpush1.bf16.xpose.msra.mxu0 0
        %1812 = vmatprep.subr.bf16.mxu0 0
        %1813 = vmatpush1.bf16.xpose.msra.mxu0 0
        %1814 = vmatprep.subr.bf16.mxu0 0
        %1815 = vmatpush1.bf16.xpose.msra.mxu0 %v1798
        %1816 = vmatprep.subr.bf16.mxu0 0
        %1817 = vmatpush2.bf16.xpose.msra.mxu0 0
        %1818 = vmatprep.subr.bf16.mxu0 0
        %1819 = vmatpush2.bf16.xpose.msra.mxu0 0
        %1820 = vmatprep.subr.bf16.mxu0 0
        %1821 = vmatpush2.bf16.xpose.msra.mxu0 0
        %1822 = vmatprep.subr.bf16.mxu0 0
        %1823 = vmatpush2.bf16.xpose.msra.mxu0 0
        %1824 = vmatprep.subr.bf16.mxu0 0
        %1825 = vmatpush2.bf16.xpose.msra.mxu0 0
        %1826 = vmatprep.subr.bf16.mxu0 0
        %1827 = vmatpush2.bf16.xpose.msra.mxu0 0
        %1828 = vmatprep.subr.bf16.mxu0 0
        %1829 = vmatpush2.bf16.xpose.msra.mxu0 0
        %1830 = vmatprep.subr.bf16.mxu0 0
        %1831 = vmatpush2.bf16.xpose.msra.mxu0 0
        %1832 = vmatprep.mubr.bf16.mxu0 0
        %1833 = vmatmul.mubr.bf16.gmra.mxu0 %v1795
        %v1834 = vpop.f32.mrf.mxu0
        %v1835 = vadd.f32 0.0, %v1834
        %v1836 = vpop.f32.mrf.mxu0
        %v1837 = vpop.f32.mrf.mxu0
        %v1838 = vadd.f32 0.0, %v1837
        %v1839 = vpop.f32.mrf.mxu0
        %1840 = vdwg.mxu0
        %1841 = vrot.lane.b32.xlu0 %v844, 32
        %v1842 = vpop.permute.xlu0 %1841
        %1843 = vrot.lane.b32.xlu0 %v845, 32
        %v1844 = vpop.permute.xlu0 %1843
        %v1846 = vsel %vm847, %v1842, 0
        %v1849 = vsel %vm847, %v1844, 0
        %1851 = vmatprep.subr.bf16.mxu0 0
        %1852 = vmatpush1.bf16.xpose.msra.mxu0 0
        %1853 = vmatprep.subr.bf16.mxu0 0
        %1854 = vmatpush1.bf16.xpose.msra.mxu0 0
        %1855 = vmatprep.subr.bf16.mxu0 0
        %1856 = vmatpush1.bf16.xpose.msra.mxu0 0
        %1857 = vmatprep.subr.bf16.mxu0 0
        %1858 = vmatpush1.bf16.xpose.msra.mxu0 0
        %1859 = vmatprep.subr.bf16.mxu0 0
        %1860 = vmatpush1.bf16.xpose.msra.mxu0 0
        %1861 = vmatprep.subr.bf16.mxu0 0
        %1862 = vmatpush1.bf16.xpose.msra.mxu0 0
        %1863 = vmatprep.subr.bf16.mxu0 0
        %1864 = vmatpush1.bf16.xpose.msra.mxu0 0
        %1865 = vmatprep.subr.bf16.mxu0 0
        %1866 = vmatpush1.bf16.xpose.msra.mxu0 %v1849
        %1867 = vmatprep.subr.bf16.mxu0 0
        %1868 = vmatpush2.bf16.xpose.msra.mxu0 0
        %1869 = vmatprep.subr.bf16.mxu0 0
        %1870 = vmatpush2.bf16.xpose.msra.mxu0 0
        %1871 = vmatprep.subr.bf16.mxu0 0
        %1872 = vmatpush2.bf16.xpose.msra.mxu0 0
        %1873 = vmatprep.subr.bf16.mxu0 0
        %1874 = vmatpush2.bf16.xpose.msra.mxu0 0
        %1875 = vmatprep.subr.bf16.mxu0 0
        %1876 = vmatpush2.bf16.xpose.msra.mxu0 0
        %1877 = vmatprep.subr.bf16.mxu0 0
        %1878 = vmatpush2.bf16.xpose.msra.mxu0 0
        %1879 = vmatprep.subr.bf16.mxu0 0
        %1880 = vmatpush2.bf16.xpose.msra.mxu0 0
        %1881 = vmatprep.subr.bf16.mxu0 0
        %1882 = vmatpush2.bf16.xpose.msra.mxu0 0
        %1883 = vmatprep.mubr.bf16.mxu0 0
        %1884 = vmatmul.mubr.bf16.gmra.mxu0 %v1846
        %v1885 = vpop.f32.mrf.mxu0
        %v1886 = vadd.f32 0.0, %v1885
        %v1887 = vpop.f32.mrf.mxu0
        %v1888 = vpop.f32.mrf.mxu0
        %v1889 = vadd.f32 0.0, %v1888
        %v1890 = vpop.f32.mrf.mxu0
        %1891 = vdwg.mxu0
        %v1892 = vsel %vm942, %v1835, -inf
        %1893 = vmax.xlane.f32.xlu0 %v1892
        %v1894 = vpop.xlane.xlu0 %1893
        %v1895 = vsel %vm942, %v1838, -inf
        %1896 = vmax.xlane.f32.xlu0 %v1895
        %v1897 = vpop.xlane.xlu0 %1896
        %v1898 = vsel %vm942, %v1886, -inf
        %1899 = vmax.xlane.f32.xlu0 %v1898
        %v1900 = vpop.xlane.xlu0 %1899
        %v1901 = vsel %vm942, %v1889, -inf
        %1902 = vmax.xlane.f32.xlu0 %v1901
        %v1903 = vpop.xlane.xlu0 %1902
        %v1904 = vsub.f32 %v1835, %v1894
        %v1905 = vsub.f32 %v1838, %v1897
        %v1906 = vsub.f32 %v1886, %v1900
        %v1907 = vsub.f32 %v1889, %v1903
        %v1908 = vmul.f32 %v1904, 1.442695
        %v1909 = vpow.pop %v1908
        %v1910 = vmul.f32 %v1905, 1.442695
        %v1911 = vpow.pop %v1910
        %v1912 = vmul.f32 %v1906, 1.442695
        %v1913 = vpow.pop %v1912
        %v1914 = vmul.f32 %v1907, 1.442695
        %v1915 = vpow.pop %v1914
        %v1916 = vsel %vm942, %v1909, 0.0
        %1917 = vadd.xlane.f32.xlu0 %v1916
        %v1918 = vpop.xlane.xlu0 %1917
        %v1919 = vsel %vm942, %v1911, 0.0
        %1920 = vadd.xlane.f32.xlu0 %v1919
        %v1921 = vpop.xlane.xlu0 %1920
        %v1922 = vsel %vm942, %v1913, 0.0
        %1923 = vadd.xlane.f32.xlu0 %v1922
        %v1924 = vpop.xlane.xlu0 %1923
        %v1925 = vsel %vm942, %v1915, 0.0
        %1926 = vadd.xlane.f32.xlu0 %v1925
        %v1927 = vpop.xlane.xlu0 %1926
        %v1928 = vrcp.pop %v1918
        %v1929 = vrcp.pop %v1921
        %v1930 = vrcp.pop %v1924
        %v1931 = vrcp.pop %v1927
        %v1932 = vmul.f32 %v1909, %v1928
        %v1933 = vmul.f32 %v1911, %v1929
        %v1934 = vmul.f32 %v1913, %v1930
        %v1935 = vmul.f32 %v1915, %v1931
        %v1936 = vpack.c.bf16 %v1933, %v1932
        %v1937 = vpack.c.bf16 %v1935, %v1934
        %1938 = vrot.lane.b32.xlu0 %v843, 32
        %v1939 = vpop.permute.xlu0 %1938
        %v1942 = vsel %vm942, %v1936, 0
        %1944 = vmatprep.subr.bf16.mxu0 0
        %1945 = vmatpush1.bf16.msra.mxu0 0
        %1946 = vmatprep.subr.bf16.mxu0 0
        %1947 = vmatpush1.bf16.msra.mxu0 0
        %1948 = vmatprep.subr.bf16.mxu0 0
        %1949 = vmatpush1.bf16.msra.mxu0 0
        %1950 = vmatprep.subr.bf16.mxu0 0
        %1951 = vmatpush1.bf16.msra.mxu0 0
        %1952 = vmatprep.subr.bf16.mxu0 0
        %1953 = vmatpush1.bf16.msra.mxu0 0
        %1954 = vmatprep.subr.bf16.mxu0 0
        %1955 = vmatpush1.bf16.msra.mxu0 0
        %1956 = vmatprep.subr.bf16.mxu0 0
        %1957 = vmatpush1.bf16.msra.mxu0 0
        %1958 = vmatprep.subr.bf16.mxu0 0
        %1959 = vmatpush1.bf16.msra.mxu0 %v1939
        %1960 = vmatprep.subr.bf16.mxu0 0
        %1961 = vmatpush2.bf16.msra.mxu0 0
        %1962 = vmatprep.subr.bf16.mxu0 0
        %1963 = vmatpush2.bf16.msra.mxu0 0
        %1964 = vmatprep.subr.bf16.mxu0 0
        %1965 = vmatpush2.bf16.msra.mxu0 0
        %1966 = vmatprep.subr.bf16.mxu0 0
        %1967 = vmatpush2.bf16.msra.mxu0 0
        %1968 = vmatprep.subr.bf16.mxu0 0
        %1969 = vmatpush2.bf16.msra.mxu0 0
        %1970 = vmatprep.subr.bf16.mxu0 0
        %1971 = vmatpush2.bf16.msra.mxu0 0
        %1972 = vmatprep.subr.bf16.mxu0 0
        %1973 = vmatpush2.bf16.msra.mxu0 0
        %1974 = vmatprep.subr.bf16.mxu0 0
        %1975 = vmatpush2.bf16.msra.mxu0 0
        %1976 = vmatprep.mubr.bf16.mxu0 0
        %1977 = vmatmul.mubr.bf16.gmra.mxu0 %v1942
        %v1978 = vpop.f32.mrf.mxu0
        %v1979 = vadd.f32 0.0, %v1978
        %v1980 = vpop.f32.mrf.mxu0
        %v1981 = vpop.f32.mrf.mxu0
        %v1982 = vadd.f32 0.0, %v1981
        %v1983 = vpop.f32.mrf.mxu0
        %1984 = vdwg.mxu0
        %1985 = vrot.lane.b32.xlu0 %v846, 32
        %v1986 = vpop.permute.xlu0 %1985
        %v1989 = vsel %vm942, %v1937, 0
        %1991 = vmatprep.subr.bf16.mxu0 0
        %1992 = vmatpush1.bf16.msra.mxu0 0
        %1993 = vmatprep.subr.bf16.mxu0 0
        %1994 = vmatpush1.bf16.msra.mxu0 0
        %1995 = vmatprep.subr.bf16.mxu0 0
        %1996 = vmatpush1.bf16.msra.mxu0 0
        %1997 = vmatprep.subr.bf16.mxu0 0
        %1998 = vmatpush1.bf16.msra.mxu0 0
        %1999 = vmatprep.subr.bf16.mxu0 0
        %2000 = vmatpush1.bf16.msra.mxu0 0
        %2001 = vmatprep.subr.bf16.mxu0 0
        %2002 = vmatpush1.bf16.msra.mxu0 0
        %2003 = vmatprep.subr.bf16.mxu0 0
        %2004 = vmatpush1.bf16.msra.mxu0 0
        %2005 = vmatprep.subr.bf16.mxu0 0
        %2006 = vmatpush1.bf16.msra.mxu0 %v1986
        %2007 = vmatprep.subr.bf16.mxu0 0
        %2008 = vmatpush2.bf16.msra.mxu0 0
        %2009 = vmatprep.subr.bf16.mxu0 0
        %2010 = vmatpush2.bf16.msra.mxu0 0
        %2011 = vmatprep.subr.bf16.mxu0 0
        %2012 = vmatpush2.bf16.msra.mxu0 0
        %2013 = vmatprep.subr.bf16.mxu0 0
        %2014 = vmatpush2.bf16.msra.mxu0 0
        %2015 = vmatprep.subr.bf16.mxu0 0
        %2016 = vmatpush2.bf16.msra.mxu0 0
        %2017 = vmatprep.subr.bf16.mxu0 0
        %2018 = vmatpush2.bf16.msra.mxu0 0
        %2019 = vmatprep.subr.bf16.mxu0 0
        %2020 = vmatpush2.bf16.msra.mxu0 0
        %2021 = vmatprep.subr.bf16.mxu0 0
        %2022 = vmatpush2.bf16.msra.mxu0 0
        %2023 = vmatprep.mubr.bf16.mxu0 0
        %2024 = vmatmul.mubr.bf16.gmra.mxu0 %v1989
        %v2025 = vpop.f32.mrf.mxu0
        %v2026 = vadd.f32 0.0, %v2025
        %v2027 = vpop.f32.mrf.mxu0
        %v2028 = vpop.f32.mrf.mxu0
        %v2029 = vadd.f32 0.0, %v2028
        %v2030 = vpop.f32.mrf.mxu0
        %2031 = vdwg.mxu0
        %v2032 = vpack.c.bf16 %v1982, %v1979
        %v2033 = vpack.c.bf16 %v2029, %v2026
        %v2034 = vld [vmem:[#allocation7 + $0x30] sm:$0xf]
        %v2035 = vld [vmem:[#allocation7 + $0x34] sm:$0xf]
        %v2036 = vld [vmem:[#allocation7 + $0x38] sm:$0xf]
        %v2037 = vld [vmem:[#allocation7 + $0x3c] sm:$0xf]
        %v2042 = vunpack.c.l.b16 %v2034
        %v2043 = vunpack.c.l.b16 %v2035
        %v2044 = vunpack.c.l.b16 %v2036
        %v2045 = vunpack.c.l.b16 %v2037
        %v2046 = vpack.c.b16 %v2043, %v2042
        %v2047 = vpack.c.b16 %v2045, %v2044
        %v2051 = vsel %vm847, %v2032, 0
        %v2054 = vsel %vm847, %v2033, 0
        %2056 = vmatprep.subr.bf16.mxu0 0
        %2057 = vmatpush1.bf16.msra.mxu0 0
        %2058 = vmatprep.subr.bf16.mxu0 0
        %2059 = vmatpush1.bf16.msra.mxu0 0
        %2060 = vmatprep.subr.bf16.mxu0 0
        %2061 = vmatpush1.bf16.msra.mxu0 0
        %2062 = vmatprep.subr.bf16.mxu0 0
        %2063 = vmatpush1.bf16.msra.mxu0 0
        %2064 = vmatprep.subr.bf16.mxu0 0
        %2065 = vmatpush1.bf16.msra.mxu0 0
        %2066 = vmatprep.subr.bf16.mxu0 0
        %2067 = vmatpush1.bf16.msra.mxu0 0
        %2068 = vmatprep.subr.bf16.mxu0 0
        %2069 = vmatpush1.bf16.msra.mxu0 %v2047
        %2070 = vmatprep.subr.bf16.mxu0 0
        %2071 = vmatpush1.bf16.msra.mxu0 %v2046
        %2072 = vmatprep.subr.bf16.mxu0 0
        %2073 = vmatpush2.bf16.msra.mxu0 0
        %2074 = vmatprep.subr.bf16.mxu0 0
        %2075 = vmatpush2.bf16.msra.mxu0 0
        %2076 = vmatprep.subr.bf16.mxu0 0
        %2077 = vmatpush2.bf16.msra.mxu0 0
        %2078 = vmatprep.subr.bf16.mxu0 0
        %2079 = vmatpush2.bf16.msra.mxu0 0
        %2080 = vmatprep.subr.bf16.mxu0 0
        %2081 = vmatpush2.bf16.msra.mxu0 0
        %2082 = vmatprep.subr.bf16.mxu0 0
        %2083 = vmatpush2.bf16.msra.mxu0 0
        %2084 = vmatprep.subr.bf16.mxu0 0
        %2085 = vmatpush2.bf16.msra.mxu0 0
        %2086 = vmatprep.subr.bf16.mxu0 0
        %2087 = vmatpush2.bf16.msra.mxu0 0
        %2088 = vmatprep.mubr.bf16.mxu0 0
        %2089 = vmatmul.mubr.bf16.gmra.mxu0 %v2051
        %v2090 = vpop.f32.mrf.mxu0
        %v2091 = vadd.f32 0.0, %v2090
        %v2092 = vpop.f32.mrf.mxu0
        %v2093 = vpop.f32.mrf.mxu0
        %v2094 = vadd.f32 0.0, %v2093
        %v2095 = vpop.f32.mrf.mxu0
        %2096 = vmatprep.mubr.bf16.mxu0 0
        %2097 = vmatmul.mubr.bf16.gmra.mxu0 %v2054
        %v2098 = vpop.f32.mrf.mxu0
        %v2099 = vadd.f32 0.0, %v2098
        %v2100 = vpop.f32.mrf.mxu0
        %v2101 = vpop.f32.mrf.mxu0
        %v2102 = vadd.f32 0.0, %v2101
        %v2103 = vpop.f32.mrf.mxu0
        %2104 = vdwg.mxu0
        %v2105 = vadd.f32 %v1786, %v2091
        %v2106 = vadd.f32 %v1787, %v2094
        %v2107 = vadd.f32 %v1788, %v2099
        %v2108 = vadd.f32 %v1789, %v2102
        %v2109 = vadd.f32 %v494, %v2105
        %v2110 = vadd.f32 %v495, %v2106
        %v2111 = vadd.f32 %v496, %v2107
        %v2112 = vadd.f32 %v497, %v2108
        %v2113 = vld [vmem:[%s5] sm:$0x1]
        %v2115 = vlaneseq
        %v2116 = vshrl.u32 %v2115, 7
        %v2117 = vsub.s32 0, %v2116
        %v2118 = vrot.slane %v2113, %v2117
        %v2120 = vadd.f32 %v2109, %v2118
        %v2121 = vadd.f32 %v2110, %v2118
        %v2122 = vadd.f32 %v2111, %v2118
        %v2123 = vadd.f32 %v2112, %v2118
        %v2124 = vld [vmem:[%s6] sm:$0x1]
        %v2125 = vld [vmem:[%s7] sm:$0x1]
        %2126 = vadd.xlane.f32.xlu0 %v2120
        %v2127 = vpop.xlane.xlu0 %2126
        %2128 = vadd.xlane.f32.xlu0 %v2121
        %v2129 = vpop.xlane.xlu0 %2128
        %2130 = vadd.xlane.f32.xlu0 %v2122
        %v2131 = vpop.xlane.xlu0 %2130
        %2132 = vadd.xlane.f32.xlu0 %v2123
        %v2133 = vpop.xlane.xlu0 %2132
        %v2134 = vmul.f32 %v2127, %v508
        %v2135 = vmul.f32 %v2129, %v508
        %v2136 = vmul.f32 %v2131, %v508
        %v2137 = vmul.f32 %v2133, %v508
        %v2138 = vmul.f32 %v2120, %v2120
        %v2139 = vmul.f32 %v2121, %v2121
        %v2140 = vmul.f32 %v2122, %v2122
        %v2141 = vmul.f32 %v2123, %v2123
        %2142 = vadd.xlane.f32.xlu0 %v2138
        %v2143 = vpop.xlane.xlu0 %2142
        %2144 = vadd.xlane.f32.xlu0 %v2139
        %v2145 = vpop.xlane.xlu0 %2144
        %2146 = vadd.xlane.f32.xlu0 %v2140
        %v2147 = vpop.xlane.xlu0 %2146
        %2148 = vadd.xlane.f32.xlu0 %v2141
        %v2149 = vpop.xlane.xlu0 %2148
        %v2150 = vmul.f32 %v2143, %v508
        %v2151 = vmul.f32 %v2145, %v508
        %v2152 = vmul.f32 %v2147, %v508
        %v2153 = vmul.f32 %v2149, %v508
        %v2154 = vmul.f32 %v2134, %v2134
        %v2155 = vmul.f32 %v2135, %v2135
        %v2156 = vmul.f32 %v2136, %v2136
        %v2157 = vmul.f32 %v2137, %v2137
        %v2158 = vsub.f32 %v2150, %v2154
        %v2159 = vsub.f32 %v2151, %v2155
        %v2160 = vsub.f32 %v2152, %v2156
        %v2161 = vsub.f32 %v2153, %v2157
        %v2162 = vmax.f32 %v2158, 0.0
        %v2163 = vmax.f32 %v2159, 0.0
        %v2164 = vmax.f32 %v2160, 0.0
        %v2165 = vmax.f32 %v2161, 0.0
        %v2166 = vsub.f32 %v2120, %v2134
        %v2167 = vsub.f32 %v2121, %v2135
        %v2168 = vsub.f32 %v2122, %v2136
        %v2169 = vsub.f32 %v2123, %v2137
        %v2170 = vadd.f32 %v2162, 1e-05
        %v2171 = vadd.f32 %v2163, 1e-05
        %v2172 = vadd.f32 %v2164, 1e-05
        %v2173 = vadd.f32 %v2165, 1e-05
        %v2174 = vrsqrt.pop %v2170
        %v2175 = vrsqrt.pop %v2171
        %v2176 = vrsqrt.pop %v2172
        %v2177 = vrsqrt.pop %v2173
        %v2178 = vmul.f32 %v2166, %v2174
        %v2179 = vmul.f32 %v2167, %v2175
        %v2180 = vmul.f32 %v2168, %v2176
        %v2181 = vmul.f32 %v2169, %v2177
        %v2183 = vlaneseq
        %v2184 = vshrl.u32 %v2183, 7
        %v2185 = vsub.s32 0, %v2184
        %v2186 = vrot.slane %v2124, %v2185
        %v2188 = vmul.f32 %v2178, %v2186
        %v2189 = vmul.f32 %v2179, %v2186
        %v2190 = vmul.f32 %v2180, %v2186
        %v2191 = vmul.f32 %v2181, %v2186
        %v2193 = vlaneseq
        %v2194 = vshrl.u32 %v2193, 7
        %v2195 = vsub.s32 0, %v2194
        %v2196 = vrot.slane %v2125, %v2195
        %v2198 = vadd.f32 %v2188, %v2196
        %v2199 = vadd.f32 %v2189, %v2196
        %v2200 = vadd.f32 %v2190, %v2196
        %v2201 = vadd.f32 %v2191, %v2196
        %v2202 = vpack.c.bf16 %v2199, %v2198
        %v2203 = vpack.c.bf16 %v2201, %v2200
        %v2204 = vld [vmem:[#allocation8] sm:$0xff]
        %v2205 = vld [vmem:[#allocation8 + $0x8] sm:$0xff]
        %v2206 = vld [vmem:[#allocation8 + $0x10] sm:$0xff]
        %v2207 = vld [vmem:[#allocation8 + $0x18] sm:$0xff]
        %v2208 = vld [vmem:[#allocation8 + $0x20] sm:$0xff]
        %v2209 = vld [vmem:[#allocation8 + $0x28] sm:$0xff]
        %v2210 = vld [vmem:[#allocation8 + $0x30] sm:$0xff]
        %v2211 = vld [vmem:[#allocation8 + $0x38] sm:$0xff]
        %v2212 = vld [vmem:[#allocation8 + $0x40] sm:$0xff]
        %v2213 = vld [vmem:[#allocation8 + $0x48] sm:$0xff]
        %v2214 = vld [vmem:[#allocation8 + $0x50] sm:$0xff]
        %v2215 = vld [vmem:[#allocation8 + $0x58] sm:$0xff]
        %v2216 = vld [vmem:[#allocation8 + $0x60] sm:$0xff]
        %v2217 = vld [vmem:[#allocation8 + $0x68] sm:$0xff]
        %v2218 = vld [vmem:[#allocation8 + $0x70] sm:$0xff]
        %v2219 = vld [vmem:[#allocation8 + $0x78] sm:$0xff]
        %v2220 = vld [vmem:[#allocation8 + $0x80] sm:$0xff]
        %v2221 = vld [vmem:[#allocation8 + $0x88] sm:$0xff]
        %v2222 = vld [vmem:[#allocation8 + $0x90] sm:$0xff]
        %v2223 = vld [vmem:[#allocation8 + $0x98] sm:$0xff]
        %v2224 = vld [vmem:[#allocation8 + $0xa0] sm:$0xff]
        %v2225 = vld [vmem:[#allocation8 + $0xa8] sm:$0xff]
        %v2226 = vld [vmem:[#allocation8 + $0xb0] sm:$0xff]
        %v2227 = vld [vmem:[#allocation8 + $0xb8] sm:$0xff]
        %v2228 = vld [vmem:[#allocation8 + $0xc0] sm:$0xff]
        %v2229 = vld [vmem:[#allocation8 + $0xc8] sm:$0xff]
        %v2230 = vld [vmem:[#allocation8 + $0xd0] sm:$0xff]
        %v2231 = vld [vmem:[#allocation8 + $0xd8] sm:$0xff]
        %v2232 = vld [vmem:[#allocation8 + $0xe0] sm:$0xff]
        %v2233 = vld [vmem:[#allocation8 + $0xe8] sm:$0xff]
        %v2234 = vld [vmem:[#allocation8 + $0xf0] sm:$0xff]
        %v2235 = vld [vmem:[#allocation8 + $0xf8] sm:$0xff]
        %v2236 = vld [vmem:[%s9] sm:$0xf]
        %v2238 = vlaneseq
        %v2239 = vshrl.u32 %v2238, 7
        %v2240 = vsub.s32 0, %v2239
        %v2241 = vrot.slane %v2236, %v2240
        %v2242 = vlaneseq
        %v2243 = vshrl.u32 %v2242, 7
        %v2244 = vsub.s32 1, %v2243
        %v2245 = vrot.slane %v2236, %v2244
        %v2246 = vlaneseq
        %v2247 = vshrl.u32 %v2246, 7
        %v2248 = vsub.s32 2, %v2247
        %v2249 = vrot.slane %v2236, %v2248
        %v2250 = vlaneseq
        %v2251 = vshrl.u32 %v2250, 7
        %v2252 = vsub.s32 3, %v2251
        %v2253 = vrot.slane %v2236, %v2252
        %v2290 = vunpack.c.l.b16 %v2204
        %v2291 = vunpack.c.h.b16 %v2204
        %v2292 = vunpack.c.l.b16 %v2205
        %v2293 = vunpack.c.h.b16 %v2205
        %v2294 = vunpack.c.l.b16 %v2206
        %v2295 = vunpack.c.h.b16 %v2206
        %v2296 = vunpack.c.l.b16 %v2207
        %v2297 = vunpack.c.h.b16 %v2207
        %v2298 = vunpack.c.l.b16 %v2208
        %v2299 = vunpack.c.h.b16 %v2208
        %v2300 = vunpack.c.l.b16 %v2209
        %v2301 = vunpack.c.h.b16 %v2209
        %v2302 = vunpack.c.l.b16 %v2210
        %v2303 = vunpack.c.h.b16 %v2210
        %v2304 = vunpack.c.l.b16 %v2211
        %v2305 = vunpack.c.h.b16 %v2211
        %v2306 = vunpack.c.l.b16 %v2212
        %v2307 = vunpack.c.h.b16 %v2212
        %v2308 = vunpack.c.l.b16 %v2213
        %v2309 = vunpack.c.h.b16 %v2213
        %v2310 = vunpack.c.l.b16 %v2214
        %v2311 = vunpack.c.h.b16 %v2214
        %v2312 = vunpack.c.l.b16 %v2215
        %v2313 = vunpack.c.h.b16 %v2215
        %v2314 = vunpack.c.l.b16 %v2216
        %v2315 = vunpack.c.h.b16 %v2216
        %v2316 = vunpack.c.l.b16 %v2217
        %v2317 = vunpack.c.h.b16 %v2217
        %v2318 = vunpack.c.l.b16 %v2218
        %v2319 = vunpack.c.h.b16 %v2218
        %v2320 = vunpack.c.l.b16 %v2219
        %v2321 = vunpack.c.h.b16 %v2219
        %v2322 = vunpack.c.l.b16 %v2220
        %v2323 = vunpack.c.h.b16 %v2220
        %v2324 = vunpack.c.l.b16 %v2221
        %v2325 = vunpack.c.h.b16 %v2221
        %v2326 = vunpack.c.l.b16 %v2222
        %v2327 = vunpack.c.h.b16 %v2222
        %v2328 = vunpack.c.l.b16 %v2223
        %v2329 = vunpack.c.h.b16 %v2223
        %v2330 = vunpack.c.l.b16 %v2224
        %v2331 = vunpack.c.h.b16 %v2224
        %v2332 = vunpack.c.l.b16 %v2225
        %v2333 = vunpack.c.h.b16 %v2225
        %v2334 = vunpack.c.l.b16 %v2226
        %v2335 = vunpack.c.h.b16 %v2226
        %v2336 = vunpack.c.l.b16 %v2227
        %v2337 = vunpack.c.h.b16 %v2227
        %v2338 = vunpack.c.l.b16 %v2228
        %v2339 = vunpack.c.h.b16 %v2228
        %v2340 = vunpack.c.l.b16 %v2229
        %v2341 = vunpack.c.h.b16 %v2229
        %v2342 = vunpack.c.l.b16 %v2230
        %v2343 = vunpack.c.h.b16 %v2230
        %v2344 = vunpack.c.l.b16 %v2231
        %v2345 = vunpack.c.h.b16 %v2231
        %v2346 = vunpack.c.l.b16 %v2232
        %v2347 = vunpack.c.h.b16 %v2232
        %v2348 = vunpack.c.l.b16 %v2233
        %v2349 = vunpack.c.h.b16 %v2233
        %v2350 = vunpack.c.l.b16 %v2234
        %v2351 = vunpack.c.h.b16 %v2234
        %v2352 = vunpack.c.l.b16 %v2235
        %v2353 = vunpack.c.h.b16 %v2235
        %v2354 = vpack.c.b16 %v2294, %v2290
        %v2355 = vpack.c.b16 %v2295, %v2291
        %v2356 = vpack.c.b16 %v2296, %v2292
        %v2357 = vpack.c.b16 %v2297, %v2293
        %v2358 = vpack.c.b16 %v2302, %v2298
        %v2359 = vpack.c.b16 %v2303, %v2299
        %v2360 = vpack.c.b16 %v2304, %v2300
        %v2361 = vpack.c.b16 %v2305, %v2301
        %v2362 = vpack.c.b16 %v2310, %v2306
        %v2363 = vpack.c.b16 %v2311, %v2307
        %v2364 = vpack.c.b16 %v2312, %v2308
        %v2365 = vpack.c.b16 %v2313, %v2309
        %v2366 = vpack.c.b16 %v2318, %v2314
        %v2367 = vpack.c.b16 %v2319, %v2315
        %v2368 = vpack.c.b16 %v2320, %v2316
        %v2369 = vpack.c.b16 %v2321, %v2317
        %v2370 = vpack.c.b16 %v2326, %v2322
        %v2371 = vpack.c.b16 %v2327, %v2323
        %v2372 = vpack.c.b16 %v2328, %v2324
        %v2373 = vpack.c.b16 %v2329, %v2325
        %v2374 = vpack.c.b16 %v2334, %v2330
        %v2375 = vpack.c.b16 %v2335, %v2331
        %v2376 = vpack.c.b16 %v2336, %v2332
        %v2377 = vpack.c.b16 %v2337, %v2333
        %v2378 = vpack.c.b16 %v2342, %v2338
        %v2379 = vpack.c.b16 %v2343, %v2339
        %v2380 = vpack.c.b16 %v2344, %v2340
        %v2381 = vpack.c.b16 %v2345, %v2341
        %v2382 = vpack.c.b16 %v2350, %v2346
        %v2383 = vpack.c.b16 %v2351, %v2347
        %v2384 = vpack.c.b16 %v2352, %v2348
        %v2385 = vpack.c.b16 %v2353, %v2349
        %2418 = vmatprep.subr.bf16.mxu0 %v2383
        %2419 = vmatpush1.bf16.msra.mxu0 %v2382
        %2420 = vmatprep.subr.bf16.mxu0 %v2379
        %2421 = vmatpush1.bf16.msra.mxu0 %v2378
        %2422 = vmatprep.subr.bf16.mxu0 %v2375
        %2423 = vmatpush1.bf16.msra.mxu0 %v2374
        %2424 = vmatprep.subr.bf16.mxu0 %v2371
        %2425 = vmatpush1.bf16.msra.mxu0 %v2370
        %2426 = vmatprep.subr.bf16.mxu0 %v2367
        %2427 = vmatpush1.bf16.msra.mxu0 %v2366
        %2428 = vmatprep.subr.bf16.mxu0 %v2363
        %2429 = vmatpush1.bf16.msra.mxu0 %v2362
        %2430 = vmatprep.subr.bf16.mxu0 %v2359
        %2431 = vmatpush1.bf16.msra.mxu0 %v2358
        %2432 = vmatprep.subr.bf16.mxu0 %v2355
        %2433 = vmatpush1.bf16.msra.mxu0 %v2354
        %2434 = vmatprep.subr.bf16.mxu0 0
        %2435 = vmatpush2.bf16.msra.mxu0 0
        %2436 = vmatprep.subr.bf16.mxu0 0
        %2437 = vmatpush2.bf16.msra.mxu0 0
        %2438 = vmatprep.subr.bf16.mxu0 0
        %2439 = vmatpush2.bf16.msra.mxu0 0
        %2440 = vmatprep.subr.bf16.mxu0 0
        %2441 = vmatpush2.bf16.msra.mxu0 0
        %2442 = vmatprep.subr.bf16.mxu0 0
        %2443 = vmatpush2.bf16.msra.mxu0 0
        %2444 = vmatprep.subr.bf16.mxu0 0
        %2445 = vmatpush2.bf16.msra.mxu0 0
        %2446 = vmatprep.subr.bf16.mxu0 0
        %2447 = vmatpush2.bf16.msra.mxu0 0
        %2448 = vmatprep.subr.bf16.mxu0 0
        %2449 = vmatpush2.bf16.msra.mxu0 0
        %2450 = vmatprep.mubr.bf16.mxu0 0
        %2451 = vmatmul.mubr.bf16.gmra.mxu0 %v2202
        %v2452 = vpop.f32.mrf.mxu0
        %v2453 = vadd.f32 %v2241, %v2452
        %v2454 = vpop.f32.mrf.mxu0
        %v2455 = vadd.f32 %v2245, %v2454
        %v2456 = vpop.f32.mrf.mxu0
        %v2457 = vadd.f32 %v2241, %v2456
        %v2458 = vpop.f32.mrf.mxu0
        %v2459 = vadd.f32 %v2245, %v2458
        %2460 = vmatprep.mubr.bf16.mxu0 0
        %2461 = vmatmul.mubr.bf16.gmra.mxu0 %v2203
        %v2462 = vpop.f32.mrf.mxu0
        %v2463 = vadd.f32 %v2241, %v2462
        %v2464 = vpop.f32.mrf.mxu0
        %v2465 = vadd.f32 %v2245, %v2464
        %v2466 = vpop.f32.mrf.mxu0
        %v2467 = vadd.f32 %v2241, %v2466
        %v2468 = vpop.f32.mrf.mxu0
        %v2469 = vadd.f32 %v2245, %v2468
        %2470 = vdwg.mxu0
        %2471 = vmatprep.subr.bf16.mxu0 %v2385
        %2472 = vmatpush1.bf16.msra.mxu0 %v2384
        %2473 = vmatprep.subr.bf16.mxu0 %v2381
        %2474 = vmatpush1.bf16.msra.mxu0 %v2380
        %2475 = vmatprep.subr.bf16.mxu0 %v2377
        %2476 = vmatpush1.bf16.msra.mxu0 %v2376
        %2477 = vmatprep.subr.bf16.mxu0 %v2373
        %2478 = vmatpush1.bf16.msra.mxu0 %v2372
        %2479 = vmatprep.subr.bf16.mxu0 %v2369
        %2480 = vmatpush1.bf16.msra.mxu0 %v2368
        %2481 = vmatprep.subr.bf16.mxu0 %v2365
        %2482 = vmatpush1.bf16.msra.mxu0 %v2364
        %2483 = vmatprep.subr.bf16.mxu0 %v2361
        %2484 = vmatpush1.bf16.msra.mxu0 %v2360
        %2485 = vmatprep.subr.bf16.mxu0 %v2357
        %2486 = vmatpush1.bf16.msra.mxu0 %v2356
        %2487 = vmatprep.subr.bf16.mxu0 0
        %2488 = vmatpush2.bf16.msra.mxu0 0
        %2489 = vmatprep.subr.bf16.mxu0 0
        %2490 = vmatpush2.bf16.msra.mxu0 0
        %2491 = vmatprep.subr.bf16.mxu0 0
        %2492 = vmatpush2.bf16.msra.mxu0 0
        %2493 = vmatprep.subr.bf16.mxu0 0
        %2494 = vmatpush2.bf16.msra.mxu0 0
        %2495 = vmatprep.subr.bf16.mxu0 0
        %2496 = vmatpush2.bf16.msra.mxu0 0
        %2497 = vmatprep.subr.bf16.mxu0 0
        %2498 = vmatpush2.bf16.msra.mxu0 0
        %2499 = vmatprep.subr.bf16.mxu0 0
        %2500 = vmatpush2.bf16.msra.mxu0 0
        %2501 = vmatprep.subr.bf16.mxu0 0
        %2502 = vmatpush2.bf16.msra.mxu0 0
        %2503 = vmatprep.mubr.bf16.mxu0 0
        %2504 = vmatmul.mubr.bf16.gmra.mxu0 %v2202
        %v2505 = vpop.f32.mrf.mxu0
        %v2506 = vadd.f32 %v2249, %v2505
        %v2507 = vpop.f32.mrf.mxu0
        %v2508 = vadd.f32 %v2253, %v2507
        %v2509 = vpop.f32.mrf.mxu0
        %v2510 = vadd.f32 %v2249, %v2509
        %v2511 = vpop.f32.mrf.mxu0
        %v2512 = vadd.f32 %v2253, %v2511
        %2513 = vmatprep.mubr.bf16.mxu0 0
        %2514 = vmatmul.mubr.bf16.gmra.mxu0 %v2203
        %v2515 = vpop.f32.mrf.mxu0
        %v2516 = vadd.f32 %v2249, %v2515
        %v2517 = vpop.f32.mrf.mxu0
        %v2518 = vadd.f32 %v2253, %v2517
        %v2519 = vpop.f32.mrf.mxu0
        %v2520 = vadd.f32 %v2249, %v2519
        %v2521 = vpop.f32.mrf.mxu0
        %v2522 = vadd.f32 %v2253, %v2521
        %2523 = vdwg.mxu0
        %v2524 = vmul.f32 %v2453, %v2453
        %v2525 = vmul.f32 %v2455, %v2455
        %v2526 = vmul.f32 %v2506, %v2506
        %v2527 = vmul.f32 %v2508, %v2508
        %v2528 = vmul.f32 %v2457, %v2457
        %v2529 = vmul.f32 %v2459, %v2459
        %v2530 = vmul.f32 %v2510, %v2510
        %v2531 = vmul.f32 %v2512, %v2512
        %v2532 = vmul.f32 %v2463, %v2463
        %v2533 = vmul.f32 %v2465, %v2465
        %v2534 = vmul.f32 %v2516, %v2516
        %v2535 = vmul.f32 %v2518, %v2518
        %v2536 = vmul.f32 %v2467, %v2467
        %v2537 = vmul.f32 %v2469, %v2469
        %v2538 = vmul.f32 %v2520, %v2520
        %v2539 = vmul.f32 %v2522, %v2522
        %v2540 = vmul.f32 %v2453, %v2524
        %v2541 = vmul.f32 %v2455, %v2525
        %v2542 = vmul.f32 %v2506, %v2526
        %v2543 = vmul.f32 %v2508, %v2527
        %v2544 = vmul.f32 %v2457, %v2528
        %v2545 = vmul.f32 %v2459, %v2529
        %v2546 = vmul.f32 %v2510, %v2530
        %v2547 = vmul.f32 %v2512, %v2531
        %v2548 = vmul.f32 %v2463, %v2532
        %v2549 = vmul.f32 %v2465, %v2533
        %v2550 = vmul.f32 %v2516, %v2534
        %v2551 = vmul.f32 %v2518, %v2535
        %v2552 = vmul.f32 %v2467, %v2536
        %v2553 = vmul.f32 %v2469, %v2537
        %v2554 = vmul.f32 %v2520, %v2538
        %v2555 = vmul.f32 %v2522, %v2539
        %v2556 = vmul.f32 %v2540, 0.044715
        %v2557 = vmul.f32 %v2541, 0.044715
        %v2558 = vmul.f32 %v2542, 0.044715
        %v2559 = vmul.f32 %v2543, 0.044715
        %v2560 = vmul.f32 %v2544, 0.044715
        %v2561 = vmul.f32 %v2545, 0.044715
        %v2562 = vmul.f32 %v2546, 0.044715
        %v2563 = vmul.f32 %v2547, 0.044715
        %v2564 = vmul.f32 %v2548, 0.044715
        %v2565 = vmul.f32 %v2549, 0.044715
        %v2566 = vmul.f32 %v2550, 0.044715
        %v2567 = vmul.f32 %v2551, 0.044715
        %v2568 = vmul.f32 %v2552, 0.044715
        %v2569 = vmul.f32 %v2553, 0.044715
        %v2570 = vmul.f32 %v2554, 0.044715
        %v2571 = vmul.f32 %v2555, 0.044715
        %v2572 = vadd.f32 %v2453, %v2556
        %v2573 = vadd.f32 %v2455, %v2557
        %v2574 = vadd.f32 %v2506, %v2558
        %v2575 = vadd.f32 %v2508, %v2559
        %v2576 = vadd.f32 %v2457, %v2560
        %v2577 = vadd.f32 %v2459, %v2561
        %v2578 = vadd.f32 %v2510, %v2562
        %v2579 = vadd.f32 %v2512, %v2563
        %v2580 = vadd.f32 %v2463, %v2564
        %v2581 = vadd.f32 %v2465, %v2565
        %v2582 = vadd.f32 %v2516, %v2566
        %v2583 = vadd.f32 %v2518, %v2567
        %v2584 = vadd.f32 %v2467, %v2568
        %v2585 = vadd.f32 %v2469, %v2569
        %v2586 = vadd.f32 %v2520, %v2570
        %v2587 = vadd.f32 %v2522, %v2571
        %v2588 = vmul.f32 %v2572, 0.7978846
        %v2589 = vmul.f32 %v2573, 0.7978846
        %v2590 = vmul.f32 %v2574, 0.7978846
        %v2591 = vmul.f32 %v2575, 0.7978846
        %v2592 = vmul.f32 %v2576, 0.7978846
        %v2593 = vmul.f32 %v2577, 0.7978846
        %v2594 = vmul.f32 %v2578, 0.7978846
        %v2595 = vmul.f32 %v2579, 0.7978846
        %v2596 = vmul.f32 %v2580, 0.7978846
        %v2597 = vmul.f32 %v2581, 0.7978846
        %v2598 = vmul.f32 %v2582, 0.7978846
        %v2599 = vmul.f32 %v2583, 0.7978846
        %v2600 = vmul.f32 %v2584, 0.7978846
        %v2601 = vmul.f32 %v2585, 0.7978846
        %v2602 = vmul.f32 %v2586, 0.7978846
        %v2603 = vmul.f32 %v2587, 0.7978846
        %v2604 = vtanh.pop %v2588
        %v2605 = vtanh.pop %v2589
        %v2606 = vtanh.pop %v2590
        %v2607 = vtanh.pop %v2591
        %v2608 = vtanh.pop %v2592
        %v2609 = vtanh.pop %v2593
        %v2610 = vtanh.pop %v2594
        %v2611 = vtanh.pop %v2595
        %v2612 = vtanh.pop %v2596
        %v2613 = vtanh.pop %v2597
        %v2614 = vtanh.pop %v2598
        %v2615 = vtanh.pop %v2599
        %v2616 = vtanh.pop %v2600
        %v2617 = vtanh.pop %v2601
        %v2618 = vtanh.pop %v2602
        %v2619 = vtanh.pop %v2603
        %v2620 = vadd.f32 %v2604, 1.0
        %v2621 = vadd.f32 %v2605, 1.0
        %v2622 = vadd.f32 %v2606, 1.0
        %v2623 = vadd.f32 %v2607, 1.0
        %v2624 = vadd.f32 %v2608, 1.0
        %v2625 = vadd.f32 %v2609, 1.0
        %v2626 = vadd.f32 %v2610, 1.0
        %v2627 = vadd.f32 %v2611, 1.0
        %v2628 = vadd.f32 %v2612, 1.0
        %v2629 = vadd.f32 %v2613, 1.0
        %v2630 = vadd.f32 %v2614, 1.0
        %v2631 = vadd.f32 %v2615, 1.0
        %v2632 = vadd.f32 %v2616, 1.0
        %v2633 = vadd.f32 %v2617, 1.0
        %v2634 = vadd.f32 %v2618, 1.0
        %v2635 = vadd.f32 %v2619, 1.0
        %v2636 = vmul.f32 %v2620, 0.5
        %v2637 = vmul.f32 %v2621, 0.5
        %v2638 = vmul.f32 %v2622, 0.5
        %v2639 = vmul.f32 %v2623, 0.5
        %v2640 = vmul.f32 %v2624, 0.5
        %v2641 = vmul.f32 %v2625, 0.5
        %v2642 = vmul.f32 %v2626, 0.5
        %v2643 = vmul.f32 %v2627, 0.5
        %v2644 = vmul.f32 %v2628, 0.5
        %v2645 = vmul.f32 %v2629, 0.5
        %v2646 = vmul.f32 %v2630, 0.5
        %v2647 = vmul.f32 %v2631, 0.5
        %v2648 = vmul.f32 %v2632, 0.5
        %v2649 = vmul.f32 %v2633, 0.5
        %v2650 = vmul.f32 %v2634, 0.5
        %v2651 = vmul.f32 %v2635, 0.5
        %v2652 = vmul.f32 %v2453, %v2636
        %v2653 = vmul.f32 %v2455, %v2637
        %v2654 = vmul.f32 %v2506, %v2638
        %v2655 = vmul.f32 %v2508, %v2639
        %v2656 = vmul.f32 %v2457, %v2640
        %v2657 = vmul.f32 %v2459, %v2641
        %v2658 = vmul.f32 %v2510, %v2642
        %v2659 = vmul.f32 %v2512, %v2643
        %v2660 = vmul.f32 %v2463, %v2644
        %v2661 = vmul.f32 %v2465, %v2645
        %v2662 = vmul.f32 %v2516, %v2646
        %v2663 = vmul.f32 %v2518, %v2647
        %v2664 = vmul.f32 %v2467, %v2648
        %v2665 = vmul.f32 %v2469, %v2649
        %v2666 = vmul.f32 %v2520, %v2650
        %v2667 = vmul.f32 %v2522, %v2651
        %v2668 = vpack.c.bf16 %v2656, %v2652
        %v2669 = vpack.c.bf16 %v2657, %v2653
        %v2670 = vpack.c.bf16 %v2658, %v2654
        %v2671 = vpack.c.bf16 %v2659, %v2655
        %v2672 = vpack.c.bf16 %v2664, %v2660
        %v2673 = vpack.c.bf16 %v2665, %v2661
        %v2674 = vpack.c.bf16 %v2666, %v2662
        %v2675 = vpack.c.bf16 %v2667, %v2663
        %v2676 = vld [vmem:[#allocation10] sm:$0xf]
        %v2677 = vld [vmem:[#allocation10 + $0x4] sm:$0xf]
        %v2678 = vld [vmem:[#allocation10 + $0x8] sm:$0xf]
        %v2679 = vld [vmem:[#allocation10 + $0xc] sm:$0xf]
        %v2680 = vld [vmem:[#allocation10 + $0x10] sm:$0xf]
        %v2681 = vld [vmem:[#allocation10 + $0x14] sm:$0xf]
        %v2682 = vld [vmem:[#allocation10 + $0x18] sm:$0xf]
        %v2683 = vld [vmem:[#allocation10 + $0x1c] sm:$0xf]
        %v2684 = vld [vmem:[#allocation10 + $0x20] sm:$0xf]
        %v2685 = vld [vmem:[#allocation10 + $0x24] sm:$0xf]
        %v2686 = vld [vmem:[#allocation10 + $0x28] sm:$0xf]
        %v2687 = vld [vmem:[#allocation10 + $0x2c] sm:$0xf]
        %v2688 = vld [vmem:[#allocation10 + $0x30] sm:$0xf]
        %v2689 = vld [vmem:[#allocation10 + $0x34] sm:$0xf]
        %v2690 = vld [vmem:[#allocation10 + $0x38] sm:$0xf]
        %v2691 = vld [vmem:[#allocation10 + $0x3c] sm:$0xf]
        %v2692 = vld [vmem:[#allocation10 + $0x40] sm:$0xf]
        %v2693 = vld [vmem:[#allocation10 + $0x44] sm:$0xf]
        %v2694 = vld [vmem:[#allocation10 + $0x48] sm:$0xf]
        %v2695 = vld [vmem:[#allocation10 + $0x4c] sm:$0xf]
        %v2696 = vld [vmem:[#allocation10 + $0x50] sm:$0xf]
        %v2697 = vld [vmem:[#allocation10 + $0x54] sm:$0xf]
        %v2698 = vld [vmem:[#allocation10 + $0x58] sm:$0xf]
        %v2699 = vld [vmem:[#allocation10 + $0x5c] sm:$0xf]
        %v2700 = vld [vmem:[#allocation10 + $0x60] sm:$0xf]
        %v2701 = vld [vmem:[#allocation10 + $0x64] sm:$0xf]
        %v2702 = vld [vmem:[#allocation10 + $0x68] sm:$0xf]
        %v2703 = vld [vmem:[#allocation10 + $0x6c] sm:$0xf]
        %v2704 = vld [vmem:[#allocation10 + $0x70] sm:$0xf]
        %v2705 = vld [vmem:[#allocation10 + $0x74] sm:$0xf]
        %v2706 = vld [vmem:[#allocation10 + $0x78] sm:$0xf]
        %v2707 = vld [vmem:[#allocation10 + $0x7c] sm:$0xf]
        %v2708 = vld [vmem:[#allocation10 + $0x80] sm:$0xf]
        %v2709 = vld [vmem:[#allocation10 + $0x84] sm:$0xf]
        %v2710 = vld [vmem:[#allocation10 + $0x88] sm:$0xf]
        %v2711 = vld [vmem:[#allocation10 + $0x8c] sm:$0xf]
        %v2712 = vld [vmem:[#allocation10 + $0x90] sm:$0xf]
        %v2713 = vld [vmem:[#allocation10 + $0x94] sm:$0xf]
        %v2714 = vld [vmem:[#allocation10 + $0x98] sm:$0xf]
        %v2715 = vld [vmem:[#allocation10 + $0x9c] sm:$0xf]
        %v2716 = vld [vmem:[#allocation10 + $0xa0] sm:$0xf]
        %v2717 = vld [vmem:[#allocation10 + $0xa4] sm:$0xf]
        %v2718 = vld [vmem:[#allocation10 + $0xa8] sm:$0xf]
        %v2719 = vld [vmem:[#allocation10 + $0xac] sm:$0xf]
        %v2720 = vld [vmem:[#allocation10 + $0xb0] sm:$0xf]
        %v2721 = vld [vmem:[#allocation10 + $0xb4] sm:$0xf]
        %v2722 = vld [vmem:[#allocation10 + $0xb8] sm:$0xf]
        %v2723 = vld [vmem:[#allocation10 + $0xbc] sm:$0xf]
        %v2724 = vld [vmem:[#allocation10 + $0xc0] sm:$0xf]
        %v2725 = vld [vmem:[#allocation10 + $0xc4] sm:$0xf]
        %v2726 = vld [vmem:[#allocation10 + $0xc8] sm:$0xf]
        %v2727 = vld [vmem:[#allocation10 + $0xcc] sm:$0xf]
        %v2728 = vld [vmem:[#allocation10 + $0xd0] sm:$0xf]
        %v2729 = vld [vmem:[#allocation10 + $0xd4] sm:$0xf]
        %v2730 = vld [vmem:[#allocation10 + $0xd8] sm:$0xf]
        %v2731 = vld [vmem:[#allocation10 + $0xdc] sm:$0xf]
        %v2732 = vld [vmem:[#allocation10 + $0xe0] sm:$0xf]
        %v2733 = vld [vmem:[#allocation10 + $0xe4] sm:$0xf]
        %v2734 = vld [vmem:[#allocation10 + $0xe8] sm:$0xf]
        %v2735 = vld [vmem:[#allocation10 + $0xec] sm:$0xf]
        %v2736 = vld [vmem:[#allocation10 + $0xf0] sm:$0xf]
        %v2737 = vld [vmem:[#allocation10 + $0xf4] sm:$0xf]
        %v2738 = vld [vmem:[#allocation10 + $0xf8] sm:$0xf]
        %v2739 = vld [vmem:[#allocation10 + $0xfc] sm:$0xf]
        %v2740 = vld [vmem:[%s11] sm:$0x1]
        %v2742 = vlaneseq
        %v2743 = vshrl.u32 %v2742, 7
        %v2744 = vsub.s32 0, %v2743
        %v2745 = vrot.slane %v2740, %v2744
        %v2811 = vunpack.c.l.b16 %v2676
        %v2812 = vunpack.c.l.b16 %v2677
        %v2813 = vunpack.c.l.b16 %v2678
        %v2814 = vunpack.c.l.b16 %v2679
        %v2815 = vunpack.c.l.b16 %v2680
        %v2816 = vunpack.c.l.b16 %v2681
        %v2817 = vunpack.c.l.b16 %v2682
        %v2818 = vunpack.c.l.b16 %v2683
        %v2819 = vunpack.c.l.b16 %v2684
        %v2820 = vunpack.c.l.b16 %v2685
        %v2821 = vunpack.c.l.b16 %v2686
        %v2822 = vunpack.c.l.b16 %v2687
        %v2823 = vunpack.c.l.b16 %v2688
        %v2824 = vunpack.c.l.b16 %v2689
        %v2825 = vunpack.c.l.b16 %v2690
        %v2826 = vunpack.c.l.b16 %v2691
        %v2827 = vunpack.c.l.b16 %v2692
        %v2828 = vunpack.c.l.b16 %v2693
        %v2829 = vunpack.c.l.b16 %v2694
        %v2830 = vunpack.c.l.b16 %v2695
        %v2831 = vunpack.c.l.b16 %v2696
        %v2832 = vunpack.c.l.b16 %v2697
        %v2833 = vunpack.c.l.b16 %v2698
        %v2834 = vunpack.c.l.b16 %v2699
        %v2835 = vunpack.c.l.b16 %v2700
        %v2836 = vunpack.c.l.b16 %v2701
        %v2837 = vunpack.c.l.b16 %v2702
        %v2838 = vunpack.c.l.b16 %v2703
        %v2839 = vunpack.c.l.b16 %v2704
        %v2840 = vunpack.c.l.b16 %v2705
        %v2841 = vunpack.c.l.b16 %v2706
        %v2842 = vunpack.c.l.b16 %v2707
        %v2843 = vunpack.c.l.b16 %v2708
        %v2844 = vunpack.c.l.b16 %v2709
        %v2845 = vunpack.c.l.b16 %v2710
        %v2846 = vunpack.c.l.b16 %v2711
        %v2847 = vunpack.c.l.b16 %v2712
        %v2848 = vunpack.c.l.b16 %v2713
        %v2849 = vunpack.c.l.b16 %v2714
        %v2850 = vunpack.c.l.b16 %v2715
        %v2851 = vunpack.c.l.b16 %v2716
        %v2852 = vunpack.c.l.b16 %v2717
        %v2853 = vunpack.c.l.b16 %v2718
        %v2854 = vunpack.c.l.b16 %v2719
        %v2855 = vunpack.c.l.b16 %v2720
        %v2856 = vunpack.c.l.b16 %v2721
        %v2857 = vunpack.c.l.b16 %v2722
        %v2858 = vunpack.c.l.b16 %v2723
        %v2859 = vunpack.c.l.b16 %v2724
        %v2860 = vunpack.c.l.b16 %v2725
        %v2861 = vunpack.c.l.b16 %v2726
        %v2862 = vunpack.c.l.b16 %v2727
        %v2863 = vunpack.c.l.b16 %v2728
        %v2864 = vunpack.c.l.b16 %v2729
        %v2865 = vunpack.c.l.b16 %v2730
        %v2866 = vunpack.c.l.b16 %v2731
        %v2867 = vunpack.c.l.b16 %v2732
        %v2868 = vunpack.c.l.b16 %v2733
        %v2869 = vunpack.c.l.b16 %v2734
        %v2870 = vunpack.c.l.b16 %v2735
        %v2871 = vunpack.c.l.b16 %v2736
        %v2872 = vunpack.c.l.b16 %v2737
        %v2873 = vunpack.c.l.b16 %v2738
        %v2874 = vunpack.c.l.b16 %v2739
        %v2875 = vpack.c.b16 %v2812, %v2811
        %v2876 = vpack.c.b16 %v2814, %v2813
        %v2877 = vpack.c.b16 %v2816, %v2815
        %v2878 = vpack.c.b16 %v2818, %v2817
        %v2879 = vpack.c.b16 %v2820, %v2819
        %v2880 = vpack.c.b16 %v2822, %v2821
        %v2881 = vpack.c.b16 %v2824, %v2823
        %v2882 = vpack.c.b16 %v2826, %v2825
        %v2883 = vpack.c.b16 %v2828, %v2827
        %v2884 = vpack.c.b16 %v2830, %v2829
        %v2885 = vpack.c.b16 %v2832, %v2831
        %v2886 = vpack.c.b16 %v2834, %v2833
        %v2887 = vpack.c.b16 %v2836, %v2835
        %v2888 = vpack.c.b16 %v2838, %v2837
        %v2889 = vpack.c.b16 %v2840, %v2839
        %v2890 = vpack.c.b16 %v2842, %v2841
        %v2891 = vpack.c.b16 %v2844, %v2843
        %v2892 = vpack.c.b16 %v2846, %v2845
        %v2893 = vpack.c.b16 %v2848, %v2847
        %v2894 = vpack.c.b16 %v2850, %v2849
        %v2895 = vpack.c.b16 %v2852, %v2851
        %v2896 = vpack.c.b16 %v2854, %v2853
        %v2897 = vpack.c.b16 %v2856, %v2855
        %v2898 = vpack.c.b16 %v2858, %v2857
        %v2899 = vpack.c.b16 %v2860, %v2859
        %v2900 = vpack.c.b16 %v2862, %v2861
        %v2901 = vpack.c.b16 %v2864, %v2863
        %v2902 = vpack.c.b16 %v2866, %v2865
        %v2903 = vpack.c.b16 %v2868, %v2867
        %v2904 = vpack.c.b16 %v2870, %v2869
        %v2905 = vpack.c.b16 %v2872, %v2871
        %v2906 = vpack.c.b16 %v2874, %v2873
        %2939 = vmatprep.subr.bf16.mxu0 0
        %2940 = vmatpush1.bf16.msra.mxu0 %v2882
        %2941 = vmatprep.subr.bf16.mxu0 0
        %2942 = vmatpush1.bf16.msra.mxu0 %v2881
        %2943 = vmatprep.subr.bf16.mxu0 0
        %2944 = vmatpush1.bf16.msra.mxu0 %v2880
        %2945 = vmatprep.subr.bf16.mxu0 0
        %2946 = vmatpush1.bf16.msra.mxu0 %v2879
        %2947 = vmatprep.subr.bf16.mxu0 0
        %2948 = vmatpush1.bf16.msra.mxu0 %v2878
        %2949 = vmatprep.subr.bf16.mxu0 0
        %2950 = vmatpush1.bf16.msra.mxu0 %v2877
        %2951 = vmatprep.subr.bf16.mxu0 0
        %2952 = vmatpush1.bf16.msra.mxu0 %v2876
        %2953 = vmatprep.subr.bf16.mxu0 0
        %2954 = vmatpush1.bf16.msra.mxu0 %v2875
        %2955 = vmatprep.subr.bf16.mxu0 0
        %2956 = vmatpush2.bf16.msra.mxu0 %v2890
        %2957 = vmatprep.subr.bf16.mxu0 0
        %2958 = vmatpush2.bf16.msra.mxu0 %v2889
        %2959 = vmatprep.subr.bf16.mxu0 0
        %2960 = vmatpush2.bf16.msra.mxu0 %v2888
        %2961 = vmatprep.subr.bf16.mxu0 0
        %2962 = vmatpush2.bf16.msra.mxu0 %v2887
        %2963 = vmatprep.subr.bf16.mxu0 0
        %2964 = vmatpush2.bf16.msra.mxu0 %v2886
        %2965 = vmatprep.subr.bf16.mxu0 0
        %2966 = vmatpush2.bf16.msra.mxu0 %v2885
        %2967 = vmatprep.subr.bf16.mxu0 0
        %2968 = vmatpush2.bf16.msra.mxu0 %v2884
        %2969 = vmatprep.subr.bf16.mxu0 0
        %2970 = vmatpush2.bf16.msra.mxu0 %v2883
        %2971 = vmatprep.mubr.bf16.mxu0 %v2669
        %2972 = vmatmul.mubr.bf16.gmra.mxu0 %v2668
        %v2973 = vpop.f32.mrf.mxu0
        %v2974 = vadd.f32 %v2745, %v2973
        %v2975 = vpop.f32.mrf.mxu0
        %v2976 = vpop.f32.mrf.mxu0
        %v2977 = vadd.f32 %v2745, %v2976
        %v2978 = vpop.f32.mrf.mxu0
        %2979 = vmatprep.mubr.bf16.mxu0 %v2673
        %2980 = vmatmul.mubr.bf16.gmra.mxu0 %v2672
        %v2981 = vpop.f32.mrf.mxu0
        %v2982 = vadd.f32 %v2745, %v2981
        %v2983 = vpop.f32.mrf.mxu0
        %v2984 = vpop.f32.mrf.mxu0
        %v2985 = vadd.f32 %v2745, %v2984
        %v2986 = vpop.f32.mrf.mxu0
        %2987 = vdwg.mxu0
        %2988 = vmatprep.subr.bf16.mxu0 0
        %2989 = vmatpush1.bf16.msra.mxu0 %v2898
        %2990 = vmatprep.subr.bf16.mxu0 0
        %2991 = vmatpush1.bf16.msra.mxu0 %v2897
        %2992 = vmatprep.subr.bf16.mxu0 0
        %2993 = vmatpush1.bf16.msra.mxu0 %v2896
        %2994 = vmatprep.subr.bf16.mxu0 0
        %2995 = vmatpush1.bf16.msra.mxu0 %v2895
        %2996 = vmatprep.subr.bf16.mxu0 0
        %2997 = vmatpush1.bf16.msra.mxu0 %v2894
        %2998 = vmatprep.subr.bf16.mxu0 0
        %2999 = vmatpush1.bf16.msra.mxu0 %v2893
        %3000 = vmatprep.subr.bf16.mxu0 0
        %3001 = vmatpush1.bf16.msra.mxu0 %v2892
        %3002 = vmatprep.subr.bf16.mxu0 0
        %3003 = vmatpush1.bf16.msra.mxu0 %v2891
        %3004 = vmatprep.subr.bf16.mxu0 0
        %3005 = vmatpush2.bf16.msra.mxu0 %v2906
        %3006 = vmatprep.subr.bf16.mxu0 0
        %3007 = vmatpush2.bf16.msra.mxu0 %v2905
        %3008 = vmatprep.subr.bf16.mxu0 0
        %3009 = vmatpush2.bf16.msra.mxu0 %v2904
        %3010 = vmatprep.subr.bf16.mxu0 0
        %3011 = vmatpush2.bf16.msra.mxu0 %v2903
        %3012 = vmatprep.subr.bf16.mxu0 0
        %3013 = vmatpush2.bf16.msra.mxu0 %v2902
        %3014 = vmatprep.subr.bf16.mxu0 0
        %3015 = vmatpush2.bf16.msra.mxu0 %v2901
        %3016 = vmatprep.subr.bf16.mxu0 0
        %3017 = vmatpush2.bf16.msra.mxu0 %v2900
        %3018 = vmatprep.subr.bf16.mxu0 0
        %3019 = vmatpush2.bf16.msra.mxu0 %v2899
        %3020 = vmatprep.mubr.bf16.mxu0 %v2671
        %3021 = vmatmul.mubr.bf16.gmra.mxu0 %v2670
        %v3022 = vpop.f32.mrf.mxu0
        %v3023 = vadd.f32 %v2974, %v3022
        %v3024 = vpop.f32.mrf.mxu0
        %v3025 = vpop.f32.mrf.mxu0
        %v3026 = vadd.f32 %v2977, %v3025
        %v3027 = vpop.f32.mrf.mxu0
        %3028 = vmatprep.mubr.bf16.mxu0 %v2675
        %3029 = vmatmul.mubr.bf16.gmra.mxu0 %v2674
        %v3030 = vpop.f32.mrf.mxu0
        %v3031 = vadd.f32 %v2982, %v3030
        %v3032 = vpop.f32.mrf.mxu0
        %v3033 = vpop.f32.mrf.mxu0
        %v3034 = vadd.f32 %v2985, %v3033
        %v3035 = vpop.f32.mrf.mxu0
        %3036 = vdwg.mxu0
        %v3037 = vadd.f32 %v2120, %v3023
        %v3038 = vadd.f32 %v2121, %v3026
        %v3039 = vadd.f32 %v2122, %v3031
        %v3040 = vadd.f32 %v2123, %v3034
        %3041 = vst [vmem:[%s490] sm:$0xff] %v3037
        %3042 = vst [vmem:[%s490 + $0x8] sm:$0xff] %v3038
        %3043 = vst [vmem:[%s490 + $0x10] sm:$0xff] %v3039
        %3044 = vst [vmem:[%s490 + $0x18] sm:$0xff] %v3040
        %s3045 = sand.u32 %s296, 1
        %s3046 = scalar_lea.sflag [#allocation4], %s3045
        %s3047 = sand.u32 %s296, 1
        %s3048 = smul.addr %s3047, 32
        %s3049 = scalar_lea.vmem [#allocation11], %s3048
        // Predicated region
        $region89: #{tpu_custom_call.1} parent=67 // pred_check
          %p3050 = pneg %p306
        $region90: #{tpu_custom_call.1} parent=67 // pred_check_branch
          %3052 = sbr.rel (%p3050) target = $region92
        $region91: #{tpu_custom_call.1} parent=67 // pred_region
          %s3053 = smul.u32 2, %s31
          %s3055 = ssub.s32 512, 512
          %3056 = vsyncadd %s3046, %s3055
          %s3057 = smul.addr %s3053, 2
          %s3058 = smul.addr %s3057, 128
          %s3059 = scalar_lea.hbm %s12, %s3058
          %s3060 = sshll.u32 %s3049, 4
          %s3061 = int_to_ptr.vmem [resolvable:$true] %s3060
          %3066 = dma.vmem_to_hbm [thread:$0]  %s3061, 512, %s3059, %s3046, 128, 128, 8
        $region92: #{tpu_custom_call.1} parent=67 // pred_fallthru
          _
      $region68: #{tpu_custom_call.1} parent=5 // pred_fallthru
        _
      %p3067 = scmp.le.s32.totalorder 2, %s26
      // Predicated region
      $region93: #{tpu_custom_call.1} parent=5 // pred_check
        %p3068 = pneg %p3067
      $region94: #{tpu_custom_call.1} parent=5 // pred_check_branch
        %3070 = sbr.rel (%p3068) target = $region96
      $region95: #{tpu_custom_call.1} parent=5 // pred_region
        %s3071 = ssub.s32 %s26, 2
        // Predicated region
        $region97: #{tpu_custom_call.1} parent=95 // pred_check
          %p3072 = pneg %p312
        $region98: #{tpu_custom_call.1} parent=95 // pred_check_branch
          %3074 = sbr.rel (%p3072) target = $region100
        $region99: #{tpu_custom_call.1} parent=95 // pred_region
          %s3075 = sand.u32 %s297, 1
          %s3076 = scalar_lea.sflag [#allocation4], %s3075
          %s3077 = sand.u32 %s297, 1
          %s3078 = smul.addr %s3077, 32
          %s3079 = scalar_lea.vmem [#allocation11], %s3078
          %3080 = dma.done %s3076, 512
        $region100: #{tpu_custom_call.1} parent=95 // pred_fallthru
          _
      $region96: #{tpu_custom_call.1} parent=5 // pred_fallthru
        _
    $region6: #{tpu_custom_call.1} parent=1 // loop_footer
      %s30 = sadd.s32 1, %s26
    $region7: #{tpu_custom_call.1} parent=1 // loop_footer_branch
      %25 = sbr.rel target = $region3
    $region8: #{tpu_custom_call.1} parent=1 // loop_exit
      _
    %3081 = vsyncpa [#allocation3], 1
    %s3082 = scalar_lea.sflag [#allocation3], 1
    %3083 = vsyncpa %s3082, 1
    %3084 = vsyncpa [#allocation6], 1
    %3085 = vsyncpa [#allocation9], 1
    %3086 = vsyncpa [#allocation4], 1
    %s3087 = scalar_lea.sflag [#allocation4], 1
    %3088 = vsyncpa %s3087, 1

</llo_original>
